<compile_context>
chip_gen: v7x
topology: tpu7x:2x2x1
jax: 0.10.0
libtpu: 0.0.40
codegen_flags: <defaults>
</compile_context>

<pallas_src>
import functools

import jax
import jax.numpy as jnp
from jax.experimental import pallas as pl
from jax.experimental.pallas import tpu as pltpu


def _oscillator_kernel(x_embed_ref, lap_ref, wlin_t_ref, blin_ref,
                       a_ref, bb_ref, bwg_t_ref, bw1_t_ref, wfinal_t_ref,
                       out_ref, *, L, n_steps, h):
    """Initial linear+relu, N wave/oscillator integration steps, final (padded) linear."""
    f32 = jnp.float32
    bf16 = jnp.bfloat16

    # ---- hoist every parameter / input load out of the unrolled time loop ----
    Xe = x_embed_ref[...]        # (NT, H)    bf16  summed key/value embeddings
    Lap = lap_ref[...]           # (NT, NT)   bf16  block-diagonal graph Laplacian
    Wlin = wlin_t_ref[...]       # (H, H)     bf16  initial linear W^T
    blin = blin_ref[...]         # (1, H)     f32
    Aw = a_ref[...]              # (L, 1, H)  f32   ElementwiseLinear weights
    Bb = bb_ref[...]             # (L, 1, H)  f32   per-layer B biases
    BWg = bwg_t_ref[...]         # (gH, gH)   bf16  block-diag fused B weights^T
    BW1 = bw1_t_ref[...]         # (H, H)     bf16  layer-1 B weight^T
    Wfin = wfinal_t_ref[...]     # (H, 128)   bf16  lane-dense padded readout W^T

    H = Wlin.shape[0]

    # initial encoder:  X = relu(linear(key_embed + val_embed))
    X = jnp.maximum(jnp.dot(Xe, Wlin, preferred_element_type=f32) + blin, 0.0)
    Y = jnp.zeros_like(X)                        # wave velocity
    Z = [jnp.zeros_like(X) for _ in range(L)]    # oscillator positions
    U = [jnp.zeros_like(X) for _ in range(L)]    # oscillator velocities

    # Layers with no intra-step dependency: layer 0 (driven by X) and layers L-1..2
    # (driven by pre-update Z[j-1]).  Layer 1 reads the just-updated Z[0] -> kept apart.
    group = [0] + list(range(L - 1, 1, -1))

    for _ in range(n_steps):     # n_steps=4: full unroll keeps live state in ~25 vregs
        # WaveLayer (normalized_lap=False, self_loops=False):
        #   vel_update = deg*x - sum_{j in N(i)} x_j = (D - A) @ X
        vel_update = jnp.dot(Lap, X.astype(bf16), preferred_element_type=f32)
        Y = Y - h * vel_update
        X = X + h * Y

        # one fused matmul for all independent oscillator layers (block-diag weights)
        inp = jnp.concatenate([X] + [Z[j - 1] for j in group[1:]], axis=1).astype(bf16)
        mm = jnp.dot(inp, BWg, preferred_element_type=f32)      # (NT, len(group)*H)
        for idx, j in enumerate(group):
            pre = Aw[j] * Z[j] + mm[:, idx * H:(idx + 1) * H] + Bb[j]
            U[j] = U[j] + h * jnp.maximum(pre, 0.0)
            Z[j] = Z[j] + h * U[j]

        # layer 1 last: its input is the Z[0] that was updated this step
        pre1 = (Aw[1] * Z[1]
                + jnp.dot(Z[0].astype(bf16), BW1, preferred_element_type=f32)
                + Bb[1])
        U[1] = U[1] + h * jnp.maximum(pre1, 0.0)
        Z[1] = Z[1] + h * U[1]

    # final readout on all nodes, lane-dense 128-wide store; root selection is a gather
    # done outside the kernel (final(Z[-1])[roots] == final(Z[-1][roots]) per-node).
    out_ref[...] = jnp.dot(Z[L - 1].astype(bf16), Wfin, preferred_element_type=f32)


def neural_oscillator_pallas(x_embed, lap, wlin_t, blin, a_all, bb_all,
                             bwg_t, bw1_t, wfinal_t, *, L, n_steps, h):
    assert L >= 2, "kernel assumes >= 2 oscillator layers (module always builds >= 1 extra)"
    num_nodes = x_embed.shape[0]
    out_cols = wfinal_t.shape[1]
    kernel = functools.partial(_oscillator_kernel, L=L, n_steps=n_steps, h=h)
    vmem = pl.BlockSpec(memory_space=pltpu.MemorySpace.VMEM)   # whole array, resident, no pipelining
    return pl.pallas_call(
        kernel,
        out_shape=jax.ShapeDtypeStruct((num_nodes, out_cols), jnp.float32),
        in_specs=[vmem] * 9,
        out_specs=vmem,
        compiler_params=pltpu.CompilerParams(
            # explicit scoped-VMEM budget: generous at this size, safe on every
            # generation (v5e default is only 16 MiB; v7x physical ceiling is 64 MiB).
            vmem_limit_bytes=32 * 1024 * 1024),
    )(x_embed, lap, wlin_t, blin, a_all, bb_all, bwg_t, bw1_t, wfinal_t)


def prepare_params(W_lin, b_lin, a_w, B_W, B_b, W_final, *, L, hidden_dim, out_pad=128):
    """Host-side layout plumbing: transpose, block-diag-fuse, pad and bf16-cast weights."""
    H = hidden_dim
    group = [0] + list(range(L - 1, 1, -1))
    g = len(group)
    bwg_t = jnp.zeros((g * H, g * H), jnp.float32)
    for idx, j in enumerate(group):
        bwg_t = bwg_t.at[idx * H:(idx + 1) * H, idx * H:(idx + 1) * H].set(B_W[j].T)
    out_dim1 = W_final.shape[0]
    assert out_pad >= out_dim1
    wfinal_pad = jnp.zeros((H, out_pad), jnp.float32).at[:, :out_dim1].set(W_final.T)
    return dict(
        wlin_t=W_lin.T.astype(jnp.bfloat16),
        blin=b_lin.reshape(1, H).astype(jnp.float32),
        a_all=a_w.reshape(L, 1, H).astype(jnp.float32),
        bb_all=B_b.reshape(L, 1, H).astype(jnp.float32),
        bwg_t=bwg_t.astype(jnp.bfloat16),
        bw1_t=B_W[1].T.astype(jnp.bfloat16),
        wfinal_t=wfinal_pad.astype(jnp.bfloat16),
    )


if __name__ == "__main__":
    # hyper-params (small, consistent with the module)
    L, input_dim, hidden_dim, output_dim = 3, 4, 32, 3
    N_steps, h = 4, 0.1
    num_graphs, nodes_per_graph = 8, 16
    num_nodes = num_graphs * nodes_per_graph          # 128 -> MXU-friendly node axis

    key = jax.random.PRNGKey(0)
    ks = jax.random.split(key, 10)

    # --- synthetic "data": a PyG-style batch of chain graphs --------------------
    x_key = jax.random.randint(ks[0], (num_nodes,), 0, input_dim + 1)
    x_val = jax.random.randint(ks[1], (num_nodes,), 0, input_dim + 1)
    offs = jnp.arange(num_graphs) * nodes_per_graph
    src = (offs[:, None] + jnp.arange(nodes_per_graph - 1)[None, :]).reshape(-1)
    dst = src + 1
    row = jnp.concatenate([src, dst])                 # undirected (to_undirected)
    col = jnp.concatenate([dst, src])
    root_mask = jnp.zeros((num_nodes,), dtype=bool).at[offs].set(True)

    # --- deterministic parameters (shapes per __init__) -------------------------
    emb_keys = 0.1 * jax.random.normal(ks[2], (input_dim + 1, hidden_dim), jnp.float32)
    emb_vals = 0.1 * jax.random.normal(ks[3], (input_dim + 1, hidden_dim), jnp.float32)
    W_lin = 0.1 * jax.random.normal(ks[4], (hidden_dim, hidden_dim), jnp.float32)
    b_lin = 0.1 * jax.random.normal(ks[5], (hidden_dim,), jnp.float32)
    # ElementwiseLinear is zeros-initialized in the module; use small random values here
    # so the a(z) path is actually exercised by the test.
    a_w = 0.1 * jax.random.normal(ks[9], (L, hidden_dim), jnp.float32)
    B_W = 0.1 * jax.random.normal(ks[6], (L, hidden_dim, hidden_dim), jnp.float32)
    B_b = 0.1 * jax.random.normal(ks[7], (L, hidden_dim), jnp.float32)
    W_final = 0.1 * jax.random.normal(ks[8], (output_dim + 1, hidden_dim), jnp.float32)

    # --- plain-JAX glue: embedding lookups + dense block-diagonal Laplacian -----
    # TODO(synk): the nn.Embedding gathers, edge_index -> dense Laplacian build and the
    # boolean root-mask gather stay in plain JAX (data-dependent gather/scatter, trivial
    # cost at this size).
    x_embed = emb_keys[x_key] + emb_vals[x_val]
    A = jnp.zeros((num_nodes, num_nodes), jnp.float32).at[col, row].add(1.0)
    deg = A.sum(axis=1)                                # == degree(col, num_nodes)
    lap = jnp.diag(deg) - A                            # deg*x - sum_neighbors x == lap @ X

    params = prepare_params(W_lin, b_lin, a_w, B_W, B_b, W_final,
                            L=L, hidden_dim=hidden_dim, out_pad=128)

    out_full = neural_oscillator_pallas(
        x_embed.astype(jnp.bfloat16), lap.astype(jnp.bfloat16), **params,
        L=L, n_steps=N_steps, h=h)
    out_full = jax.block_until_ready(out_full)
    out = out_full[:, :output_dim + 1][root_mask]      # == final(Z[-1][roots])

    # --- pure-JAX references -----------------------------------------------------
    def reference_f32():
        """Mirrors the PyTorch forward exactly, in float32."""
        X = jnp.maximum(x_embed @ W_lin.T + b_lin, 0.0)
        Y = jnp.zeros_like(X)
        Z = [jnp.zeros_like(X) for _ in range(L)]
        U = [jnp.zeros_like(X) for _ in range(L)]
        for _ in range(N_steps):
            Y = Y - h * (lap @ X)
            X = X + h * Y
            pre = a_w[0] * Z[0] + X @ B_W[0].T + B_b[0]
            U[0] = U[0] + h * jnp.maximum(pre, 0.0)
            Z[0] = Z[0] + h * U[0]
            for j in range(L - 1, 0, -1):
                pre = a_w[j] * Z[j] + Z[j - 1] @ B_W[j].T + B_b[j]
                U[j] = U[j] + h * jnp.maximum(pre, 0.0)
                Z[j] = Z[j] + h * U[j]
        return Z[L - 1][root_mask] @ W_final.T

    def reference_matched():
        """Same math with the kernel's mixed precision (bf16 dot operands, f32 accum)."""
        bf16, f32 = jnp.bfloat16, jnp.float32
        dot = lambda a, b: jnp.dot(a.astype(bf16), b.astype(bf16),
                                   preferred_element_type=f32)
        X = jnp.maximum(dot(x_embed, W_lin.T) + b_lin, 0.0)
        Y = jnp.zeros_like(X)
        Z = [jnp.zeros_like(X) for _ in range(L)]
        U = [jnp.zeros_like(X) for _ in range(L)]
        for _ in range(N_steps):
            Y = Y - h * dot(lap, X)
            X = X + h * Y
            pre = a_w[0] * Z[0] + dot(X, B_W[0].T) + B_b[0]
            U[0] = U[0] + h * jnp.maximum(pre, 0.0)
            Z[0] = Z[0] + h * U[0]
            for j in range(L - 1, 0, -1):
                pre = a_w[j] * Z[j] + dot(Z[j - 1], B_W[j].T) + B_b[j]
                U[j] = U[j] + h * jnp.maximum(pre, 0.0)
                Z[j] = Z[j] + h * U[j]
        return dot(Z[L - 1], W_final.T)[root_mask]

    ref_bf16 = reference_matched()
    ref_f32 = reference_f32()

    assert out.shape == (num_graphs, output_dim + 1), out.shape
    # tight check vs. the precision-matched reference, loose check vs. full-f32 PyTorch math
    assert jnp.allclose(out, ref_bf16, atol=1e-4, rtol=1e-2), (out, ref_bf16)
    assert jnp.allclose(out, ref_f32, atol=2e-3, rtol=5e-2), (out, ref_f32)
    print("KERNEL_OK")
</pallas_src>

<mosaic_0001>
module attributes {stable_mosaic.version = 11 : i64} {
  func.func @_oscillator_kernel(%arg0: memref<128x32xbf16, #tpu.memory_space<vmem>>, %arg1: memref<128x128xbf16, #tpu.memory_space<vmem>>, %arg2: memref<32x32xbf16, #tpu.memory_space<vmem>>, %arg3: memref<1x32xf32, #tpu.memory_space<vmem>>, %arg4: memref<3x1x32xf32, #tpu.memory_space<vmem>>, %arg5: memref<3x1x32xf32, #tpu.memory_space<vmem>>, %arg6: memref<64x64xbf16, #tpu.memory_space<vmem>>, %arg7: memref<32x32xbf16, #tpu.memory_space<vmem>>, %arg8: memref<32x128xbf16, #tpu.memory_space<vmem>>, %arg9: memref<128x128xf32, #tpu.memory_space<vmem>>) attributes {dimension_semantics = [], scalar_prefetch = 0 : i64, scratch_operands = 0 : i64, tpu.core_type = #tpu.core_type<tc>} {
    %c0 = arith.constant 0 : index
    %c0_0 = arith.constant 0 : index
    %0 = vector.load %arg0[%c0, %c0_0] : memref<128x32xbf16, #tpu.memory_space<vmem>>, vector<128x32xbf16>
    %c0_1 = arith.constant 0 : index
    %c0_2 = arith.constant 0 : index
    %1 = vector.load %arg1[%c0_1, %c0_2] : memref<128x128xbf16, #tpu.memory_space<vmem>>, vector<128x128xbf16>
    %c0_3 = arith.constant 0 : index
    %c0_4 = arith.constant 0 : index
    %2 = vector.load %arg2[%c0_3, %c0_4] : memref<32x32xbf16, #tpu.memory_space<vmem>>, vector<32x32xbf16>
    %c0_5 = arith.constant 0 : index
    %c0_6 = arith.constant 0 : index
    %3 = vector.load %arg3[%c0_5, %c0_6] : memref<1x32xf32, #tpu.memory_space<vmem>>, vector<1x32xf32>
    %c0_7 = arith.constant 0 : index
    %c0_8 = arith.constant 0 : index
    %c0_9 = arith.constant 0 : index
    %4 = vector.load %arg4[%c0_7, %c0_8, %c0_9] : memref<3x1x32xf32, #tpu.memory_space<vmem>>, vector<3x1x32xf32>
    %c0_10 = arith.constant 0 : index
    %c0_11 = arith.constant 0 : index
    %c0_12 = arith.constant 0 : index
    %5 = vector.load %arg5[%c0_10, %c0_11, %c0_12] : memref<3x1x32xf32, #tpu.memory_space<vmem>>, vector<3x1x32xf32>
    %c0_13 = arith.constant 0 : index
    %c0_14 = arith.constant 0 : index
    %6 = vector.load %arg6[%c0_13, %c0_14] : memref<64x64xbf16, #tpu.memory_space<vmem>>, vector<64x64xbf16>
    %c0_15 = arith.constant 0 : index
    %c0_16 = arith.constant 0 : index
    %7 = vector.load %arg7[%c0_15, %c0_16] : memref<32x32xbf16, #tpu.memory_space<vmem>>, vector<32x32xbf16>
    %c0_17 = arith.constant 0 : index
    %c0_18 = arith.constant 0 : index
    %8 = vector.load %arg8[%c0_17, %c0_18] : memref<32x128xbf16, #tpu.memory_space<vmem>>, vector<32x128xbf16>
    %cst = arith.constant dense<0.000000e+00> : vector<128x32xf32>
    %9 = tpu.matmul %0, %2, %cst {dimension_numbers = #tpu.dot_dimension_numbers<[1], [0], [0], [1], [0, 0, 1, 1], [], []>} : vector<128x32xbf16>, vector<32x32xbf16>, vector<128x32xf32> -> vector<128x32xf32>
    %10 = vector.broadcast %3 : vector<1x32xf32> to vector<128x32xf32>
    %11 = arith.addf %9, %10 : vector<128x32xf32>
    %cst_19 = arith.constant 0.000000e+00 : f32
    %12 = vector.broadcast %cst_19 : f32 to vector<128x32xf32>
    %13 = arith.maximumf %11, %12 : vector<128x32xf32>
    %cst_20 = arith.constant 0.000000e+00 : f32
    %14 = vector.broadcast %cst_20 : f32 to vector<128x32xf32>
    %cst_21 = arith.constant 0.000000e+00 : f32
    %15 = vector.broadcast %cst_21 : f32 to vector<128x32xf32>
    %cst_22 = arith.constant 0.000000e+00 : f32
    %16 = vector.broadcast %cst_22 : f32 to vector<128x32xf32>
    %cst_23 = arith.constant 0.000000e+00 : f32
    %17 = vector.broadcast %cst_23 : f32 to vector<128x32xf32>
    %cst_24 = arith.constant 0.000000e+00 : f32
    %18 = vector.broadcast %cst_24 : f32 to vector<128x32xf32>
    %cst_25 = arith.constant 0.000000e+00 : f32
    %19 = vector.broadcast %cst_25 : f32 to vector<128x32xf32>
    %cst_26 = arith.constant 0.000000e+00 : f32
    %20 = vector.broadcast %cst_26 : f32 to vector<128x32xf32>
    %21 = arith.truncf %13 : vector<128x32xf32> to vector<128x32xbf16>
    %cst_27 = arith.constant dense<0.000000e+00> : vector<128x32xf32>
    %22 = tpu.matmul %1, %21, %cst_27 {dimension_numbers = #tpu.dot_dimension_numbers<[1], [0], [0], [1], [0, 0, 1, 1], [], []>} : vector<128x128xbf16>, vector<128x32xbf16>, vector<128x32xf32> -> vector<128x32xf32>
    %cst_28 = arith.constant 1.000000e-01 : f32
    %23 = vector.broadcast %cst_28 : f32 to vector<128x32xf32>
    %24 = arith.mulf %23, %22 : vector<128x32xf32>
    %25 = arith.subf %14, %24 : vector<128x32xf32>
    %cst_29 = arith.constant 1.000000e-01 : f32
    %26 = vector.broadcast %cst_29 : f32 to vector<128x32xf32>
    %27 = arith.mulf %26, %25 : vector<128x32xf32>
    %28 = arith.addf %13, %27 : vector<128x32xf32>
    %29 = tpu.concatenate %28, %16 in 1 : vector<128x32xf32>, vector<128x32xf32> -> vector<128x64xf32>
    %30 = arith.truncf %29 : vector<128x64xf32> to vector<128x64xbf16>
    %cst_30 = arith.constant dense<0.000000e+00> : vector<128x64xf32>
    %31 = tpu.matmul %30, %6, %cst_30 {dimension_numbers = #tpu.dot_dimension_numbers<[1], [0], [0], [1], [0, 0, 1, 1], [], []>} : vector<128x64xbf16>, vector<64x64xbf16>, vector<128x64xf32> -> vector<128x64xf32>
    %32 = vector.extract_strided_slice %4 {offsets = [0, 0, 0], sizes = [1, 1, 32], strides = [1, 1, 1]} : vector<3x1x32xf32> to vector<1x1x32xf32>
    %33 = vector.shape_cast %32 : vector<1x1x32xf32> to vector<1x32xf32>
    %34 = vector.broadcast %33 : vector<1x32xf32> to vector<128x32xf32>
    %35 = arith.mulf %34, %15 : vector<128x32xf32>
    %36 = vector.extract_strided_slice %31 {offsets = [0, 0], sizes = [128, 32], strides = [1, 1]} : vector<128x64xf32> to vector<128x32xf32>
    %37 = arith.addf %35, %36 : vector<128x32xf32>
    %38 = vector.extract_strided_slice %5 {offsets = [0, 0, 0], sizes = [1, 1, 32], strides = [1, 1, 1]} : vector<3x1x32xf32> to vector<1x1x32xf32>
    %39 = vector.shape_cast %38 : vector<1x1x32xf32> to vector<1x32xf32>
    %40 = vector.broadcast %39 : vector<1x32xf32> to vector<128x32xf32>
    %41 = arith.addf %37, %40 : vector<128x32xf32>
    %cst_31 = arith.constant 0.000000e+00 : f32
    %42 = vector.broadcast %cst_31 : f32 to vector<128x32xf32>
    %43 = arith.maximumf %41, %42 : vector<128x32xf32>
    %cst_32 = arith.constant 1.000000e-01 : f32
    %44 = vector.broadcast %cst_32 : f32 to vector<128x32xf32>
    %45 = arith.mulf %44, %43 : vector<128x32xf32>
    %46 = arith.addf %18, %45 : vector<128x32xf32>
    %cst_33 = arith.constant 1.000000e-01 : f32
    %47 = vector.broadcast %cst_33 : f32 to vector<128x32xf32>
    %48 = arith.mulf %47, %46 : vector<128x32xf32>
    %49 = arith.addf %15, %48 : vector<128x32xf32>
    %50 = vector.extract_strided_slice %4 {offsets = [2, 0, 0], sizes = [1, 1, 32], strides = [1, 1, 1]} : vector<3x1x32xf32> to vector<1x1x32xf32>
    %51 = vector.shape_cast %50 : vector<1x1x32xf32> to vector<1x32xf32>
    %52 = vector.broadcast %51 : vector<1x32xf32> to vector<128x32xf32>
    %53 = arith.mulf %52, %17 : vector<128x32xf32>
    %54 = vector.extract_strided_slice %31 {offsets = [0, 32], sizes = [128, 32], strides = [1, 1]} : vector<128x64xf32> to vector<128x32xf32>
    %55 = arith.addf %53, %54 : vector<128x32xf32>
    %56 = vector.extract_strided_slice %5 {offsets = [2, 0, 0], sizes = [1, 1, 32], strides = [1, 1, 1]} : vector<3x1x32xf32> to vector<1x1x32xf32>
    %57 = vector.shape_cast %56 : vector<1x1x32xf32> to vector<1x32xf32>
    %58 = vector.broadcast %57 : vector<1x32xf32> to vector<128x32xf32>
    %59 = arith.addf %55, %58 : vector<128x32xf32>
    %cst_34 = arith.constant 0.000000e+00 : f32
    %60 = vector.broadcast %cst_34 : f32 to vector<128x32xf32>
    %61 = arith.maximumf %59, %60 : vector<128x32xf32>
    %cst_35 = arith.constant 1.000000e-01 : f32
    %62 = vector.broadcast %cst_35 : f32 to vector<128x32xf32>
    %63 = arith.mulf %62, %61 : vector<128x32xf32>
    %64 = arith.addf %20, %63 : vector<128x32xf32>
    %cst_36 = arith.constant 1.000000e-01 : f32
    %65 = vector.broadcast %cst_36 : f32 to vector<128x32xf32>
    %66 = arith.mulf %65, %64 : vector<128x32xf32>
    %67 = arith.addf %17, %66 : vector<128x32xf32>
    %68 = vector.extract_strided_slice %4 {offsets = [1, 0, 0], sizes = [1, 1, 32], strides = [1, 1, 1]} : vector<3x1x32xf32> to vector<1x1x32xf32>
    %69 = vector.shape_cast %68 : vector<1x1x32xf32> to vector<1x32xf32>
    %70 = vector.broadcast %69 : vector<1x32xf32> to vector<128x32xf32>
    %71 = arith.mulf %70, %16 : vector<128x32xf32>
    %72 = arith.truncf %49 : vector<128x32xf32> to vector<128x32xbf16>
    %cst_37 = arith.constant dense<0.000000e+00> : vector<128x32xf32>
    %73 = tpu.matmul %72, %7, %cst_37 {dimension_numbers = #tpu.dot_dimension_numbers<[1], [0], [0], [1], [0, 0, 1, 1], [], []>} : vector<128x32xbf16>, vector<32x32xbf16>, vector<128x32xf32> -> vector<128x32xf32>
    %74 = arith.addf %71, %73 : vector<128x32xf32>
    %75 = vector.extract_strided_slice %5 {offsets = [1, 0, 0], sizes = [1, 1, 32], strides = [1, 1, 1]} : vector<3x1x32xf32> to vector<1x1x32xf32>
    %76 = vector.shape_cast %75 : vector<1x1x32xf32> to vector<1x32xf32>
    %77 = vector.broadcast %76 : vector<1x32xf32> to vector<128x32xf32>
    %78 = arith.addf %74, %77 : vector<128x32xf32>
    %cst_38 = arith.constant 0.000000e+00 : f32
    %79 = vector.broadcast %cst_38 : f32 to vector<128x32xf32>
    %80 = arith.maximumf %78, %79 : vector<128x32xf32>
    %cst_39 = arith.constant 1.000000e-01 : f32
    %81 = vector.broadcast %cst_39 : f32 to vector<128x32xf32>
    %82 = arith.mulf %81, %80 : vector<128x32xf32>
    %83 = arith.addf %19, %82 : vector<128x32xf32>
    %cst_40 = arith.constant 1.000000e-01 : f32
    %84 = vector.broadcast %cst_40 : f32 to vector<128x32xf32>
    %85 = arith.mulf %84, %83 : vector<128x32xf32>
    %86 = arith.addf %16, %85 : vector<128x32xf32>
    %87 = arith.truncf %28 : vector<128x32xf32> to vector<128x32xbf16>
    %cst_41 = arith.constant dense<0.000000e+00> : vector<128x32xf32>
    %88 = tpu.matmul %1, %87, %cst_41 {dimension_numbers = #tpu.dot_dimension_numbers<[1], [0], [0], [1], [0, 0, 1, 1], [], []>} : vector<128x128xbf16>, vector<128x32xbf16>, vector<128x32xf32> -> vector<128x32xf32>
    %cst_42 = arith.constant 1.000000e-01 : f32
    %89 = vector.broadcast %cst_42 : f32 to vector<128x32xf32>
    %90 = arith.mulf %89, %88 : vector<128x32xf32>
    %91 = arith.subf %25, %90 : vector<128x32xf32>
    %cst_43 = arith.constant 1.000000e-01 : f32
    %92 = vector.broadcast %cst_43 : f32 to vector<128x32xf32>
    %93 = arith.mulf %92, %91 : vector<128x32xf32>
    %94 = arith.addf %28, %93 : vector<128x32xf32>
    %95 = tpu.concatenate %94, %86 in 1 : vector<128x32xf32>, vector<128x32xf32> -> vector<128x64xf32>
    %96 = arith.truncf %95 : vector<128x64xf32> to vector<128x64xbf16>
    %cst_44 = arith.constant dense<0.000000e+00> : vector<128x64xf32>
    %97 = tpu.matmul %96, %6, %cst_44 {dimension_numbers = #tpu.dot_dimension_numbers<[1], [0], [0], [1], [0, 0, 1, 1], [], []>} : vector<128x64xbf16>, vector<64x64xbf16>, vector<128x64xf32> -> vector<128x64xf32>
    %98 = vector.extract_strided_slice %4 {offsets = [0, 0, 0], sizes = [1, 1, 32], strides = [1, 1, 1]} : vector<3x1x32xf32> to vector<1x1x32xf32>
    %99 = vector.shape_cast %98 : vector<1x1x32xf32> to vector<1x32xf32>
    %100 = vector.broadcast %99 : vector<1x32xf32> to vector<128x32xf32>
    %101 = arith.mulf %100, %49 : vector<128x32xf32>
    %102 = vector.extract_strided_slice %97 {offsets = [0, 0], sizes = [128, 32], strides = [1, 1]} : vector<128x64xf32> to vector<128x32xf32>
    %103 = arith.addf %101, %102 : vector<128x32xf32>
    %104 = vector.extract_strided_slice %5 {offsets = [0, 0, 0], sizes = [1, 1, 32], strides = [1, 1, 1]} : vector<3x1x32xf32> to vector<1x1x32xf32>
    %105 = vector.shape_cast %104 : vector<1x1x32xf32> to vector<1x32xf32>
    %106 = vector.broadcast %105 : vector<1x32xf32> to vector<128x32xf32>
    %107 = arith.addf %103, %106 : vector<128x32xf32>
    %cst_45 = arith.constant 0.000000e+00 : f32
    %108 = vector.broadcast %cst_45 : f32 to vector<128x32xf32>
    %109 = arith.maximumf %107, %108 : vector<128x32xf32>
    %cst_46 = arith.constant 1.000000e-01 : f32
    %110 = vector.broadcast %cst_46 : f32 to vector<128x32xf32>
    %111 = arith.mulf %110, %109 : vector<128x32xf32>
    %112 = arith.addf %46, %111 : vector<128x32xf32>
    %cst_47 = arith.constant 1.000000e-01 : f32
    %113 = vector.broadcast %cst_47 : f32 to vector<128x32xf32>
    %114 = arith.mulf %113, %112 : vector<128x32xf32>
    %115 = arith.addf %49, %114 : vector<128x32xf32>
    %116 = vector.extract_strided_slice %4 {offsets = [2, 0, 0], sizes = [1, 1, 32], strides = [1, 1, 1]} : vector<3x1x32xf32> to vector<1x1x32xf32>
    %117 = vector.shape_cast %116 : vector<1x1x32xf32> to vector<1x32xf32>
    %118 = vector.broadcast %117 : vector<1x32xf32> to vector<128x32xf32>
    %119 = arith.mulf %118, %67 : vector<128x32xf32>
    %120 = vector.extract_strided_slice %97 {offsets = [0, 32], sizes = [128, 32], strides = [1, 1]} : vector<128x64xf32> to vector<128x32xf32>
    %121 = arith.addf %119, %120 : vector<128x32xf32>
    %122 = vector.extract_strided_slice %5 {offsets = [2, 0, 0], sizes = [1, 1, 32], strides = [1, 1, 1]} : vector<3x1x32xf32> to vector<1x1x32xf32>
    %123 = vector.shape_cast %122 : vector<1x1x32xf32> to vector<1x32xf32>
    %124 = vector.broadcast %123 : vector<1x32xf32> to vector<128x32xf32>
    %125 = arith.addf %121, %124 : vector<128x32xf32>
    %cst_48 = arith.constant 0.000000e+00 : f32
    %126 = vector.broadcast %cst_48 : f32 to vector<128x32xf32>
    %127 = arith.maximumf %125, %126 : vector<128x32xf32>
    %cst_49 = arith.constant 1.000000e-01 : f32
    %128 = vector.broadcast %cst_49 : f32 to vector<128x32xf32>
    %129 = arith.mulf %128, %127 : vector<128x32xf32>
    %130 = arith.addf %64, %129 : vector<128x32xf32>
    %cst_50 = arith.constant 1.000000e-01 : f32
    %131 = vector.broadcast %cst_50 : f32 to vector<128x32xf32>
    %132 = arith.mulf %131, %130 : vector<128x32xf32>
    %133 = arith.addf %67, %132 : vector<128x32xf32>
    %134 = vector.extract_strided_slice %4 {offsets = [1, 0, 0], sizes = [1, 1, 32], strides = [1, 1, 1]} : vector<3x1x32xf32> to vector<1x1x32xf32>
    %135 = vector.shape_cast %134 : vector<1x1x32xf32> to vector<1x32xf32>
    %136 = vector.broadcast %135 : vector<1x32xf32> to vector<128x32xf32>
    %137 = arith.mulf %136, %86 : vector<128x32xf32>
    %138 = arith.truncf %115 : vector<128x32xf32> to vector<128x32xbf16>
    %cst_51 = arith.constant dense<0.000000e+00> : vector<128x32xf32>
    %139 = tpu.matmul %138, %7, %cst_51 {dimension_numbers = #tpu.dot_dimension_numbers<[1], [0], [0], [1], [0, 0, 1, 1], [], []>} : vector<128x32xbf16>, vector<32x32xbf16>, vector<128x32xf32> -> vector<128x32xf32>
    %140 = arith.addf %137, %139 : vector<128x32xf32>
    %141 = vector.extract_strided_slice %5 {offsets = [1, 0, 0], sizes = [1, 1, 32], strides = [1, 1, 1]} : vector<3x1x32xf32> to vector<1x1x32xf32>
    %142 = vector.shape_cast %141 : vector<1x1x32xf32> to vector<1x32xf32>
    %143 = vector.broadcast %142 : vector<1x32xf32> to vector<128x32xf32>
    %144 = arith.addf %140, %143 : vector<128x32xf32>
    %cst_52 = arith.constant 0.000000e+00 : f32
    %145 = vector.broadcast %cst_52 : f32 to vector<128x32xf32>
    %146 = arith.maximumf %144, %145 : vector<128x32xf32>
    %cst_53 = arith.constant 1.000000e-01 : f32
    %147 = vector.broadcast %cst_53 : f32 to vector<128x32xf32>
    %148 = arith.mulf %147, %146 : vector<128x32xf32>
    %149 = arith.addf %83, %148 : vector<128x32xf32>
    %cst_54 = arith.constant 1.000000e-01 : f32
    %150 = vector.broadcast %cst_54 : f32 to vector<128x32xf32>
    %151 = arith.mulf %150, %149 : vector<128x32xf32>
    %152 = arith.addf %86, %151 : vector<128x32xf32>
    %153 = arith.truncf %94 : vector<128x32xf32> to vector<128x32xbf16>
    %cst_55 = arith.constant dense<0.000000e+00> : vector<128x32xf32>
    %154 = tpu.matmul %1, %153, %cst_55 {dimension_numbers = #tpu.dot_dimension_numbers<[1], [0], [0], [1], [0, 0, 1, 1], [], []>} : vector<128x128xbf16>, vector<128x32xbf16>, vector<128x32xf32> -> vector<128x32xf32>
    %cst_56 = arith.constant 1.000000e-01 : f32
    %155 = vector.broadcast %cst_56 : f32 to vector<128x32xf32>
    %156 = arith.mulf %155, %154 : vector<128x32xf32>
    %157 = arith.subf %91, %156 : vector<128x32xf32>
    %cst_57 = arith.constant 1.000000e-01 : f32
    %158 = vector.broadcast %cst_57 : f32 to vector<128x32xf32>
    %159 = arith.mulf %158, %157 : vector<128x32xf32>
    %160 = arith.addf %94, %159 : vector<128x32xf32>
    %161 = tpu.concatenate %160, %152 in 1 : vector<128x32xf32>, vector<128x32xf32> -> vector<128x64xf32>
    %162 = arith.truncf %161 : vector<128x64xf32> to vector<128x64xbf16>
    %cst_58 = arith.constant dense<0.000000e+00> : vector<128x64xf32>
    %163 = tpu.matmul %162, %6, %cst_58 {dimension_numbers = #tpu.dot_dimension_numbers<[1], [0], [0], [1], [0, 0, 1, 1], [], []>} : vector<128x64xbf16>, vector<64x64xbf16>, vector<128x64xf32> -> vector<128x64xf32>
    %164 = vector.extract_strided_slice %4 {offsets = [0, 0, 0], sizes = [1, 1, 32], strides = [1, 1, 1]} : vector<3x1x32xf32> to vector<1x1x32xf32>
    %165 = vector.shape_cast %164 : vector<1x1x32xf32> to vector<1x32xf32>
    %166 = vector.broadcast %165 : vector<1x32xf32> to vector<128x32xf32>
    %167 = arith.mulf %166, %115 : vector<128x32xf32>
    %168 = vector.extract_strided_slice %163 {offsets = [0, 0], sizes = [128, 32], strides = [1, 1]} : vector<128x64xf32> to vector<128x32xf32>
    %169 = arith.addf %167, %168 : vector<128x32xf32>
    %170 = vector.extract_strided_slice %5 {offsets = [0, 0, 0], sizes = [1, 1, 32], strides = [1, 1, 1]} : vector<3x1x32xf32> to vector<1x1x32xf32>
    %171 = vector.shape_cast %170 : vector<1x1x32xf32> to vector<1x32xf32>
    %172 = vector.broadcast %171 : vector<1x32xf32> to vector<128x32xf32>
    %173 = arith.addf %169, %172 : vector<128x32xf32>
    %cst_59 = arith.constant 0.000000e+00 : f32
    %174 = vector.broadcast %cst_59 : f32 to vector<128x32xf32>
    %175 = arith.maximumf %173, %174 : vector<128x32xf32>
    %cst_60 = arith.constant 1.000000e-01 : f32
    %176 = vector.broadcast %cst_60 : f32 to vector<128x32xf32>
    %177 = arith.mulf %176, %175 : vector<128x32xf32>
    %178 = arith.addf %112, %177 : vector<128x32xf32>
    %cst_61 = arith.constant 1.000000e-01 : f32
    %179 = vector.broadcast %cst_61 : f32 to vector<128x32xf32>
    %180 = arith.mulf %179, %178 : vector<128x32xf32>
    %181 = arith.addf %115, %180 : vector<128x32xf32>
    %182 = vector.extract_strided_slice %4 {offsets = [2, 0, 0], sizes = [1, 1, 32], strides = [1, 1, 1]} : vector<3x1x32xf32> to vector<1x1x32xf32>
    %183 = vector.shape_cast %182 : vector<1x1x32xf32> to vector<1x32xf32>
    %184 = vector.broadcast %183 : vector<1x32xf32> to vector<128x32xf32>
    %185 = arith.mulf %184, %133 : vector<128x32xf32>
    %186 = vector.extract_strided_slice %163 {offsets = [0, 32], sizes = [128, 32], strides = [1, 1]} : vector<128x64xf32> to vector<128x32xf32>
    %187 = arith.addf %185, %186 : vector<128x32xf32>
    %188 = vector.extract_strided_slice %5 {offsets = [2, 0, 0], sizes = [1, 1, 32], strides = [1, 1, 1]} : vector<3x1x32xf32> to vector<1x1x32xf32>
    %189 = vector.shape_cast %188 : vector<1x1x32xf32> to vector<1x32xf32>
    %190 = vector.broadcast %189 : vector<1x32xf32> to vector<128x32xf32>
    %191 = arith.addf %187, %190 : vector<128x32xf32>
    %cst_62 = arith.constant 0.000000e+00 : f32
    %192 = vector.broadcast %cst_62 : f32 to vector<128x32xf32>
    %193 = arith.maximumf %191, %192 : vector<128x32xf32>
    %cst_63 = arith.constant 1.000000e-01 : f32
    %194 = vector.broadcast %cst_63 : f32 to vector<128x32xf32>
    %195 = arith.mulf %194, %193 : vector<128x32xf32>
    %196 = arith.addf %130, %195 : vector<128x32xf32>
    %cst_64 = arith.constant 1.000000e-01 : f32
    %197 = vector.broadcast %cst_64 : f32 to vector<128x32xf32>
    %198 = arith.mulf %197, %196 : vector<128x32xf32>
    %199 = arith.addf %133, %198 : vector<128x32xf32>
    %200 = vector.extract_strided_slice %4 {offsets = [1, 0, 0], sizes = [1, 1, 32], strides = [1, 1, 1]} : vector<3x1x32xf32> to vector<1x1x32xf32>
    %201 = vector.shape_cast %200 : vector<1x1x32xf32> to vector<1x32xf32>
    %202 = vector.broadcast %201 : vector<1x32xf32> to vector<128x32xf32>
    %203 = arith.mulf %202, %152 : vector<128x32xf32>
    %204 = arith.truncf %181 : vector<128x32xf32> to vector<128x32xbf16>
    %cst_65 = arith.constant dense<0.000000e+00> : vector<128x32xf32>
    %205 = tpu.matmul %204, %7, %cst_65 {dimension_numbers = #tpu.dot_dimension_numbers<[1], [0], [0], [1], [0, 0, 1, 1], [], []>} : vector<128x32xbf16>, vector<32x32xbf16>, vector<128x32xf32> -> vector<128x32xf32>
    %206 = arith.addf %203, %205 : vector<128x32xf32>
    %207 = vector.extract_strided_slice %5 {offsets = [1, 0, 0], sizes = [1, 1, 32], strides = [1, 1, 1]} : vector<3x1x32xf32> to vector<1x1x32xf32>
    %208 = vector.shape_cast %207 : vector<1x1x32xf32> to vector<1x32xf32>
    %209 = vector.broadcast %208 : vector<1x32xf32> to vector<128x32xf32>
    %210 = arith.addf %206, %209 : vector<128x32xf32>
    %cst_66 = arith.constant 0.000000e+00 : f32
    %211 = vector.broadcast %cst_66 : f32 to vector<128x32xf32>
    %212 = arith.maximumf %210, %211 : vector<128x32xf32>
    %cst_67 = arith.constant 1.000000e-01 : f32
    %213 = vector.broadcast %cst_67 : f32 to vector<128x32xf32>
    %214 = arith.mulf %213, %212 : vector<128x32xf32>
    %215 = arith.addf %149, %214 : vector<128x32xf32>
    %cst_68 = arith.constant 1.000000e-01 : f32
    %216 = vector.broadcast %cst_68 : f32 to vector<128x32xf32>
    %217 = arith.mulf %216, %215 : vector<128x32xf32>
    %218 = arith.addf %152, %217 : vector<128x32xf32>
    %219 = arith.truncf %160 : vector<128x32xf32> to vector<128x32xbf16>
    %cst_69 = arith.constant dense<0.000000e+00> : vector<128x32xf32>
    %220 = tpu.matmul %1, %219, %cst_69 {dimension_numbers = #tpu.dot_dimension_numbers<[1], [0], [0], [1], [0, 0, 1, 1], [], []>} : vector<128x128xbf16>, vector<128x32xbf16>, vector<128x32xf32> -> vector<128x32xf32>
    %cst_70 = arith.constant 1.000000e-01 : f32
    %221 = vector.broadcast %cst_70 : f32 to vector<128x32xf32>
    %222 = arith.mulf %221, %220 : vector<128x32xf32>
    %223 = arith.subf %157, %222 : vector<128x32xf32>
    %cst_71 = arith.constant 1.000000e-01 : f32
    %224 = vector.broadcast %cst_71 : f32 to vector<128x32xf32>
    %225 = arith.mulf %224, %223 : vector<128x32xf32>
    %226 = arith.addf %160, %225 : vector<128x32xf32>
    %227 = tpu.concatenate %226, %218 in 1 : vector<128x32xf32>, vector<128x32xf32> -> vector<128x64xf32>
    %228 = arith.truncf %227 : vector<128x64xf32> to vector<128x64xbf16>
    %cst_72 = arith.constant dense<0.000000e+00> : vector<128x64xf32>
    %229 = tpu.matmul %228, %6, %cst_72 {dimension_numbers = #tpu.dot_dimension_numbers<[1], [0], [0], [1], [0, 0, 1, 1], [], []>} : vector<128x64xbf16>, vector<64x64xbf16>, vector<128x64xf32> -> vector<128x64xf32>
    %230 = vector.extract_strided_slice %4 {offsets = [2, 0, 0], sizes = [1, 1, 32], strides = [1, 1, 1]} : vector<3x1x32xf32> to vector<1x1x32xf32>
    %231 = vector.shape_cast %230 : vector<1x1x32xf32> to vector<1x32xf32>
    %232 = vector.broadcast %231 : vector<1x32xf32> to vector<128x32xf32>
    %233 = arith.mulf %232, %199 : vector<128x32xf32>
    %234 = vector.extract_strided_slice %229 {offsets = [0, 32], sizes = [128, 32], strides = [1, 1]} : vector<128x64xf32> to vector<128x32xf32>
    %235 = arith.addf %233, %234 : vector<128x32xf32>
    %236 = vector.extract_strided_slice %5 {offsets = [2, 0, 0], sizes = [1, 1, 32], strides = [1, 1, 1]} : vector<3x1x32xf32> to vector<1x1x32xf32>
    %237 = vector.shape_cast %236 : vector<1x1x32xf32> to vector<1x32xf32>
    %238 = vector.broadcast %237 : vector<1x32xf32> to vector<128x32xf32>
    %239 = arith.addf %235, %238 : vector<128x32xf32>
    %cst_73 = arith.constant 0.000000e+00 : f32
    %240 = vector.broadcast %cst_73 : f32 to vector<128x32xf32>
    %241 = arith.maximumf %239, %240 : vector<128x32xf32>
    %cst_74 = arith.constant 1.000000e-01 : f32
    %242 = vector.broadcast %cst_74 : f32 to vector<128x32xf32>
    %243 = arith.mulf %242, %241 : vector<128x32xf32>
    %244 = arith.addf %196, %243 : vector<128x32xf32>
    %cst_75 = arith.constant 1.000000e-01 : f32
    %245 = vector.broadcast %cst_75 : f32 to vector<128x32xf32>
    %246 = arith.mulf %245, %244 : vector<128x32xf32>
    %247 = arith.addf %199, %246 : vector<128x32xf32>
    %248 = arith.truncf %247 : vector<128x32xf32> to vector<128x32xbf16>
    %cst_76 = arith.constant dense<0.000000e+00> : vector<128x128xf32>
    %249 = tpu.matmul %248, %8, %cst_76 {dimension_numbers = #tpu.dot_dimension_numbers<[1], [0], [0], [1], [0, 0, 1, 1], [], []>} : vector<128x32xbf16>, vector<32x128xbf16>, vector<128x128xf32> -> vector<128x128xf32>
    %c0_77 = arith.constant 0 : index
    %c0_78 = arith.constant 0 : index
    %250 = vector.load %arg9[%c0_77, %c0_78] : memref<128x128xf32, #tpu.memory_space<vmem>>, vector<128x128xf32>
    tpu.vector_store %arg9[%c0_77, %c0_78], %249 {strides = array<i32>} : memref<128x128xf32, #tpu.memory_space<vmem>>, vector<128x128xf32>,
    return
  }
}

</mosaic_0001>

<llo_original>
// kernel: tpu_custom_call.1
$region0: #{tpu_custom_call.1}
  #allocation0 [shape = 'u32[]', space=smem, size = 0x4, offset = 0x4, fixed_abs, tag = 'smem constant byte address 0x4 - core index']
  #allocation1 [shape = 'u32[144,128]{1,0:T(1,128)}', space=vmem, size = 0x12000, scoped, tag = 'internal scratch']
  %s0 = inlined_call_operand.vmem [shape: bf16[128,32], index: 0, kind: input, shape index: {}]
  %s1 = inlined_call_operand.vmem [shape: bf16[128,128], index: 1, kind: input, shape index: {}]
  %s2 = inlined_call_operand.hbm [shape: bf16[32,32], index: 2, kind: input, shape index: {}]
  %s3 = inlined_call_operand.vmem [shape: f32[1,32], index: 3, kind: input, shape index: {}]
  %s4 = inlined_call_operand.hbm [shape: f32[3,1,32], index: 4, kind: input, shape index: {}]
  %s5 = inlined_call_operand.hbm [shape: f32[3,1,32], index: 5, kind: input, shape index: {}]
  %s6 = inlined_call_operand.vmem [shape: bf16[64,64], index: 6, kind: input, shape index: {}]
  %s7 = inlined_call_operand.hbm [shape: bf16[32,32], index: 7, kind: input, shape index: {}]
  %s8 = inlined_call_operand.hbm [shape: bf16[32,128], index: 8, kind: input, shape index: {}]
  %s9 = inlined_call_operand.hbm [shape: f32[128,128], index: 9, kind: output, shape index: {}]
  %s10 = sld [smem:[#allocation0]]
  $region66: #{tpu_custom_call.1} parent=0
    _
  %s12 = ssub.s32 1, %s10
  %s13 = scalar_select 0, %s12, %s10
  $region1: #{tpu_custom_call.1} parent=0
    #allocation2 [shape = 'u8[8192]{0}', space=vmem, size = 0x2000, scoped, tag = 'input window, operand 2, single buffered']
    #allocation3 [shape = 's32[1]{0}', space=sflag, size = 0x4, scoped, tag = 'scoped memory for tpu_custom_call.1']
    #allocation4 [shape = 's32[1]{0}', space=sflag, size = 0x4, scoped, tag = 'scoped memory for tpu_custom_call.1']
    #allocation5 [shape = 'u8[1536]{0}', space=vmem, size = 0x800, scoped, tag = 'input window, operand 4, single buffered']
    #allocation6 [shape = 's32[1]{0}', space=sflag, size = 0x4, scoped, tag = 'scoped memory for tpu_custom_call.1']
    #allocation7 [shape = 'u8[1536]{0}', space=vmem, size = 0x800, scoped, tag = 'input window, operand 5, single buffered']
    #allocation8 [shape = 'u8[8192]{0}', space=vmem, size = 0x2000, scoped, tag = 'input window, operand 7, single buffered']
    #allocation9 [shape = 's32[1]{0}', space=sflag, size = 0x4, scoped, tag = 'scoped memory for tpu_custom_call.1']
    #allocation10 [shape = 'u8[8192]{0}', space=vmem, size = 0x2000, scoped, tag = 'input window, operand 8, single buffered']
    #allocation11 [shape = 'u8[65536]{0}', space=vmem, size = 0x10000, scoped, tag = 'output window, operand 0, single buffered']
    %14 = vsyncpa [#allocation3], 0
    %15 = vsyncpa [#allocation6], 0
    %16 = vsyncpa [#allocation9], 0
    %17 = vsyncpa [#allocation4], 0
    // Predicated region
    $region2: #{tpu_custom_call.1} parent=1 // pred_check
      _
    $region3: #{tpu_custom_call.1} parent=1 // pred_check_branch
      %19 = sbr.rel (0) target = $region5
    $region4: #{tpu_custom_call.1} parent=1 // pred_region
      _
    $region5: #{tpu_custom_call.1} parent=1 // pred_fallthru
      _
    // Predicated region
    $region6: #{tpu_custom_call.1} parent=1 // pred_check
      _
    $region7: #{tpu_custom_call.1} parent=1 // pred_check_branch
      %21 = sbr.rel (0) target = $region9
    $region8: #{tpu_custom_call.1} parent=1 // pred_region
      _
    $region9: #{tpu_custom_call.1} parent=1 // pred_fallthru
      _
    // Predicated region
    $region10: #{tpu_custom_call.1} parent=1 // pred_check
      _
    $region11: #{tpu_custom_call.1} parent=1 // pred_check_branch
      %23 = sbr.rel (0) target = $region13
    $region12: #{tpu_custom_call.1} parent=1 // pred_region
      %s25 = ssub.s32 256, 256
      %26 = vsyncadd [#allocation3], %s25
      %s27 = sshll.u32 [#allocation2], 4
      %s28 = int_to_ptr.vmem [resolvable:$true] %s27
      %33 = dma.hbm_to_vmem [thread:$0]  %s2, 256, %s28, [#allocation3], 64, 64, 4
    $region13: #{tpu_custom_call.1} parent=1 // pred_fallthru
      _
    // Predicated region
    $region14: #{tpu_custom_call.1} parent=1 // pred_check
      _
    $region15: #{tpu_custom_call.1} parent=1 // pred_check_branch
      %35 = sbr.rel (0) target = $region17
    $region16: #{tpu_custom_call.1} parent=1 // pred_region
      _
    $region17: #{tpu_custom_call.1} parent=1 // pred_fallthru
      _
    // Predicated region
    $region18: #{tpu_custom_call.1} parent=1 // pred_check
      _
    $region19: #{tpu_custom_call.1} parent=1 // pred_check_branch
      %37 = sbr.rel (0) target = $region21
    $region20: #{tpu_custom_call.1} parent=1 // pred_region
      %s39 = ssub.s32 48, 48
      %40 = vsyncadd [#allocation6], %s39
      %s41 = sshll.u32 [#allocation5], 4
      %s42 = int_to_ptr.vmem [resolvable:$true] %s41
      %47 = dma.hbm_to_vmem [thread:$0]  %s4, 48, %s42, [#allocation6], 16, 16, 1
    $region21: #{tpu_custom_call.1} parent=1 // pred_fallthru
      _
    // Predicated region
    $region22: #{tpu_custom_call.1} parent=1 // pred_check
      _
    $region23: #{tpu_custom_call.1} parent=1 // pred_check_branch
      %49 = sbr.rel (0) target = $region25
    $region24: #{tpu_custom_call.1} parent=1 // pred_region
      %s51 = ssub.s32 48, 48
      %52 = vsyncadd [#allocation6], %s51
      %s53 = sshll.u32 [#allocation7], 4
      %s54 = int_to_ptr.vmem [resolvable:$true] %s53
      %59 = dma.hbm_to_vmem [thread:$0]  %s5, 48, %s54, [#allocation6], 16, 16, 1
    $region25: #{tpu_custom_call.1} parent=1 // pred_fallthru
      _
    // Predicated region
    $region26: #{tpu_custom_call.1} parent=1 // pred_check
      _
    $region27: #{tpu_custom_call.1} parent=1 // pred_check_branch
      %61 = sbr.rel (0) target = $region29
    $region28: #{tpu_custom_call.1} parent=1 // pred_region
      _
    $region29: #{tpu_custom_call.1} parent=1 // pred_fallthru
      _
    // Predicated region
    $region30: #{tpu_custom_call.1} parent=1 // pred_check
      _
    $region31: #{tpu_custom_call.1} parent=1 // pred_check_branch
      %63 = sbr.rel (0) target = $region33
    $region32: #{tpu_custom_call.1} parent=1 // pred_region
      %s65 = ssub.s32 256, 256
      %66 = vsyncadd [#allocation9], %s65
      %s67 = sshll.u32 [#allocation8], 4
      %s68 = int_to_ptr.vmem [resolvable:$true] %s67
      %73 = dma.hbm_to_vmem [thread:$0]  %s7, 256, %s68, [#allocation9], 64, 64, 4
    $region33: #{tpu_custom_call.1} parent=1 // pred_fallthru
      _
    // Predicated region
    $region34: #{tpu_custom_call.1} parent=1 // pred_check
      _
    $region35: #{tpu_custom_call.1} parent=1 // pred_check_branch
      %75 = sbr.rel (0) target = $region37
    $region36: #{tpu_custom_call.1} parent=1 // pred_region
      %s77 = ssub.s32 256, 256
      %78 = vsyncadd [#allocation9], %s77
      %s79 = sshll.u32 [#allocation10], 4
      %s80 = int_to_ptr.vmem [resolvable:$true] %s79
      %85 = dma.hbm_to_vmem [thread:$0]  %s8, 256, %s80, [#allocation9], 64, 64, 4
    $region37: #{tpu_custom_call.1} parent=1 // pred_fallthru
      _
    // Predicated region
    $region38: #{tpu_custom_call.1} parent=1 // pred_check
      _
    $region39: #{tpu_custom_call.1} parent=1 // pred_check_branch
      %87 = sbr.rel (0) target = $region41
    $region40: #{tpu_custom_call.1} parent=1 // pred_region
      %88 = dma.done [#allocation3], 256
    $region41: #{tpu_custom_call.1} parent=1 // pred_fallthru
      _
    // Predicated region
    $region42: #{tpu_custom_call.1} parent=1 // pred_check
      _
    $region43: #{tpu_custom_call.1} parent=1 // pred_check_branch
      %90 = sbr.rel (0) target = $region45
    $region44: #{tpu_custom_call.1} parent=1 // pred_region
      %91 = dma.done [#allocation6], 48
    $region45: #{tpu_custom_call.1} parent=1 // pred_fallthru
      _
    // Predicated region
    $region46: #{tpu_custom_call.1} parent=1 // pred_check
      _
    $region47: #{tpu_custom_call.1} parent=1 // pred_check_branch
      %93 = sbr.rel (0) target = $region49
    $region48: #{tpu_custom_call.1} parent=1 // pred_region
      %94 = dma.done [#allocation6], 48
    $region49: #{tpu_custom_call.1} parent=1 // pred_fallthru
      _
    // Predicated region
    $region50: #{tpu_custom_call.1} parent=1 // pred_check
      _
    $region51: #{tpu_custom_call.1} parent=1 // pred_check_branch
      %96 = sbr.rel (0) target = $region53
    $region52: #{tpu_custom_call.1} parent=1 // pred_region
      %97 = dma.done [#allocation9], 256
    $region53: #{tpu_custom_call.1} parent=1 // pred_fallthru
      _
    // Predicated region
    $region54: #{tpu_custom_call.1} parent=1 // pred_check
      _
    $region55: #{tpu_custom_call.1} parent=1 // pred_check_branch
      %99 = sbr.rel (0) target = $region57
    $region56: #{tpu_custom_call.1} parent=1 // pred_region
      %100 = dma.done [#allocation9], 256
    $region57: #{tpu_custom_call.1} parent=1 // pred_fallthru
      _
    %v102 = vld [vmem:[%s0] sm:$0xf]
    %v103 = vld [vmem:[%s0 + $0x4] sm:$0xf]
    %v104 = vld [vmem:[%s0 + $0x8] sm:$0xf]
    %v105 = vld [vmem:[%s0 + $0xc] sm:$0xf]
    %v106 = vld [vmem:[%s0 + $0x10] sm:$0xf]
    %v107 = vld [vmem:[%s0 + $0x14] sm:$0xf]
    %v108 = vld [vmem:[%s0 + $0x18] sm:$0xf]
    %v109 = vld [vmem:[%s0 + $0x1c] sm:$0xf]
    %v110 = vld [vmem:[%s0 + $0x20] sm:$0xf]
    %v111 = vld [vmem:[%s0 + $0x24] sm:$0xf]
    %v112 = vld [vmem:[%s0 + $0x28] sm:$0xf]
    %v113 = vld [vmem:[%s0 + $0x2c] sm:$0xf]
    %v114 = vld [vmem:[%s0 + $0x30] sm:$0xf]
    %v115 = vld [vmem:[%s0 + $0x34] sm:$0xf]
    %v116 = vld [vmem:[%s0 + $0x38] sm:$0xf]
    %v117 = vld [vmem:[%s0 + $0x3c] sm:$0xf]
    %v118 = vld [vmem:[%s1] sm:$0xf]
    %v119 = vld [vmem:[%s1 + $0x4] sm:$0xf]
    %v120 = vld [vmem:[%s1 + $0x8] sm:$0xf]
    %v121 = vld [vmem:[%s1 + $0xc] sm:$0xf]
    %v122 = vld [vmem:[%s1 + $0x10] sm:$0xf]
    %v123 = vld [vmem:[%s1 + $0x14] sm:$0xf]
    %v124 = vld [vmem:[%s1 + $0x18] sm:$0xf]
    %v125 = vld [vmem:[%s1 + $0x1c] sm:$0xf]
    %v126 = vld [vmem:[%s1 + $0x20] sm:$0xf]
    %v127 = vld [vmem:[%s1 + $0x24] sm:$0xf]
    %v128 = vld [vmem:[%s1 + $0x28] sm:$0xf]
    %v129 = vld [vmem:[%s1 + $0x2c] sm:$0xf]
    %v130 = vld [vmem:[%s1 + $0x30] sm:$0xf]
    %v131 = vld [vmem:[%s1 + $0x34] sm:$0xf]
    %v132 = vld [vmem:[%s1 + $0x38] sm:$0xf]
    %v133 = vld [vmem:[%s1 + $0x3c] sm:$0xf]
    %v134 = vld [vmem:[#allocation2] sm:$0xf]
    %v135 = vld [vmem:[#allocation2 + $0x4] sm:$0xf]
    %v136 = vld [vmem:[#allocation2 + $0x8] sm:$0xf]
    %v137 = vld [vmem:[#allocation2 + $0xc] sm:$0xf]
    %v138 = vld [vmem:[%s3] sm:$0x1]
    %v139 = vld [vmem:[#allocation5] sm:$0x1]
    %v140 = vld [vmem:[#allocation5 + $0x1] sm:$0x1]
    %v141 = vld [vmem:[#allocation5 + $0x2] sm:$0x1]
    %v142 = vld [vmem:[#allocation7] sm:$0x1]
    %v143 = vld [vmem:[#allocation7 + $0x1] sm:$0x1]
    %v144 = vld [vmem:[#allocation7 + $0x2] sm:$0x1]
    %v145 = vld [vmem:[%s6] sm:$0xf]
    %v146 = vld [vmem:[%s6 + $0x4] sm:$0xf]
    %v147 = vld [vmem:[%s6 + $0x8] sm:$0xf]
    %v148 = vld [vmem:[%s6 + $0xc] sm:$0xf]
    %v149 = vld [vmem:[%s6 + $0x10] sm:$0xf]
    %v150 = vld [vmem:[%s6 + $0x14] sm:$0xf]
    %v151 = vld [vmem:[%s6 + $0x18] sm:$0xf]
    %v152 = vld [vmem:[%s6 + $0x1c] sm:$0xf]
    %v153 = vld [vmem:[#allocation8] sm:$0xf]
    %v154 = vld [vmem:[#allocation8 + $0x4] sm:$0xf]
    %v155 = vld [vmem:[#allocation8 + $0x8] sm:$0xf]
    %v156 = vld [vmem:[#allocation8 + $0xc] sm:$0xf]
    %v157 = vld [vmem:[#allocation10] sm:$0xf]
    %v158 = vld [vmem:[#allocation10 + $0x4] sm:$0xf]
    %v159 = vld [vmem:[#allocation10 + $0x8] sm:$0xf]
    %v160 = vld [vmem:[#allocation10 + $0xc] sm:$0xf]
    %v162 = vlaneseq
    %v163 = vshrl.u32 %v162, 7
    %v164 = vsub.s32 0, %v163
    %v165 = vrot.slane %v138, %v164
    %v183 = vunpack.c.l.b16 %v102
    %v184 = vunpack.c.l.b16 %v103
    %v185 = vunpack.c.l.b16 %v104
    %v186 = vunpack.c.l.b16 %v105
    %v187 = vunpack.c.l.b16 %v106
    %v188 = vunpack.c.l.b16 %v107
    %v189 = vunpack.c.l.b16 %v108
    %v190 = vunpack.c.l.b16 %v109
    %v191 = vunpack.c.l.b16 %v110
    %v192 = vunpack.c.l.b16 %v111
    %v193 = vunpack.c.l.b16 %v112
    %v194 = vunpack.c.l.b16 %v113
    %v195 = vunpack.c.l.b16 %v114
    %v196 = vunpack.c.l.b16 %v115
    %v197 = vunpack.c.l.b16 %v116
    %v198 = vunpack.c.l.b16 %v117
    %v199 = vpack.c.b16 %v184, %v183
    %v200 = vpack.c.b16 %v186, %v185
    %v201 = vpack.c.b16 %v188, %v187
    %v202 = vpack.c.b16 %v190, %v189
    %v203 = vpack.c.b16 %v192, %v191
    %v204 = vpack.c.b16 %v194, %v193
    %v205 = vpack.c.b16 %v196, %v195
    %v206 = vpack.c.b16 %v198, %v197
    %v211 = vunpack.c.l.b16 %v134
    %v212 = vunpack.c.l.b16 %v135
    %v213 = vunpack.c.l.b16 %v136
    %v214 = vunpack.c.l.b16 %v137
    %v215 = vpack.c.b16 %v212, %v211
    %v216 = vpack.c.b16 %v214, %v213
    %vm219 = vcmask 261120
    %v221 = vsel %vm219, %v199, 0
    %v224 = vsel %vm219, %v200, 0
    %v227 = vsel %vm219, %v201, 0
    %v230 = vsel %vm219, %v202, 0
    %v233 = vsel %vm219, %v203, 0
    %v236 = vsel %vm219, %v204, 0
    %v239 = vsel %vm219, %v205, 0
    %v242 = vsel %vm219, %v206, 0
    %244 = vmatprep.subr.bf16.mxu0 0
    %245 = vmatpush1.bf16.msra.mxu0 %v215
    %246 = vmatprep.subr.bf16.mxu0 0
    %247 = vmatpush1.bf16.msra.mxu0 %v216
    %248 = vmatprep.subr.bf16.mxu0 0
    %249 = vmatpush1.bf16.msra.mxu0 0
    %250 = vmatprep.subr.bf16.mxu0 0
    %251 = vmatpush1.bf16.msra.mxu0 0
    %252 = vmatprep.subr.bf16.mxu0 0
    %253 = vmatpush1.bf16.msra.mxu0 0
    %254 = vmatprep.subr.bf16.mxu0 0
    %255 = vmatpush1.bf16.msra.mxu0 0
    %256 = vmatprep.subr.bf16.mxu0 0
    %257 = vmatpush1.bf16.msra.mxu0 0
    %258 = vmatprep.subr.bf16.mxu0 0
    %259 = vmatpush1.bf16.msra.mxu0 0
    %260 = vmatprep.subr.bf16.mxu0 0
    %261 = vmatpush1.bf16.msra.mxu0 0
    %262 = vmatprep.subr.bf16.mxu0 0
    %263 = vmatpush1.bf16.msra.mxu0 0
    %264 = vmatprep.subr.bf16.mxu0 0
    %265 = vmatpush1.bf16.msra.mxu0 0
    %266 = vmatprep.subr.bf16.mxu0 0
    %267 = vmatpush1.bf16.msra.mxu0 0
    %268 = vmatprep.subr.bf16.mxu0 0
    %269 = vmatpush1.bf16.msra.mxu0 0
    %270 = vmatprep.subr.bf16.mxu0 0
    %271 = vmatpush1.bf16.msra.mxu0 0
    %272 = vmatprep.subr.bf16.mxu0 0
    %273 = vmatpush1.bf16.msra.mxu0 0
    %274 = vmatprep.subr.bf16.mxu0 0
    %275 = vmatpush1.bf16.msra.mxu0 0
    %276 = vmatprep.mubr.bf16.mxu0 0
    %277 = vmatmul.mubr.bf16.gmra.mrb[0].mxu0 %v221
    %v278 = vpop.f32.mrb[0].mxu0
    %v279 = vadd.f32 %v165, %v278
    %v280 = vpop.f32.mrb[0].mxu0
    %v281 = vpop.f32.mrb[0].mxu0
    %v282 = vadd.f32 %v165, %v281
    %v283 = vpop.f32.mrb[0].mxu0
    %284 = vmatprep.mubr.bf16.mxu0 0
    %285 = vmatmul.mubr.bf16.gmra.mrb[0].mxu0 %v224
    %v286 = vpop.f32.mrb[0].mxu0
    %v287 = vadd.f32 %v165, %v286
    %v288 = vpop.f32.mrb[0].mxu0
    %v289 = vpop.f32.mrb[0].mxu0
    %v290 = vadd.f32 %v165, %v289
    %v291 = vpop.f32.mrb[0].mxu0
    %292 = vmatprep.mubr.bf16.mxu0 0
    %293 = vmatmul.mubr.bf16.gmra.mrb[0].mxu0 %v227
    %v294 = vpop.f32.mrb[0].mxu0
    %v295 = vadd.f32 %v165, %v294
    %v296 = vpop.f32.mrb[0].mxu0
    %v297 = vpop.f32.mrb[0].mxu0
    %v298 = vadd.f32 %v165, %v297
    %v299 = vpop.f32.mrb[0].mxu0
    %300 = vmatprep.mubr.bf16.mxu0 0
    %301 = vmatmul.mubr.bf16.gmra.mrb[0].mxu0 %v230
    %v302 = vpop.f32.mrb[0].mxu0
    %v303 = vadd.f32 %v165, %v302
    %v304 = vpop.f32.mrb[0].mxu0
    %v305 = vpop.f32.mrb[0].mxu0
    %v306 = vadd.f32 %v165, %v305
    %v307 = vpop.f32.mrb[0].mxu0
    %308 = vmatprep.mubr.bf16.mxu0 0
    %309 = vmatmul.mubr.bf16.gmra.mrb[0].mxu0 %v233
    %v310 = vpop.f32.mrb[0].mxu0
    %v311 = vadd.f32 %v165, %v310
    %v312 = vpop.f32.mrb[0].mxu0
    %v313 = vpop.f32.mrb[0].mxu0
    %v314 = vadd.f32 %v165, %v313
    %v315 = vpop.f32.mrb[0].mxu0
    %316 = vmatprep.mubr.bf16.mxu0 0
    %317 = vmatmul.mubr.bf16.gmra.mrb[0].mxu0 %v236
    %v318 = vpop.f32.mrb[0].mxu0
    %v319 = vadd.f32 %v165, %v318
    %v320 = vpop.f32.mrb[0].mxu0
    %v321 = vpop.f32.mrb[0].mxu0
    %v322 = vadd.f32 %v165, %v321
    %v323 = vpop.f32.mrb[0].mxu0
    %324 = vmatprep.mubr.bf16.mxu0 0
    %325 = vmatmul.mubr.bf16.gmra.mrb[0].mxu0 %v239
    %v326 = vpop.f32.mrb[0].mxu0
    %v327 = vadd.f32 %v165, %v326
    %v328 = vpop.f32.mrb[0].mxu0
    %v329 = vpop.f32.mrb[0].mxu0
    %v330 = vadd.f32 %v165, %v329
    %v331 = vpop.f32.mrb[0].mxu0
    %332 = vmatprep.mubr.bf16.mxu0 0
    %333 = vmatmul.mubr.bf16.gmra.mrb[0].mxu0 %v242
    %v334 = vpop.f32.mrb[0].mxu0
    %v335 = vadd.f32 %v165, %v334
    %v336 = vpop.f32.mrb[0].mxu0
    %v337 = vpop.f32.mrb[0].mxu0
    %v338 = vadd.f32 %v165, %v337
    %v339 = vpop.f32.mrb[0].mxu0
    %340 = vdwg.mxu0
    %v341 = vmax.f32 %v279, 0.0
    %v342 = vmax.f32 %v282, 0.0
    %v343 = vmax.f32 %v287, 0.0
    %v344 = vmax.f32 %v290, 0.0
    %v345 = vmax.f32 %v295, 0.0
    %v346 = vmax.f32 %v298, 0.0
    %v347 = vmax.f32 %v303, 0.0
    %v348 = vmax.f32 %v306, 0.0
    %v349 = vmax.f32 %v311, 0.0
    %v350 = vmax.f32 %v314, 0.0
    %v351 = vmax.f32 %v319, 0.0
    %v352 = vmax.f32 %v322, 0.0
    %v353 = vmax.f32 %v327, 0.0
    %v354 = vmax.f32 %v330, 0.0
    %v355 = vmax.f32 %v335, 0.0
    %v356 = vmax.f32 %v338, 0.0
    %v357 = vpack.c.bf16 %v342, %v341
    %v358 = vpack.c.bf16 %v344, %v343
    %v359 = vpack.c.bf16 %v346, %v345
    %v360 = vpack.c.bf16 %v348, %v347
    %v361 = vpack.c.bf16 %v350, %v349
    %v362 = vpack.c.bf16 %v352, %v351
    %v363 = vpack.c.bf16 %v354, %v353
    %v364 = vpack.c.bf16 %v356, %v355
    %v381 = vunpack.c.l.b16 %v118
    %v382 = vunpack.c.l.b16 %v119
    %v383 = vunpack.c.l.b16 %v120
    %v384 = vunpack.c.l.b16 %v121
    %v385 = vunpack.c.l.b16 %v122
    %v386 = vunpack.c.l.b16 %v123
    %v387 = vunpack.c.l.b16 %v124
    %v388 = vunpack.c.l.b16 %v125
    %v389 = vunpack.c.l.b16 %v126
    %v390 = vunpack.c.l.b16 %v127
    %v391 = vunpack.c.l.b16 %v128
    %v392 = vunpack.c.l.b16 %v129
    %v393 = vunpack.c.l.b16 %v130
    %v394 = vunpack.c.l.b16 %v131
    %v395 = vunpack.c.l.b16 %v132
    %v396 = vunpack.c.l.b16 %v133
    %v397 = vpack.c.b16 %v382, %v381
    %v398 = vpack.c.b16 %v384, %v383
    %v399 = vpack.c.b16 %v386, %v385
    %v400 = vpack.c.b16 %v388, %v387
    %v401 = vpack.c.b16 %v390, %v389
    %v402 = vpack.c.b16 %v392, %v391
    %v403 = vpack.c.b16 %v394, %v393
    %v404 = vpack.c.b16 %v396, %v395
    %413 = vmatprep.subr.bf16.mxu0 0
    %414 = vmatpush1.bf16.msra.mxu0 %v357
    %415 = vmatprep.subr.bf16.mxu0 0
    %416 = vmatpush1.bf16.msra.mxu0 %v358
    %417 = vmatprep.subr.bf16.mxu0 0
    %418 = vmatpush1.bf16.msra.mxu0 %v359
    %419 = vmatprep.subr.bf16.mxu0 0
    %420 = vmatpush1.bf16.msra.mxu0 %v360
    %421 = vmatprep.subr.bf16.mxu0 0
    %422 = vmatpush1.bf16.msra.mxu0 %v361
    %423 = vmatprep.subr.bf16.mxu0 0
    %424 = vmatpush1.bf16.msra.mxu0 %v362
    %425 = vmatprep.subr.bf16.mxu0 0
    %426 = vmatpush1.bf16.msra.mxu0 %v363
    %427 = vmatprep.subr.bf16.mxu0 0
    %428 = vmatpush1.bf16.msra.mxu0 %v364
    %429 = vmatprep.subr.bf16.mxu0 0
    %430 = vmatpush1.bf16.msra.mxu0 0
    %431 = vmatprep.subr.bf16.mxu0 0
    %432 = vmatpush1.bf16.msra.mxu0 0
    %433 = vmatprep.subr.bf16.mxu0 0
    %434 = vmatpush1.bf16.msra.mxu0 0
    %435 = vmatprep.subr.bf16.mxu0 0
    %436 = vmatpush1.bf16.msra.mxu0 0
    %437 = vmatprep.subr.bf16.mxu0 0
    %438 = vmatpush1.bf16.msra.mxu0 0
    %439 = vmatprep.subr.bf16.mxu0 0
    %440 = vmatpush1.bf16.msra.mxu0 0
    %441 = vmatprep.subr.bf16.mxu0 0
    %442 = vmatpush1.bf16.msra.mxu0 0
    %443 = vmatprep.subr.bf16.mxu0 0
    %444 = vmatpush1.bf16.msra.mxu0 0
    %445 = vmatprep.mubr.bf16.mxu0 0
    %446 = vmatmul.mubr.bf16.gmra.mrb[0].mxu0 %v397
    %v447 = vpop.f32.mrb[0].mxu0
    %v448 = vadd.f32 0.0, %v447
    %v449 = vpop.f32.mrb[0].mxu0
    %v450 = vpop.f32.mrb[0].mxu0
    %v451 = vadd.f32 0.0, %v450
    %v452 = vpop.f32.mrb[0].mxu0
    %453 = vmatprep.mubr.bf16.mxu0 0
    %454 = vmatmul.mubr.bf16.gmra.mrb[0].mxu0 %v398
    %v455 = vpop.f32.mrb[0].mxu0
    %v456 = vadd.f32 0.0, %v455
    %v457 = vpop.f32.mrb[0].mxu0
    %v458 = vpop.f32.mrb[0].mxu0
    %v459 = vadd.f32 0.0, %v458
    %v460 = vpop.f32.mrb[0].mxu0
    %461 = vmatprep.mubr.bf16.mxu0 0
    %462 = vmatmul.mubr.bf16.gmra.mrb[0].mxu0 %v399
    %v463 = vpop.f32.mrb[0].mxu0
    %v464 = vadd.f32 0.0, %v463
    %v465 = vpop.f32.mrb[0].mxu0
    %v466 = vpop.f32.mrb[0].mxu0
    %v467 = vadd.f32 0.0, %v466
    %v468 = vpop.f32.mrb[0].mxu0
    %469 = vmatprep.mubr.bf16.mxu0 0
    %470 = vmatmul.mubr.bf16.gmra.mrb[0].mxu0 %v400
    %v471 = vpop.f32.mrb[0].mxu0
    %v472 = vadd.f32 0.0, %v471
    %v473 = vpop.f32.mrb[0].mxu0
    %v474 = vpop.f32.mrb[0].mxu0
    %v475 = vadd.f32 0.0, %v474
    %v476 = vpop.f32.mrb[0].mxu0
    %477 = vmatprep.mubr.bf16.mxu0 0
    %478 = vmatmul.mubr.bf16.gmra.mrb[0].mxu0 %v401
    %v479 = vpop.f32.mrb[0].mxu0
    %v480 = vadd.f32 0.0, %v479
    %v481 = vpop.f32.mrb[0].mxu0
    %v482 = vpop.f32.mrb[0].mxu0
    %v483 = vadd.f32 0.0, %v482
    %v484 = vpop.f32.mrb[0].mxu0
    %485 = vmatprep.mubr.bf16.mxu0 0
    %486 = vmatmul.mubr.bf16.gmra.mrb[0].mxu0 %v402
    %v487 = vpop.f32.mrb[0].mxu0
    %v488 = vadd.f32 0.0, %v487
    %v489 = vpop.f32.mrb[0].mxu0
    %v490 = vpop.f32.mrb[0].mxu0
    %v491 = vadd.f32 0.0, %v490
    %v492 = vpop.f32.mrb[0].mxu0
    %493 = vmatprep.mubr.bf16.mxu0 0
    %494 = vmatmul.mubr.bf16.gmra.mrb[0].mxu0 %v403
    %v495 = vpop.f32.mrb[0].mxu0
    %v496 = vadd.f32 0.0, %v495
    %v497 = vpop.f32.mrb[0].mxu0
    %v498 = vpop.f32.mrb[0].mxu0
    %v499 = vadd.f32 0.0, %v498
    %v500 = vpop.f32.mrb[0].mxu0
    %501 = vmatprep.mubr.bf16.mxu0 0
    %502 = vmatmul.mubr.bf16.gmra.mrb[0].mxu0 %v404
    %v503 = vpop.f32.mrb[0].mxu0
    %v504 = vadd.f32 0.0, %v503
    %v505 = vpop.f32.mrb[0].mxu0
    %v506 = vpop.f32.mrb[0].mxu0
    %v507 = vadd.f32 0.0, %v506
    %v508 = vpop.f32.mrb[0].mxu0
    %509 = vdwg.mxu0
    %v510 = vmul.f32 %v448, 0.1
    %v511 = vmul.f32 %v451, 0.1
    %v512 = vmul.f32 %v456, 0.1
    %v513 = vmul.f32 %v459, 0.1
    %v514 = vmul.f32 %v464, 0.1
    %v515 = vmul.f32 %v467, 0.1
    %v516 = vmul.f32 %v472, 0.1
    %v517 = vmul.f32 %v475, 0.1
    %v518 = vmul.f32 %v480, 0.1
    %v519 = vmul.f32 %v483, 0.1
    %v520 = vmul.f32 %v488, 0.1
    %v521 = vmul.f32 %v491, 0.1
    %v522 = vmul.f32 %v496, 0.1
    %v523 = vmul.f32 %v499, 0.1
    %v524 = vmul.f32 %v504, 0.1
    %v525 = vmul.f32 %v507, 0.1
    %v526 = vsub.f32 0.0, %v510
    %v527 = vsub.f32 0.0, %v511
    %v528 = vsub.f32 0.0, %v512
    %v529 = vsub.f32 0.0, %v513
    %v530 = vsub.f32 0.0, %v514
    %v531 = vsub.f32 0.0, %v515
    %v532 = vsub.f32 0.0, %v516
    %v533 = vsub.f32 0.0, %v517
    %v534 = vsub.f32 0.0, %v518
    %v535 = vsub.f32 0.0, %v519
    %v536 = vsub.f32 0.0, %v520
    %v537 = vsub.f32 0.0, %v521
    %v538 = vsub.f32 0.0, %v522
    %v539 = vsub.f32 0.0, %v523
    %v540 = vsub.f32 0.0, %v524
    %v541 = vsub.f32 0.0, %v525
    %v542 = vmul.f32 %v526, 0.1
    %v543 = vmul.f32 %v527, 0.1
    %v544 = vmul.f32 %v528, 0.1
    %v545 = vmul.f32 %v529, 0.1
    %v546 = vmul.f32 %v530, 0.1
    %v547 = vmul.f32 %v531, 0.1
    %v548 = vmul.f32 %v532, 0.1
    %v549 = vmul.f32 %v533, 0.1
    %v550 = vmul.f32 %v534, 0.1
    %v551 = vmul.f32 %v535, 0.1
    %v552 = vmul.f32 %v536, 0.1
    %v553 = vmul.f32 %v537, 0.1
    %v554 = vmul.f32 %v538, 0.1
    %v555 = vmul.f32 %v539, 0.1
    %v556 = vmul.f32 %v540, 0.1
    %v557 = vmul.f32 %v541, 0.1
    %v558 = vadd.f32 %v341, %v542
    %v559 = vadd.f32 %v342, %v543
    %v560 = vadd.f32 %v343, %v544
    %v561 = vadd.f32 %v344, %v545
    %v562 = vadd.f32 %v345, %v546
    %v563 = vadd.f32 %v346, %v547
    %v564 = vadd.f32 %v347, %v548
    %v565 = vadd.f32 %v348, %v549
    %v566 = vadd.f32 %v349, %v550
    %v567 = vadd.f32 %v350, %v551
    %v568 = vadd.f32 %v351, %v552
    %v569 = vadd.f32 %v352, %v553
    %v570 = vadd.f32 %v353, %v554
    %v571 = vadd.f32 %v354, %v555
    %v572 = vadd.f32 %v355, %v556
    %v573 = vadd.f32 %v356, %v557
    %v574 = vsel %vm219, %v558, 0.0
    %v575 = vsel %vm219, %v559, 0.0
    %v576 = vsel %vm219, %v560, 0.0
    %v577 = vsel %vm219, %v561, 0.0
    %v578 = vsel %vm219, %v562, 0.0
    %v579 = vsel %vm219, %v563, 0.0
    %v580 = vsel %vm219, %v564, 0.0
    %v581 = vsel %vm219, %v565, 0.0
    %v582 = vsel %vm219, %v566, 0.0
    %v583 = vsel %vm219, %v567, 0.0
    %v584 = vsel %vm219, %v568, 0.0
    %v585 = vsel %vm219, %v569, 0.0
    %v586 = vsel %vm219, %v570, 0.0
    %v587 = vsel %vm219, %v571, 0.0
    %v588 = vsel %vm219, %v572, 0.0
    %v589 = vsel %vm219, %v573, 0.0
    %v590 = vpack.c.bf16 %v575, %v574
    %v591 = vpack.c.bf16 %v577, %v576
    %v592 = vpack.c.bf16 %v579, %v578
    %v593 = vpack.c.bf16 %v581, %v580
    %v594 = vpack.c.bf16 %v583, %v582
    %v595 = vpack.c.bf16 %v585, %v584
    %v596 = vpack.c.bf16 %v587, %v586
    %v597 = vpack.c.bf16 %v589, %v588
    %v606 = vunpack.c.l.b16 %v145
    %v607 = vunpack.c.l.b16 %v146
    %v608 = vunpack.c.l.b16 %v147
    %v609 = vunpack.c.l.b16 %v148
    %v610 = vunpack.c.l.b16 %v149
    %v611 = vunpack.c.l.b16 %v150
    %v612 = vunpack.c.l.b16 %v151
    %v613 = vunpack.c.l.b16 %v152
    %v614 = vpack.c.b16 %v607, %v606
    %v615 = vpack.c.b16 %v609, %v608
    %v616 = vpack.c.b16 %v611, %v610
    %v617 = vpack.c.b16 %v613, %v612
    %vm622 = vcmask 523264
    %v624 = vsel %vm622, %v590, 0
    %v627 = vsel %vm622, %v591, 0
    %v630 = vsel %vm622, %v592, 0
    %v633 = vsel %vm622, %v593, 0
    %v636 = vsel %vm622, %v594, 0
    %v639 = vsel %vm622, %v595, 0
    %v642 = vsel %vm622, %v596, 0
    %v645 = vsel %vm622, %v597, 0
    %647 = vmatprep.subr.bf16.mxu0 0
    %648 = vmatpush1.bf16.msra.mxu0 %v614
    %649 = vmatprep.subr.bf16.mxu0 0
    %650 = vmatpush1.bf16.msra.mxu0 %v615
    %651 = vmatprep.subr.bf16.mxu0 0
    %652 = vmatpush1.bf16.msra.mxu0 %v616
    %653 = vmatprep.subr.bf16.mxu0 0
    %654 = vmatpush1.bf16.msra.mxu0 %v617
    %655 = vmatprep.subr.bf16.mxu0 0
    %656 = vmatpush1.bf16.msra.mxu0 0
    %657 = vmatprep.subr.bf16.mxu0 0
    %658 = vmatpush1.bf16.msra.mxu0 0
    %659 = vmatprep.subr.bf16.mxu0 0
    %660 = vmatpush1.bf16.msra.mxu0 0
    %661 = vmatprep.subr.bf16.mxu0 0
    %662 = vmatpush1.bf16.msra.mxu0 0
    %663 = vmatprep.subr.bf16.mxu0 0
    %664 = vmatpush1.bf16.msra.mxu0 0
    %665 = vmatprep.subr.bf16.mxu0 0
    %666 = vmatpush1.bf16.msra.mxu0 0
    %667 = vmatprep.subr.bf16.mxu0 0
    %668 = vmatpush1.bf16.msra.mxu0 0
    %669 = vmatprep.subr.bf16.mxu0 0
    %670 = vmatpush1.bf16.msra.mxu0 0
    %671 = vmatprep.subr.bf16.mxu0 0
    %672 = vmatpush1.bf16.msra.mxu0 0
    %673 = vmatprep.subr.bf16.mxu0 0
    %674 = vmatpush1.bf16.msra.mxu0 0
    %675 = vmatprep.subr.bf16.mxu0 0
    %676 = vmatpush1.bf16.msra.mxu0 0
    %677 = vmatprep.subr.bf16.mxu0 0
    %678 = vmatpush1.bf16.msra.mxu0 0
    %679 = vmatprep.mubr.bf16.mxu0 0
    %680 = vmatmul.mubr.bf16.gmra.mrb[0].mxu0 %v624
    %v681 = vpop.f32.mrb[0].mxu0
    %v682 = vadd.f32 0.0, %v681
    %v683 = vpop.f32.mrb[0].mxu0
    %v684 = vpop.f32.mrb[0].mxu0
    %v685 = vadd.f32 0.0, %v684
    %v686 = vpop.f32.mrb[0].mxu0
    %687 = vmatprep.mubr.bf16.mxu0 0
    %688 = vmatmul.mubr.bf16.gmra.mrb[0].mxu0 %v627
    %v689 = vpop.f32.mrb[0].mxu0
    %v690 = vadd.f32 0.0, %v689
    %v691 = vpop.f32.mrb[0].mxu0
    %v692 = vpop.f32.mrb[0].mxu0
    %v693 = vadd.f32 0.0, %v692
    %v694 = vpop.f32.mrb[0].mxu0
    %695 = vmatprep.mubr.bf16.mxu0 0
    %696 = vmatmul.mubr.bf16.gmra.mrb[0].mxu0 %v630
    %v697 = vpop.f32.mrb[0].mxu0
    %v698 = vadd.f32 0.0, %v697
    %v699 = vpop.f32.mrb[0].mxu0
    %v700 = vpop.f32.mrb[0].mxu0
    %v701 = vadd.f32 0.0, %v700
    %v702 = vpop.f32.mrb[0].mxu0
    %703 = vmatprep.mubr.bf16.mxu0 0
    %704 = vmatmul.mubr.bf16.gmra.mrb[0].mxu0 %v633
    %v705 = vpop.f32.mrb[0].mxu0
    %v706 = vadd.f32 0.0, %v705
    %v707 = vpop.f32.mrb[0].mxu0
    %v708 = vpop.f32.mrb[0].mxu0
    %v709 = vadd.f32 0.0, %v708
    %v710 = vpop.f32.mrb[0].mxu0
    %711 = vmatprep.mubr.bf16.mxu0 0
    %712 = vmatmul.mubr.bf16.gmra.mrb[0].mxu0 %v636
    %v713 = vpop.f32.mrb[0].mxu0
    %v714 = vadd.f32 0.0, %v713
    %v715 = vpop.f32.mrb[0].mxu0
    %v716 = vpop.f32.mrb[0].mxu0
    %v717 = vadd.f32 0.0, %v716
    %v718 = vpop.f32.mrb[0].mxu0
    %719 = vmatprep.mubr.bf16.mxu0 0
    %720 = vmatmul.mubr.bf16.gmra.mrb[0].mxu0 %v639
    %v721 = vpop.f32.mrb[0].mxu0
    %v722 = vadd.f32 0.0, %v721
    %v723 = vpop.f32.mrb[0].mxu0
    %v724 = vpop.f32.mrb[0].mxu0
    %v725 = vadd.f32 0.0, %v724
    %v726 = vpop.f32.mrb[0].mxu0
    %727 = vmatprep.mubr.bf16.mxu0 0
    %728 = vmatmul.mubr.bf16.gmra.mrb[0].mxu0 %v642
    %v729 = vpop.f32.mrb[0].mxu0
    %v730 = vadd.f32 0.0, %v729
    %v731 = vpop.f32.mrb[0].mxu0
    %v732 = vpop.f32.mrb[0].mxu0
    %v733 = vadd.f32 0.0, %v732
    %v734 = vpop.f32.mrb[0].mxu0
    %735 = vmatprep.mubr.bf16.mxu0 0
    %736 = vmatmul.mubr.bf16.gmra.mrb[0].mxu0 %v645
    %v737 = vpop.f32.mrb[0].mxu0
    %v738 = vadd.f32 0.0, %v737
    %v739 = vpop.f32.mrb[0].mxu0
    %v740 = vpop.f32.mrb[0].mxu0
    %v741 = vadd.f32 0.0, %v740
    %v742 = vpop.f32.mrb[0].mxu0
    %743 = vdwg.mxu0
    %v745 = vlaneseq
    %v746 = vshrl.u32 %v745, 7
    %v747 = vsub.s32 0, %v746
    %v748 = vrot.slane %v139, %v747
    %v750 = vmul.f32 %v748, 0.0
    %v751 = vadd.f32 %v750, %v682
    %v752 = vadd.f32 %v750, %v685
    %v753 = vadd.f32 %v750, %v690
    %v754 = vadd.f32 %v750, %v693
    %v755 = vadd.f32 %v750, %v698
    %v756 = vadd.f32 %v750, %v701
    %v757 = vadd.f32 %v750, %v706
    %v758 = vadd.f32 %v750, %v709
    %v759 = vadd.f32 %v750, %v714
    %v760 = vadd.f32 %v750, %v717
    %v761 = vadd.f32 %v750, %v722
    %v762 = vadd.f32 %v750, %v725
    %v763 = vadd.f32 %v750, %v730
    %v764 = vadd.f32 %v750, %v733
    %v765 = vadd.f32 %v750, %v738
    %v766 = vadd.f32 %v750, %v741
    %v768 = vlaneseq
    %v769 = vshrl.u32 %v768, 7
    %v770 = vsub.s32 0, %v769
    %v771 = vrot.slane %v142, %v770
    %v773 = vadd.f32 %v751, %v771
    %v774 = vadd.f32 %v752, %v771
    %v775 = vadd.f32 %v753, %v771
    %v776 = vadd.f32 %v754, %v771
    %v777 = vadd.f32 %v755, %v771
    %v778 = vadd.f32 %v756, %v771
    %v779 = vadd.f32 %v757, %v771
    %v780 = vadd.f32 %v758, %v771
    %v781 = vadd.f32 %v759, %v771
    %v782 = vadd.f32 %v760, %v771
    %v783 = vadd.f32 %v761, %v771
    %v784 = vadd.f32 %v762, %v771
    %v785 = vadd.f32 %v763, %v771
    %v786 = vadd.f32 %v764, %v771
    %v787 = vadd.f32 %v765, %v771
    %v788 = vadd.f32 %v766, %v771
    %v789 = vmax.f32 %v773, 0.0
    %v790 = vmax.f32 %v774, 0.0
    %v791 = vmax.f32 %v775, 0.0
    %v792 = vmax.f32 %v776, 0.0
    %v793 = vmax.f32 %v777, 0.0
    %v794 = vmax.f32 %v778, 0.0
    %v795 = vmax.f32 %v779, 0.0
    %v796 = vmax.f32 %v780, 0.0
    %v797 = vmax.f32 %v781, 0.0
    %v798 = vmax.f32 %v782, 0.0
    %v799 = vmax.f32 %v783, 0.0
    %v800 = vmax.f32 %v784, 0.0
    %v801 = vmax.f32 %v785, 0.0
    %v802 = vmax.f32 %v786, 0.0
    %v803 = vmax.f32 %v787, 0.0
    %v804 = vmax.f32 %v788, 0.0
    %v805 = vmul.f32 %v789, 0.1
    %v806 = vmul.f32 %v790, 0.1
    %v807 = vmul.f32 %v791, 0.1
    %v808 = vmul.f32 %v792, 0.1
    %v809 = vmul.f32 %v793, 0.1
    %v810 = vmul.f32 %v794, 0.1
    %v811 = vmul.f32 %v795, 0.1
    %v812 = vmul.f32 %v796, 0.1
    %v813 = vmul.f32 %v797, 0.1
    %v814 = vmul.f32 %v798, 0.1
    %v815 = vmul.f32 %v799, 0.1
    %v816 = vmul.f32 %v800, 0.1
    %v817 = vmul.f32 %v801, 0.1
    %v818 = vmul.f32 %v802, 0.1
    %v819 = vmul.f32 %v803, 0.1
    %v820 = vmul.f32 %v804, 0.1
    %v821 = vadd.f32 %v805, 0.0
    %v822 = vadd.f32 %v806, 0.0
    %v823 = vadd.f32 %v807, 0.0
    %v824 = vadd.f32 %v808, 0.0
    %v825 = vadd.f32 %v809, 0.0
    %v826 = vadd.f32 %v810, 0.0
    %v827 = vadd.f32 %v811, 0.0
    %v828 = vadd.f32 %v812, 0.0
    %v829 = vadd.f32 %v813, 0.0
    %v830 = vadd.f32 %v814, 0.0
    %v831 = vadd.f32 %v815, 0.0
    %v832 = vadd.f32 %v816, 0.0
    %v833 = vadd.f32 %v817, 0.0
    %v834 = vadd.f32 %v818, 0.0
    %v835 = vadd.f32 %v819, 0.0
    %v836 = vadd.f32 %v820, 0.0
    %v837 = vmul.f32 %v821, 0.1
    %v838 = vmul.f32 %v822, 0.1
    %v839 = vmul.f32 %v823, 0.1
    %v840 = vmul.f32 %v824, 0.1
    %v841 = vmul.f32 %v825, 0.1
    %v842 = vmul.f32 %v826, 0.1
    %v843 = vmul.f32 %v827, 0.1
    %v844 = vmul.f32 %v828, 0.1
    %v845 = vmul.f32 %v829, 0.1
    %v846 = vmul.f32 %v830, 0.1
    %v847 = vmul.f32 %v831, 0.1
    %v848 = vmul.f32 %v832, 0.1
    %v849 = vmul.f32 %v833, 0.1
    %v850 = vmul.f32 %v834, 0.1
    %v851 = vmul.f32 %v835, 0.1
    %v852 = vmul.f32 %v836, 0.1
    %v853 = vadd.f32 %v837, 0.0
    %v854 = vadd.f32 %v838, 0.0
    %v855 = vadd.f32 %v839, 0.0
    %v856 = vadd.f32 %v840, 0.0
    %v857 = vadd.f32 %v841, 0.0
    %v858 = vadd.f32 %v842, 0.0
    %v859 = vadd.f32 %v843, 0.0
    %v860 = vadd.f32 %v844, 0.0
    %v861 = vadd.f32 %v845, 0.0
    %v862 = vadd.f32 %v846, 0.0
    %v863 = vadd.f32 %v847, 0.0
    %v864 = vadd.f32 %v848, 0.0
    %v865 = vadd.f32 %v849, 0.0
    %v866 = vadd.f32 %v850, 0.0
    %v867 = vadd.f32 %v851, 0.0
    %v868 = vadd.f32 %v852, 0.0
    %v870 = vlaneseq
    %v871 = vshrl.u32 %v870, 7
    %v872 = vsub.s32 0, %v871
    %v873 = vrot.slane %v141, %v872
    %v875 = vmul.f32 %v873, 0.0
    %892 = vrot.lane.b32.xlu0 %v682, 96
    %v893 = vpop.permute.xlu0 %892
    %894 = vrot.lane.b32.xlu0 %v685, 96
    %v895 = vpop.permute.xlu0 %894
    %896 = vrot.lane.b32.xlu0 %v690, 96
    %v897 = vpop.permute.xlu0 %896
    %898 = vrot.lane.b32.xlu0 %v693, 96
    %v899 = vpop.permute.xlu0 %898
    %900 = vrot.lane.b32.xlu0 %v698, 96
    %v901 = vpop.permute.xlu0 %900
    %902 = vrot.lane.b32.xlu0 %v701, 96
    %v903 = vpop.permute.xlu0 %902
    %904 = vrot.lane.b32.xlu0 %v706, 96
    %v905 = vpop.permute.xlu0 %904
    %906 = vrot.lane.b32.xlu0 %v709, 96
    %v907 = vpop.permute.xlu0 %906
    %908 = vrot.lane.b32.xlu0 %v714, 96
    %v909 = vpop.permute.xlu0 %908
    %910 = vrot.lane.b32.xlu0 %v717, 96
    %v911 = vpop.permute.xlu0 %910
    %912 = vrot.lane.b32.xlu0 %v722, 96
    %v913 = vpop.permute.xlu0 %912
    %914 = vrot.lane.b32.xlu0 %v725, 96
    %v915 = vpop.permute.xlu0 %914
    %916 = vrot.lane.b32.xlu0 %v730, 96
    %v917 = vpop.permute.xlu0 %916
    %918 = vrot.lane.b32.xlu0 %v733, 96
    %v919 = vpop.permute.xlu0 %918
    %920 = vrot.lane.b32.xlu0 %v738, 96
    %v921 = vpop.permute.xlu0 %920
    %922 = vrot.lane.b32.xlu0 %v741, 96
    %v923 = vpop.permute.xlu0 %922
    %v940 = vadd.f32 %v875, %v893
    %v941 = vadd.f32 %v875, %v895
    %v942 = vadd.f32 %v875, %v897
    %v943 = vadd.f32 %v875, %v899
    %v944 = vadd.f32 %v875, %v901
    %v945 = vadd.f32 %v875, %v903
    %v946 = vadd.f32 %v875, %v905
    %v947 = vadd.f32 %v875, %v907
    %v948 = vadd.f32 %v875, %v909
    %v949 = vadd.f32 %v875, %v911
    %v950 = vadd.f32 %v875, %v913
    %v951 = vadd.f32 %v875, %v915
    %v952 = vadd.f32 %v875, %v917
    %v953 = vadd.f32 %v875, %v919
    %v954 = vadd.f32 %v875, %v921
    %v955 = vadd.f32 %v875, %v923
    %v957 = vlaneseq
    %v958 = vshrl.u32 %v957, 7
    %v959 = vsub.s32 0, %v958
    %v960 = vrot.slane %v144, %v959
    %v962 = vadd.f32 %v940, %v960
    %v963 = vadd.f32 %v941, %v960
    %v964 = vadd.f32 %v942, %v960
    %v965 = vadd.f32 %v943, %v960
    %v966 = vadd.f32 %v944, %v960
    %v967 = vadd.f32 %v945, %v960
    %v968 = vadd.f32 %v946, %v960
    %v969 = vadd.f32 %v947, %v960
    %v970 = vadd.f32 %v948, %v960
    %v971 = vadd.f32 %v949, %v960
    %v972 = vadd.f32 %v950, %v960
    %v973 = vadd.f32 %v951, %v960
    %v974 = vadd.f32 %v952, %v960
    %v975 = vadd.f32 %v953, %v960
    %v976 = vadd.f32 %v954, %v960
    %v977 = vadd.f32 %v955, %v960
    %v978 = vmax.f32 %v962, 0.0
    %v979 = vmax.f32 %v963, 0.0
    %v980 = vmax.f32 %v964, 0.0
    %v981 = vmax.f32 %v965, 0.0
    %v982 = vmax.f32 %v966, 0.0
    %v983 = vmax.f32 %v967, 0.0
    %v984 = vmax.f32 %v968, 0.0
    %v985 = vmax.f32 %v969, 0.0
    %v986 = vmax.f32 %v970, 0.0
    %v987 = vmax.f32 %v971, 0.0
    %v988 = vmax.f32 %v972, 0.0
    %v989 = vmax.f32 %v973, 0.0
    %v990 = vmax.f32 %v974, 0.0
    %v991 = vmax.f32 %v975, 0.0
    %v992 = vmax.f32 %v976, 0.0
    %v993 = vmax.f32 %v977, 0.0
    %v994 = vmul.f32 %v978, 0.1
    %v995 = vmul.f32 %v979, 0.1
    %v996 = vmul.f32 %v980, 0.1
    %v997 = vmul.f32 %v981, 0.1
    %v998 = vmul.f32 %v982, 0.1
    %v999 = vmul.f32 %v983, 0.1
    %v1000 = vmul.f32 %v984, 0.1
    %v1001 = vmul.f32 %v985, 0.1
    %v1002 = vmul.f32 %v986, 0.1
    %v1003 = vmul.f32 %v987, 0.1
    %v1004 = vmul.f32 %v988, 0.1
    %v1005 = vmul.f32 %v989, 0.1
    %v1006 = vmul.f32 %v990, 0.1
    %v1007 = vmul.f32 %v991, 0.1
    %v1008 = vmul.f32 %v992, 0.1
    %v1009 = vmul.f32 %v993, 0.1
    %v1010 = vadd.f32 %v994, 0.0
    %v1011 = vadd.f32 %v995, 0.0
    %v1012 = vadd.f32 %v996, 0.0
    %v1013 = vadd.f32 %v997, 0.0
    %v1014 = vadd.f32 %v998, 0.0
    %v1015 = vadd.f32 %v999, 0.0
    %v1016 = vadd.f32 %v1000, 0.0
    %v1017 = vadd.f32 %v1001, 0.0
    %v1018 = vadd.f32 %v1002, 0.0
    %v1019 = vadd.f32 %v1003, 0.0
    %v1020 = vadd.f32 %v1004, 0.0
    %v1021 = vadd.f32 %v1005, 0.0
    %v1022 = vadd.f32 %v1006, 0.0
    %v1023 = vadd.f32 %v1007, 0.0
    %v1024 = vadd.f32 %v1008, 0.0
    %v1025 = vadd.f32 %v1009, 0.0
    %v1026 = vmul.f32 %v1010, 0.1
    %v1027 = vmul.f32 %v1011, 0.1
    %v1028 = vmul.f32 %v1012, 0.1
    %v1029 = vmul.f32 %v1013, 0.1
    %v1030 = vmul.f32 %v1014, 0.1
    %v1031 = vmul.f32 %v1015, 0.1
    %v1032 = vmul.f32 %v1016, 0.1
    %v1033 = vmul.f32 %v1017, 0.1
    %v1034 = vmul.f32 %v1018, 0.1
    %v1035 = vmul.f32 %v1019, 0.1
    %v1036 = vmul.f32 %v1020, 0.1
    %v1037 = vmul.f32 %v1021, 0.1
    %v1038 = vmul.f32 %v1022, 0.1
    %v1039 = vmul.f32 %v1023, 0.1
    %v1040 = vmul.f32 %v1024, 0.1
    %v1041 = vmul.f32 %v1025, 0.1
    %v1042 = vadd.f32 %v1026, 0.0
    %v1043 = vadd.f32 %v1027, 0.0
    %v1044 = vadd.f32 %v1028, 0.0
    %v1045 = vadd.f32 %v1029, 0.0
    %v1046 = vadd.f32 %v1030, 0.0
    %v1047 = vadd.f32 %v1031, 0.0
    %v1048 = vadd.f32 %v1032, 0.0
    %v1049 = vadd.f32 %v1033, 0.0
    %v1050 = vadd.f32 %v1034, 0.0
    %v1051 = vadd.f32 %v1035, 0.0
    %v1052 = vadd.f32 %v1036, 0.0
    %v1053 = vadd.f32 %v1037, 0.0
    %v1054 = vadd.f32 %v1038, 0.0
    %v1055 = vadd.f32 %v1039, 0.0
    %v1056 = vadd.f32 %v1040, 0.0
    %v1057 = vadd.f32 %v1041, 0.0
    %v1059 = vlaneseq
    %v1060 = vshrl.u32 %v1059, 7
    %v1061 = vsub.s32 0, %v1060
    %v1062 = vrot.slane %v140, %v1061
    %v1064 = vmul.f32 %v1062, 0.0
    %v1065 = vpack.c.bf16 %v854, %v853
    %v1066 = vpack.c.bf16 %v856, %v855
    %v1067 = vpack.c.bf16 %v858, %v857
    %v1068 = vpack.c.bf16 %v860, %v859
    %v1069 = vpack.c.bf16 %v862, %v861
    %v1070 = vpack.c.bf16 %v864, %v863
    %v1071 = vpack.c.bf16 %v866, %v865
    %v1072 = vpack.c.bf16 %v868, %v867
    %v1077 = vunpack.c.l.b16 %v153
    %v1078 = vunpack.c.l.b16 %v154
    %v1079 = vunpack.c.l.b16 %v155
    %v1080 = vunpack.c.l.b16 %v156
    %v1081 = vpack.c.b16 %v1078, %v1077
    %v1082 = vpack.c.b16 %v1080, %v1079
    %v1086 = vsel %vm219, %v1065, 0
    %v1089 = vsel %vm219, %v1066, 0
    %v1092 = vsel %vm219, %v1067, 0
    %v1095 = vsel %vm219, %v1068, 0
    %v1098 = vsel %vm219, %v1069, 0
    %v1101 = vsel %vm219, %v1070, 0
    %v1104 = vsel %vm219, %v1071, 0
    %v1107 = vsel %vm219, %v1072, 0
    %1109 = vmatprep.subr.bf16.mxu0 0
    %1110 = vmatpush1.bf16.msra.mxu0 %v1081
    %1111 = vmatprep.subr.bf16.mxu0 0
    %1112 = vmatpush1.bf16.msra.mxu0 %v1082
    %1113 = vmatprep.subr.bf16.mxu0 0
    %1114 = vmatpush1.bf16.msra.mxu0 0
    %1115 = vmatprep.subr.bf16.mxu0 0
    %1116 = vmatpush1.bf16.msra.mxu0 0
    %1117 = vmatprep.subr.bf16.mxu0 0
    %1118 = vmatpush1.bf16.msra.mxu0 0
    %1119 = vmatprep.subr.bf16.mxu0 0
    %1120 = vmatpush1.bf16.msra.mxu0 0
    %1121 = vmatprep.subr.bf16.mxu0 0
    %1122 = vmatpush1.bf16.msra.mxu0 0
    %1123 = vmatprep.subr.bf16.mxu0 0
    %1124 = vmatpush1.bf16.msra.mxu0 0
    %1125 = vmatprep.subr.bf16.mxu0 0
    %1126 = vmatpush1.bf16.msra.mxu0 0
    %1127 = vmatprep.subr.bf16.mxu0 0
    %1128 = vmatpush1.bf16.msra.mxu0 0
    %1129 = vmatprep.subr.bf16.mxu0 0
    %1130 = vmatpush1.bf16.msra.mxu0 0
    %1131 = vmatprep.subr.bf16.mxu0 0
    %1132 = vmatpush1.bf16.msra.mxu0 0
    %1133 = vmatprep.subr.bf16.mxu0 0
    %1134 = vmatpush1.bf16.msra.mxu0 0
    %1135 = vmatprep.subr.bf16.mxu0 0
    %1136 = vmatpush1.bf16.msra.mxu0 0
    %1137 = vmatprep.subr.bf16.mxu0 0
    %1138 = vmatpush1.bf16.msra.mxu0 0
    %1139 = vmatprep.subr.bf16.mxu0 0
    %1140 = vmatpush1.bf16.msra.mxu0 0
    %1141 = vmatprep.mubr.bf16.mxu0 0
    %1142 = vmatmul.mubr.bf16.gmra.mrb[0].mxu0 %v1086
    %v1143 = vpop.f32.mrb[0].mxu0
    %v1144 = vadd.f32 0.0, %v1143
    %v1145 = vpop.f32.mrb[0].mxu0
    %v1146 = vpop.f32.mrb[0].mxu0
    %v1147 = vadd.f32 0.0, %v1146
    %v1148 = vpop.f32.mrb[0].mxu0
    %1149 = vmatprep.mubr.bf16.mxu0 0
    %1150 = vmatmul.mubr.bf16.gmra.mrb[0].mxu0 %v1089
    %v1151 = vpop.f32.mrb[0].mxu0
    %v1152 = vadd.f32 0.0, %v1151
    %v1153 = vpop.f32.mrb[0].mxu0
    %v1154 = vpop.f32.mrb[0].mxu0
    %v1155 = vadd.f32 0.0, %v1154
    %v1156 = vpop.f32.mrb[0].mxu0
    %1157 = vmatprep.mubr.bf16.mxu0 0
    %1158 = vmatmul.mubr.bf16.gmra.mrb[0].mxu0 %v1092
    %v1159 = vpop.f32.mrb[0].mxu0
    %v1160 = vadd.f32 0.0, %v1159
    %v1161 = vpop.f32.mrb[0].mxu0
    %v1162 = vpop.f32.mrb[0].mxu0
    %v1163 = vadd.f32 0.0, %v1162
    %v1164 = vpop.f32.mrb[0].mxu0
    %1165 = vmatprep.mubr.bf16.mxu0 0
    %1166 = vmatmul.mubr.bf16.gmra.mrb[0].mxu0 %v1095
    %v1167 = vpop.f32.mrb[0].mxu0
    %v1168 = vadd.f32 0.0, %v1167
    %v1169 = vpop.f32.mrb[0].mxu0
    %v1170 = vpop.f32.mrb[0].mxu0
    %v1171 = vadd.f32 0.0, %v1170
    %v1172 = vpop.f32.mrb[0].mxu0
    %1173 = vmatprep.mubr.bf16.mxu0 0
    %1174 = vmatmul.mubr.bf16.gmra.mrb[0].mxu0 %v1098
    %v1175 = vpop.f32.mrb[0].mxu0
    %v1176 = vadd.f32 0.0, %v1175
    %v1177 = vpop.f32.mrb[0].mxu0
    %v1178 = vpop.f32.mrb[0].mxu0
    %v1179 = vadd.f32 0.0, %v1178
    %v1180 = vpop.f32.mrb[0].mxu0
    %1181 = vmatprep.mubr.bf16.mxu0 0
    %1182 = vmatmul.mubr.bf16.gmra.mrb[0].mxu0 %v1101
    %v1183 = vpop.f32.mrb[0].mxu0
    %v1184 = vadd.f32 0.0, %v1183
    %v1185 = vpop.f32.mrb[0].mxu0
    %v1186 = vpop.f32.mrb[0].mxu0
    %v1187 = vadd.f32 0.0, %v1186
    %v1188 = vpop.f32.mrb[0].mxu0
    %1189 = vmatprep.mubr.bf16.mxu0 0
    %1190 = vmatmul.mubr.bf16.gmra.mrb[0].mxu0 %v1104
    %v1191 = vpop.f32.mrb[0].mxu0
    %v1192 = vadd.f32 0.0, %v1191
    %v1193 = vpop.f32.mrb[0].mxu0
    %v1194 = vpop.f32.mrb[0].mxu0
    %v1195 = vadd.f32 0.0, %v1194
    %v1196 = vpop.f32.mrb[0].mxu0
    %1197 = vmatprep.mubr.bf16.mxu0 0
    %1198 = vmatmul.mubr.bf16.gmra.mrb[0].mxu0 %v1107
    %v1199 = vpop.f32.mrb[0].mxu0
    %v1200 = vadd.f32 0.0, %v1199
    %v1201 = vpop.f32.mrb[0].mxu0
    %v1202 = vpop.f32.mrb[0].mxu0
    %v1203 = vadd.f32 0.0, %v1202
    %v1204 = vpop.f32.mrb[0].mxu0
    %1205 = vdwg.mxu0
    %v1206 = vadd.f32 %v1064, %v1144
    %v1207 = vadd.f32 %v1064, %v1147
    %v1208 = vadd.f32 %v1064, %v1152
    %v1209 = vadd.f32 %v1064, %v1155
    %v1210 = vadd.f32 %v1064, %v1160
    %v1211 = vadd.f32 %v1064, %v1163
    %v1212 = vadd.f32 %v1064, %v1168
    %v1213 = vadd.f32 %v1064, %v1171
    %v1214 = vadd.f32 %v1064, %v1176
    %v1215 = vadd.f32 %v1064, %v1179
    %v1216 = vadd.f32 %v1064, %v1184
    %v1217 = vadd.f32 %v1064, %v1187
    %v1218 = vadd.f32 %v1064, %v1192
    %v1219 = vadd.f32 %v1064, %v1195
    %v1220 = vadd.f32 %v1064, %v1200
    %v1221 = vadd.f32 %v1064, %v1203
    %v1223 = vlaneseq
    %v1224 = vshrl.u32 %v1223, 7
    %v1225 = vsub.s32 0, %v1224
    %v1226 = vrot.slane %v143, %v1225
    %v1228 = vadd.f32 %v1206, %v1226
    %v1229 = vadd.f32 %v1207, %v1226
    %v1230 = vadd.f32 %v1208, %v1226
    %v1231 = vadd.f32 %v1209, %v1226
    %v1232 = vadd.f32 %v1210, %v1226
    %v1233 = vadd.f32 %v1211, %v1226
    %v1234 = vadd.f32 %v1212, %v1226
    %v1235 = vadd.f32 %v1213, %v1226
    %v1236 = vadd.f32 %v1214, %v1226
    %v1237 = vadd.f32 %v1215, %v1226
    %v1238 = vadd.f32 %v1216, %v1226
    %v1239 = vadd.f32 %v1217, %v1226
    %v1240 = vadd.f32 %v1218, %v1226
    %v1241 = vadd.f32 %v1219, %v1226
    %v1242 = vadd.f32 %v1220, %v1226
    %v1243 = vadd.f32 %v1221, %v1226
    %v1244 = vmax.f32 %v1228, 0.0
    %v1245 = vmax.f32 %v1229, 0.0
    %v1246 = vmax.f32 %v1230, 0.0
    %v1247 = vmax.f32 %v1231, 0.0
    %v1248 = vmax.f32 %v1232, 0.0
    %v1249 = vmax.f32 %v1233, 0.0
    %v1250 = vmax.f32 %v1234, 0.0
    %v1251 = vmax.f32 %v1235, 0.0
    %v1252 = vmax.f32 %v1236, 0.0
    %v1253 = vmax.f32 %v1237, 0.0
    %v1254 = vmax.f32 %v1238, 0.0
    %v1255 = vmax.f32 %v1239, 0.0
    %v1256 = vmax.f32 %v1240, 0.0
    %v1257 = vmax.f32 %v1241, 0.0
    %v1258 = vmax.f32 %v1242, 0.0
    %v1259 = vmax.f32 %v1243, 0.0
    %v1260 = vmul.f32 %v1244, 0.1
    %v1261 = vmul.f32 %v1245, 0.1
    %v1262 = vmul.f32 %v1246, 0.1
    %v1263 = vmul.f32 %v1247, 0.1
    %v1264 = vmul.f32 %v1248, 0.1
    %v1265 = vmul.f32 %v1249, 0.1
    %v1266 = vmul.f32 %v1250, 0.1
    %v1267 = vmul.f32 %v1251, 0.1
    %v1268 = vmul.f32 %v1252, 0.1
    %v1269 = vmul.f32 %v1253, 0.1
    %v1270 = vmul.f32 %v1254, 0.1
    %v1271 = vmul.f32 %v1255, 0.1
    %v1272 = vmul.f32 %v1256, 0.1
    %v1273 = vmul.f32 %v1257, 0.1
    %v1274 = vmul.f32 %v1258, 0.1
    %v1275 = vmul.f32 %v1259, 0.1
    %v1276 = vadd.f32 %v1260, 0.0
    %v1277 = vadd.f32 %v1261, 0.0
    %v1278 = vadd.f32 %v1262, 0.0
    %v1279 = vadd.f32 %v1263, 0.0
    %v1280 = vadd.f32 %v1264, 0.0
    %v1281 = vadd.f32 %v1265, 0.0
    %v1282 = vadd.f32 %v1266, 0.0
    %v1283 = vadd.f32 %v1267, 0.0
    %v1284 = vadd.f32 %v1268, 0.0
    %v1285 = vadd.f32 %v1269, 0.0
    %v1286 = vadd.f32 %v1270, 0.0
    %v1287 = vadd.f32 %v1271, 0.0
    %v1288 = vadd.f32 %v1272, 0.0
    %v1289 = vadd.f32 %v1273, 0.0
    %v1290 = vadd.f32 %v1274, 0.0
    %v1291 = vadd.f32 %v1275, 0.0
    %v1292 = vmul.f32 %v1276, 0.1
    %v1293 = vmul.f32 %v1277, 0.1
    %v1294 = vmul.f32 %v1278, 0.1
    %v1295 = vmul.f32 %v1279, 0.1
    %v1296 = vmul.f32 %v1280, 0.1
    %v1297 = vmul.f32 %v1281, 0.1
    %v1298 = vmul.f32 %v1282, 0.1
    %v1299 = vmul.f32 %v1283, 0.1
    %v1300 = vmul.f32 %v1284, 0.1
    %v1301 = vmul.f32 %v1285, 0.1
    %v1302 = vmul.f32 %v1286, 0.1
    %v1303 = vmul.f32 %v1287, 0.1
    %v1304 = vmul.f32 %v1288, 0.1
    %v1305 = vmul.f32 %v1289, 0.1
    %v1306 = vmul.f32 %v1290, 0.1
    %v1307 = vmul.f32 %v1291, 0.1
    %v1308 = vadd.f32 %v1292, 0.0
    %v1309 = vadd.f32 %v1293, 0.0
    %v1310 = vadd.f32 %v1294, 0.0
    %v1311 = vadd.f32 %v1295, 0.0
    %v1312 = vadd.f32 %v1296, 0.0
    %v1313 = vadd.f32 %v1297, 0.0
    %v1314 = vadd.f32 %v1298, 0.0
    %v1315 = vadd.f32 %v1299, 0.0
    %v1316 = vadd.f32 %v1300, 0.0
    %v1317 = vadd.f32 %v1301, 0.0
    %v1318 = vadd.f32 %v1302, 0.0
    %v1319 = vadd.f32 %v1303, 0.0
    %v1320 = vadd.f32 %v1304, 0.0
    %v1321 = vadd.f32 %v1305, 0.0
    %v1322 = vadd.f32 %v1306, 0.0
    %v1323 = vadd.f32 %v1307, 0.0
    %v1324 = vpack.c.bf16 %v559, %v558
    %v1325 = vpack.c.bf16 %v561, %v560
    %v1326 = vpack.c.bf16 %v563, %v562
    %v1327 = vpack.c.bf16 %v565, %v564
    %v1328 = vpack.c.bf16 %v567, %v566
    %v1329 = vpack.c.bf16 %v569, %v568
    %v1330 = vpack.c.bf16 %v571, %v570
    %v1331 = vpack.c.bf16 %v573, %v572
    %1332 = vmatprep.subr.bf16.mxu0 0
    %1333 = vmatpush1.bf16.msra.mxu0 %v1324
    %1334 = vmatprep.subr.bf16.mxu0 0
    %1335 = vmatpush1.bf16.msra.mxu0 %v1325
    %1336 = vmatprep.subr.bf16.mxu0 0
    %1337 = vmatpush1.bf16.msra.mxu0 %v1326
    %1338 = vmatprep.subr.bf16.mxu0 0
    %1339 = vmatpush1.bf16.msra.mxu0 %v1327
    %1340 = vmatprep.subr.bf16.mxu0 0
    %1341 = vmatpush1.bf16.msra.mxu0 %v1328
    %1342 = vmatprep.subr.bf16.mxu0 0
    %1343 = vmatpush1.bf16.msra.mxu0 %v1329
    %1344 = vmatprep.subr.bf16.mxu0 0
    %1345 = vmatpush1.bf16.msra.mxu0 %v1330
    %1346 = vmatprep.subr.bf16.mxu0 0
    %1347 = vmatpush1.bf16.msra.mxu0 %v1331
    %1348 = vmatprep.subr.bf16.mxu0 0
    %1349 = vmatpush1.bf16.msra.mxu0 0
    %1350 = vmatprep.subr.bf16.mxu0 0
    %1351 = vmatpush1.bf16.msra.mxu0 0
    %1352 = vmatprep.subr.bf16.mxu0 0
    %1353 = vmatpush1.bf16.msra.mxu0 0
    %1354 = vmatprep.subr.bf16.mxu0 0
    %1355 = vmatpush1.bf16.msra.mxu0 0
    %1356 = vmatprep.subr.bf16.mxu0 0
    %1357 = vmatpush1.bf16.msra.mxu0 0
    %1358 = vmatprep.subr.bf16.mxu0 0
    %1359 = vmatpush1.bf16.msra.mxu0 0
    %1360 = vmatprep.subr.bf16.mxu0 0
    %1361 = vmatpush1.bf16.msra.mxu0 0
    %1362 = vmatprep.subr.bf16.mxu0 0
    %1363 = vmatpush1.bf16.msra.mxu0 0
    %1364 = vmatprep.mubr.bf16.mxu0 0
    %1365 = vmatmul.mubr.bf16.gmra.mrb[0].mxu0 %v397
    %v1366 = vpop.f32.mrb[0].mxu0
    %v1367 = vadd.f32 0.0, %v1366
    %v1368 = vpop.f32.mrb[0].mxu0
    %v1369 = vpop.f32.mrb[0].mxu0
    %v1370 = vadd.f32 0.0, %v1369
    %v1371 = vpop.f32.mrb[0].mxu0
    %1372 = vmatprep.mubr.bf16.mxu0 0
    %1373 = vmatmul.mubr.bf16.gmra.mrb[0].mxu0 %v398
    %v1374 = vpop.f32.mrb[0].mxu0
    %v1375 = vadd.f32 0.0, %v1374
    %v1376 = vpop.f32.mrb[0].mxu0
    %v1377 = vpop.f32.mrb[0].mxu0
    %v1378 = vadd.f32 0.0, %v1377
    %v1379 = vpop.f32.mrb[0].mxu0
    %1380 = vmatprep.mubr.bf16.mxu0 0
    %1381 = vmatmul.mubr.bf16.gmra.mrb[0].mxu0 %v399
    %v1382 = vpop.f32.mrb[0].mxu0
    %v1383 = vadd.f32 0.0, %v1382
    %v1384 = vpop.f32.mrb[0].mxu0
    %v1385 = vpop.f32.mrb[0].mxu0
    %v1386 = vadd.f32 0.0, %v1385
    %v1387 = vpop.f32.mrb[0].mxu0
    %1388 = vmatprep.mubr.bf16.mxu0 0
    %1389 = vmatmul.mubr.bf16.gmra.mrb[0].mxu0 %v400
    %v1390 = vpop.f32.mrb[0].mxu0
    %v1391 = vadd.f32 0.0, %v1390
    %v1392 = vpop.f32.mrb[0].mxu0
    %v1393 = vpop.f32.mrb[0].mxu0
    %v1394 = vadd.f32 0.0, %v1393
    %v1395 = vpop.f32.mrb[0].mxu0
    %1396 = vmatprep.mubr.bf16.mxu0 0
    %1397 = vmatmul.mubr.bf16.gmra.mrb[0].mxu0 %v401
    %v1398 = vpop.f32.mrb[0].mxu0
    %v1399 = vadd.f32 0.0, %v1398
    %v1400 = vpop.f32.mrb[0].mxu0
    %v1401 = vpop.f32.mrb[0].mxu0
    %v1402 = vadd.f32 0.0, %v1401
    %v1403 = vpop.f32.mrb[0].mxu0
    %1404 = vmatprep.mubr.bf16.mxu0 0
    %1405 = vmatmul.mubr.bf16.gmra.mrb[0].mxu0 %v402
    %v1406 = vpop.f32.mrb[0].mxu0
    %v1407 = vadd.f32 0.0, %v1406
    %v1408 = vpop.f32.mrb[0].mxu0
    %v1409 = vpop.f32.mrb[0].mxu0
    %v1410 = vadd.f32 0.0, %v1409
    %v1411 = vpop.f32.mrb[0].mxu0
    %1412 = vmatprep.mubr.bf16.mxu0 0
    %1413 = vmatmul.mubr.bf16.gmra.mrb[0].mxu0 %v403
    %v1414 = vpop.f32.mrb[0].mxu0
    %v1415 = vadd.f32 0.0, %v1414
    %v1416 = vpop.f32.mrb[0].mxu0
    %v1417 = vpop.f32.mrb[0].mxu0
    %v1418 = vadd.f32 0.0, %v1417
    %v1419 = vpop.f32.mrb[0].mxu0
    %1420 = vmatprep.mubr.bf16.mxu0 0
    %1421 = vmatmul.mubr.bf16.gmra.mrb[0].mxu0 %v404
    %v1422 = vpop.f32.mrb[0].mxu0
    %v1423 = vadd.f32 0.0, %v1422
    %v1424 = vpop.f32.mrb[0].mxu0
    %v1425 = vpop.f32.mrb[0].mxu0
    %v1426 = vadd.f32 0.0, %v1425
    %v1427 = vpop.f32.mrb[0].mxu0
    %1428 = vdwg.mxu0
    %v1429 = vmul.f32 %v1367, 0.1
    %v1430 = vmul.f32 %v1370, 0.1
    %v1431 = vmul.f32 %v1375, 0.1
    %v1432 = vmul.f32 %v1378, 0.1
    %v1433 = vmul.f32 %v1383, 0.1
    %v1434 = vmul.f32 %v1386, 0.1
    %v1435 = vmul.f32 %v1391, 0.1
    %v1436 = vmul.f32 %v1394, 0.1
    %v1437 = vmul.f32 %v1399, 0.1
    %v1438 = vmul.f32 %v1402, 0.1
    %v1439 = vmul.f32 %v1407, 0.1
    %v1440 = vmul.f32 %v1410, 0.1
    %v1441 = vmul.f32 %v1415, 0.1
    %v1442 = vmul.f32 %v1418, 0.1
    %v1443 = vmul.f32 %v1423, 0.1
    %v1444 = vmul.f32 %v1426, 0.1
    %v1445 = vsub.f32 %v526, %v1429
    %v1446 = vsub.f32 %v527, %v1430
    %v1447 = vsub.f32 %v528, %v1431
    %v1448 = vsub.f32 %v529, %v1432
    %v1449 = vsub.f32 %v530, %v1433
    %v1450 = vsub.f32 %v531, %v1434
    %v1451 = vsub.f32 %v532, %v1435
    %v1452 = vsub.f32 %v533, %v1436
    %v1453 = vsub.f32 %v534, %v1437
    %v1454 = vsub.f32 %v535, %v1438
    %v1455 = vsub.f32 %v536, %v1439
    %v1456 = vsub.f32 %v537, %v1440
    %v1457 = vsub.f32 %v538, %v1441
    %v1458 = vsub.f32 %v539, %v1442
    %v1459 = vsub.f32 %v540, %v1443
    %v1460 = vsub.f32 %v541, %v1444
    %v1461 = vmul.f32 %v1445, 0.1
    %v1462 = vmul.f32 %v1446, 0.1
    %v1463 = vmul.f32 %v1447, 0.1
    %v1464 = vmul.f32 %v1448, 0.1
    %v1465 = vmul.f32 %v1449, 0.1
    %v1466 = vmul.f32 %v1450, 0.1
    %v1467 = vmul.f32 %v1451, 0.1
    %v1468 = vmul.f32 %v1452, 0.1
    %v1469 = vmul.f32 %v1453, 0.1
    %v1470 = vmul.f32 %v1454, 0.1
    %v1471 = vmul.f32 %v1455, 0.1
    %v1472 = vmul.f32 %v1456, 0.1
    %v1473 = vmul.f32 %v1457, 0.1
    %v1474 = vmul.f32 %v1458, 0.1
    %v1475 = vmul.f32 %v1459, 0.1
    %v1476 = vmul.f32 %v1460, 0.1
    %v1477 = vadd.f32 %v558, %v1461
    %v1478 = vadd.f32 %v559, %v1462
    %v1479 = vadd.f32 %v560, %v1463
    %v1480 = vadd.f32 %v561, %v1464
    %v1481 = vadd.f32 %v562, %v1465
    %v1482 = vadd.f32 %v563, %v1466
    %v1483 = vadd.f32 %v564, %v1467
    %v1484 = vadd.f32 %v565, %v1468
    %v1485 = vadd.f32 %v566, %v1469
    %v1486 = vadd.f32 %v567, %v1470
    %v1487 = vadd.f32 %v568, %v1471
    %v1488 = vadd.f32 %v569, %v1472
    %v1489 = vadd.f32 %v570, %v1473
    %v1490 = vadd.f32 %v571, %v1474
    %v1491 = vadd.f32 %v572, %v1475
    %v1492 = vadd.f32 %v573, %v1476
    %1509 = vrot.lane.b32.xlu0 %v1308, 32
    %v1510 = vpop.permute.xlu0 %1509
    %1511 = vrot.lane.b32.xlu0 %v1309, 32
    %v1512 = vpop.permute.xlu0 %1511
    %1513 = vrot.lane.b32.xlu0 %v1310, 32
    %v1514 = vpop.permute.xlu0 %1513
    %1515 = vrot.lane.b32.xlu0 %v1311, 32
    %v1516 = vpop.permute.xlu0 %1515
    %1517 = vrot.lane.b32.xlu0 %v1312, 32
    %v1518 = vpop.permute.xlu0 %1517
    %1519 = vrot.lane.b32.xlu0 %v1313, 32
    %v1520 = vpop.permute.xlu0 %1519
    %1521 = vrot.lane.b32.xlu0 %v1314, 32
    %v1522 = vpop.permute.xlu0 %1521
    %1523 = vrot.lane.b32.xlu0 %v1315, 32
    %v1524 = vpop.permute.xlu0 %1523
    %1525 = vrot.lane.b32.xlu0 %v1316, 32
    %v1526 = vpop.permute.xlu0 %1525
    %1527 = vrot.lane.b32.xlu0 %v1317, 32
    %v1528 = vpop.permute.xlu0 %1527
    %1529 = vrot.lane.b32.xlu0 %v1318, 32
    %v1530 = vpop.permute.xlu0 %1529
    %1531 = vrot.lane.b32.xlu0 %v1319, 32
    %v1532 = vpop.permute.xlu0 %1531
    %1533 = vrot.lane.b32.xlu0 %v1320, 32
    %v1534 = vpop.permute.xlu0 %1533
    %1535 = vrot.lane.b32.xlu0 %v1321, 32
    %v1536 = vpop.permute.xlu0 %1535
    %1537 = vrot.lane.b32.xlu0 %v1322, 32
    %v1538 = vpop.permute.xlu0 %1537
    %1539 = vrot.lane.b32.xlu0 %v1323, 32
    %v1540 = vpop.permute.xlu0 %1539
    %v1557 = vsel %vm219, %v1477, %v1510
    %v1558 = vsel %vm219, %v1478, %v1512
    %v1559 = vsel %vm219, %v1479, %v1514
    %v1560 = vsel %vm219, %v1480, %v1516
    %v1561 = vsel %vm219, %v1481, %v1518
    %v1562 = vsel %vm219, %v1482, %v1520
    %v1563 = vsel %vm219, %v1483, %v1522
    %v1564 = vsel %vm219, %v1484, %v1524
    %v1565 = vsel %vm219, %v1485, %v1526
    %v1566 = vsel %vm219, %v1486, %v1528
    %v1567 = vsel %vm219, %v1487, %v1530
    %v1568 = vsel %vm219, %v1488, %v1532
    %v1569 = vsel %vm219, %v1489, %v1534
    %v1570 = vsel %vm219, %v1490, %v1536
    %v1571 = vsel %vm219, %v1491, %v1538
    %v1572 = vsel %vm219, %v1492, %v1540
    %v1573 = vpack.c.bf16 %v1558, %v1557
    %v1574 = vpack.c.bf16 %v1560, %v1559
    %v1575 = vpack.c.bf16 %v1562, %v1561
    %v1576 = vpack.c.bf16 %v1564, %v1563
    %v1577 = vpack.c.bf16 %v1566, %v1565
    %v1578 = vpack.c.bf16 %v1568, %v1567
    %v1579 = vpack.c.bf16 %v1570, %v1569
    %v1580 = vpack.c.bf16 %v1572, %v1571
    %v1582 = vsel %vm622, %v1573, 0
    %v1585 = vsel %vm622, %v1574, 0
    %v1588 = vsel %vm622, %v1575, 0
    %v1591 = vsel %vm622, %v1576, 0
    %v1594 = vsel %vm622, %v1577, 0
    %v1597 = vsel %vm622, %v1578, 0
    %v1600 = vsel %vm622, %v1579, 0
    %v1603 = vsel %vm622, %v1580, 0
    %1605 = vmatprep.subr.bf16.mxu0 0
    %1606 = vmatpush1.bf16.msra.mxu0 %v614
    %1607 = vmatprep.subr.bf16.mxu0 0
    %1608 = vmatpush1.bf16.msra.mxu0 %v615
    %1609 = vmatprep.subr.bf16.mxu0 0
    %1610 = vmatpush1.bf16.msra.mxu0 %v616
    %1611 = vmatprep.subr.bf16.mxu0 0
    %1612 = vmatpush1.bf16.msra.mxu0 %v617
    %1613 = vmatprep.subr.bf16.mxu0 0
    %1614 = vmatpush1.bf16.msra.mxu0 0
    %1615 = vmatprep.subr.bf16.mxu0 0
    %1616 = vmatpush1.bf16.msra.mxu0 0
    %1617 = vmatprep.subr.bf16.mxu0 0
    %1618 = vmatpush1.bf16.msra.mxu0 0
    %1619 = vmatprep.subr.bf16.mxu0 0
    %1620 = vmatpush1.bf16.msra.mxu0 0
    %1621 = vmatprep.subr.bf16.mxu0 0
    %1622 = vmatpush1.bf16.msra.mxu0 0
    %1623 = vmatprep.subr.bf16.mxu0 0
    %1624 = vmatpush1.bf16.msra.mxu0 0
    %1625 = vmatprep.subr.bf16.mxu0 0
    %1626 = vmatpush1.bf16.msra.mxu0 0
    %1627 = vmatprep.subr.bf16.mxu0 0
    %1628 = vmatpush1.bf16.msra.mxu0 0
    %1629 = vmatprep.subr.bf16.mxu0 0
    %1630 = vmatpush1.bf16.msra.mxu0 0
    %1631 = vmatprep.subr.bf16.mxu0 0
    %1632 = vmatpush1.bf16.msra.mxu0 0
    %1633 = vmatprep.subr.bf16.mxu0 0
    %1634 = vmatpush1.bf16.msra.mxu0 0
    %1635 = vmatprep.subr.bf16.mxu0 0
    %1636 = vmatpush1.bf16.msra.mxu0 0
    %1637 = vmatprep.mubr.bf16.mxu0 0
    %1638 = vmatmul.mubr.bf16.gmra.mrb[0].mxu0 %v1582
    %v1639 = vpop.f32.mrb[0].mxu0
    %v1640 = vadd.f32 0.0, %v1639
    %v1641 = vpop.f32.mrb[0].mxu0
    %v1642 = vpop.f32.mrb[0].mxu0
    %v1643 = vadd.f32 0.0, %v1642
    %v1644 = vpop.f32.mrb[0].mxu0
    %1645 = vmatprep.mubr.bf16.mxu0 0
    %1646 = vmatmul.mubr.bf16.gmra.mrb[0].mxu0 %v1585
    %v1647 = vpop.f32.mrb[0].mxu0
    %v1648 = vadd.f32 0.0, %v1647
    %v1649 = vpop.f32.mrb[0].mxu0
    %v1650 = vpop.f32.mrb[0].mxu0
    %v1651 = vadd.f32 0.0, %v1650
    %v1652 = vpop.f32.mrb[0].mxu0
    %1653 = vmatprep.mubr.bf16.mxu0 0
    %1654 = vmatmul.mubr.bf16.gmra.mrb[0].mxu0 %v1588
    %v1655 = vpop.f32.mrb[0].mxu0
    %v1656 = vadd.f32 0.0, %v1655
    %v1657 = vpop.f32.mrb[0].mxu0
    %v1658 = vpop.f32.mrb[0].mxu0
    %v1659 = vadd.f32 0.0, %v1658
    %v1660 = vpop.f32.mrb[0].mxu0
    %1661 = vmatprep.mubr.bf16.mxu0 0
    %1662 = vmatmul.mubr.bf16.gmra.mrb[0].mxu0 %v1591
    %v1663 = vpop.f32.mrb[0].mxu0
    %v1664 = vadd.f32 0.0, %v1663
    %v1665 = vpop.f32.mrb[0].mxu0
    %v1666 = vpop.f32.mrb[0].mxu0
    %v1667 = vadd.f32 0.0, %v1666
    %v1668 = vpop.f32.mrb[0].mxu0
    %1669 = vmatprep.mubr.bf16.mxu0 0
    %1670 = vmatmul.mubr.bf16.gmra.mrb[0].mxu0 %v1594
    %v1671 = vpop.f32.mrb[0].mxu0
    %v1672 = vadd.f32 0.0, %v1671
    %v1673 = vpop.f32.mrb[0].mxu0
    %v1674 = vpop.f32.mrb[0].mxu0
    %v1675 = vadd.f32 0.0, %v1674
    %v1676 = vpop.f32.mrb[0].mxu0
    %1677 = vmatprep.mubr.bf16.mxu0 0
    %1678 = vmatmul.mubr.bf16.gmra.mrb[0].mxu0 %v1597
    %v1679 = vpop.f32.mrb[0].mxu0
    %v1680 = vadd.f32 0.0, %v1679
    %v1681 = vpop.f32.mrb[0].mxu0
    %v1682 = vpop.f32.mrb[0].mxu0
    %v1683 = vadd.f32 0.0, %v1682
    %v1684 = vpop.f32.mrb[0].mxu0
    %1685 = vmatprep.mubr.bf16.mxu0 0
    %1686 = vmatmul.mubr.bf16.gmra.mrb[0].mxu0 %v1600
    %v1687 = vpop.f32.mrb[0].mxu0
    %v1688 = vadd.f32 0.0, %v1687
    %v1689 = vpop.f32.mrb[0].mxu0
    %v1690 = vpop.f32.mrb[0].mxu0
    %v1691 = vadd.f32 0.0, %v1690
    %v1692 = vpop.f32.mrb[0].mxu0
    %1693 = vmatprep.mubr.bf16.mxu0 0
    %1694 = vmatmul.mubr.bf16.gmra.mrb[0].mxu0 %v1603
    %v1695 = vpop.f32.mrb[0].mxu0
    %v1696 = vadd.f32 0.0, %v1695
    %v1697 = vpop.f32.mrb[0].mxu0
    %v1698 = vpop.f32.mrb[0].mxu0
    %v1699 = vadd.f32 0.0, %v1698
    %v1700 = vpop.f32.mrb[0].mxu0
    %1701 = vdwg.mxu0
    %v1702 = vmul.f32 %v748, %v853
    %v1703 = vmul.f32 %v748, %v854
    %v1704 = vmul.f32 %v748, %v855
    %v1705 = vmul.f32 %v748, %v856
    %v1706 = vmul.f32 %v748, %v857
    %v1707 = vmul.f32 %v748, %v858
    %v1708 = vmul.f32 %v748, %v859
    %v1709 = vmul.f32 %v748, %v860
    %v1710 = vmul.f32 %v748, %v861
    %v1711 = vmul.f32 %v748, %v862
    %v1712 = vmul.f32 %v748, %v863
    %v1713 = vmul.f32 %v748, %v864
    %v1714 = vmul.f32 %v748, %v865
    %v1715 = vmul.f32 %v748, %v866
    %v1716 = vmul.f32 %v748, %v867
    %v1717 = vmul.f32 %v748, %v868
    %v1718 = vadd.f32 %v1702, %v1640
    %v1719 = vadd.f32 %v1703, %v1643
    %v1720 = vadd.f32 %v1704, %v1648
    %v1721 = vadd.f32 %v1705, %v1651
    %v1722 = vadd.f32 %v1706, %v1656
    %v1723 = vadd.f32 %v1707, %v1659
    %v1724 = vadd.f32 %v1708, %v1664
    %v1725 = vadd.f32 %v1709, %v1667
    %v1726 = vadd.f32 %v1710, %v1672
    %v1727 = vadd.f32 %v1711, %v1675
    %v1728 = vadd.f32 %v1712, %v1680
    %v1729 = vadd.f32 %v1713, %v1683
    %v1730 = vadd.f32 %v1714, %v1688
    %v1731 = vadd.f32 %v1715, %v1691
    %v1732 = vadd.f32 %v1716, %v1696
    %v1733 = vadd.f32 %v1717, %v1699
    %v1734 = vadd.f32 %v1718, %v771
    %v1735 = vadd.f32 %v1719, %v771
    %v1736 = vadd.f32 %v1720, %v771
    %v1737 = vadd.f32 %v1721, %v771
    %v1738 = vadd.f32 %v1722, %v771
    %v1739 = vadd.f32 %v1723, %v771
    %v1740 = vadd.f32 %v1724, %v771
    %v1741 = vadd.f32 %v1725, %v771
    %v1742 = vadd.f32 %v1726, %v771
    %v1743 = vadd.f32 %v1727, %v771
    %v1744 = vadd.f32 %v1728, %v771
    %v1745 = vadd.f32 %v1729, %v771
    %v1746 = vadd.f32 %v1730, %v771
    %v1747 = vadd.f32 %v1731, %v771
    %v1748 = vadd.f32 %v1732, %v771
    %v1749 = vadd.f32 %v1733, %v771
    %v1750 = vmax.f32 %v1734, 0.0
    %v1751 = vmax.f32 %v1735, 0.0
    %v1752 = vmax.f32 %v1736, 0.0
    %v1753 = vmax.f32 %v1737, 0.0
    %v1754 = vmax.f32 %v1738, 0.0
    %v1755 = vmax.f32 %v1739, 0.0
    %v1756 = vmax.f32 %v1740, 0.0
    %v1757 = vmax.f32 %v1741, 0.0
    %v1758 = vmax.f32 %v1742, 0.0
    %v1759 = vmax.f32 %v1743, 0.0
    %v1760 = vmax.f32 %v1744, 0.0
    %v1761 = vmax.f32 %v1745, 0.0
    %v1762 = vmax.f32 %v1746, 0.0
    %v1763 = vmax.f32 %v1747, 0.0
    %v1764 = vmax.f32 %v1748, 0.0
    %v1765 = vmax.f32 %v1749, 0.0
    %v1766 = vmul.f32 %v1750, 0.1
    %v1767 = vmul.f32 %v1751, 0.1
    %v1768 = vmul.f32 %v1752, 0.1
    %v1769 = vmul.f32 %v1753, 0.1
    %v1770 = vmul.f32 %v1754, 0.1
    %v1771 = vmul.f32 %v1755, 0.1
    %v1772 = vmul.f32 %v1756, 0.1
    %v1773 = vmul.f32 %v1757, 0.1
    %v1774 = vmul.f32 %v1758, 0.1
    %v1775 = vmul.f32 %v1759, 0.1
    %v1776 = vmul.f32 %v1760, 0.1
    %v1777 = vmul.f32 %v1761, 0.1
    %v1778 = vmul.f32 %v1762, 0.1
    %v1779 = vmul.f32 %v1763, 0.1
    %v1780 = vmul.f32 %v1764, 0.1
    %v1781 = vmul.f32 %v1765, 0.1
    %v1782 = vadd.f32 %v821, %v1766
    %v1783 = vadd.f32 %v822, %v1767
    %v1784 = vadd.f32 %v823, %v1768
    %v1785 = vadd.f32 %v824, %v1769
    %v1786 = vadd.f32 %v825, %v1770
    %v1787 = vadd.f32 %v826, %v1771
    %v1788 = vadd.f32 %v827, %v1772
    %v1789 = vadd.f32 %v828, %v1773
    %v1790 = vadd.f32 %v829, %v1774
    %v1791 = vadd.f32 %v830, %v1775
    %v1792 = vadd.f32 %v831, %v1776
    %v1793 = vadd.f32 %v832, %v1777
    %v1794 = vadd.f32 %v833, %v1778
    %v1795 = vadd.f32 %v834, %v1779
    %v1796 = vadd.f32 %v835, %v1780
    %v1797 = vadd.f32 %v836, %v1781
    %v1798 = vmul.f32 %v1782, 0.1
    %v1799 = vmul.f32 %v1783, 0.1
    %v1800 = vmul.f32 %v1784, 0.1
    %v1801 = vmul.f32 %v1785, 0.1
    %v1802 = vmul.f32 %v1786, 0.1
    %v1803 = vmul.f32 %v1787, 0.1
    %v1804 = vmul.f32 %v1788, 0.1
    %v1805 = vmul.f32 %v1789, 0.1
    %v1806 = vmul.f32 %v1790, 0.1
    %v1807 = vmul.f32 %v1791, 0.1
    %v1808 = vmul.f32 %v1792, 0.1
    %v1809 = vmul.f32 %v1793, 0.1
    %v1810 = vmul.f32 %v1794, 0.1
    %v1811 = vmul.f32 %v1795, 0.1
    %v1812 = vmul.f32 %v1796, 0.1
    %v1813 = vmul.f32 %v1797, 0.1
    %v1814 = vadd.f32 %v853, %v1798
    %v1815 = vadd.f32 %v854, %v1799
    %v1816 = vadd.f32 %v855, %v1800
    %v1817 = vadd.f32 %v856, %v1801
    %v1818 = vadd.f32 %v857, %v1802
    %v1819 = vadd.f32 %v858, %v1803
    %v1820 = vadd.f32 %v859, %v1804
    %v1821 = vadd.f32 %v860, %v1805
    %v1822 = vadd.f32 %v861, %v1806
    %v1823 = vadd.f32 %v862, %v1807
    %v1824 = vadd.f32 %v863, %v1808
    %v1825 = vadd.f32 %v864, %v1809
    %v1826 = vadd.f32 %v865, %v1810
    %v1827 = vadd.f32 %v866, %v1811
    %v1828 = vadd.f32 %v867, %v1812
    %v1829 = vadd.f32 %v868, %v1813
    %v1830 = vmul.f32 %v873, %v1042
    %v1831 = vmul.f32 %v873, %v1043
    %v1832 = vmul.f32 %v873, %v1044
    %v1833 = vmul.f32 %v873, %v1045
    %v1834 = vmul.f32 %v873, %v1046
    %v1835 = vmul.f32 %v873, %v1047
    %v1836 = vmul.f32 %v873, %v1048
    %v1837 = vmul.f32 %v873, %v1049
    %v1838 = vmul.f32 %v873, %v1050
    %v1839 = vmul.f32 %v873, %v1051
    %v1840 = vmul.f32 %v873, %v1052
    %v1841 = vmul.f32 %v873, %v1053
    %v1842 = vmul.f32 %v873, %v1054
    %v1843 = vmul.f32 %v873, %v1055
    %v1844 = vmul.f32 %v873, %v1056
    %v1845 = vmul.f32 %v873, %v1057
    %1862 = vrot.lane.b32.xlu0 %v1640, 96
    %v1863 = vpop.permute.xlu0 %1862
    %1864 = vrot.lane.b32.xlu0 %v1643, 96
    %v1865 = vpop.permute.xlu0 %1864
    %1866 = vrot.lane.b32.xlu0 %v1648, 96
    %v1867 = vpop.permute.xlu0 %1866
    %1868 = vrot.lane.b32.xlu0 %v1651, 96
    %v1869 = vpop.permute.xlu0 %1868
    %1870 = vrot.lane.b32.xlu0 %v1656, 96
    %v1871 = vpop.permute.xlu0 %1870
    %1872 = vrot.lane.b32.xlu0 %v1659, 96
    %v1873 = vpop.permute.xlu0 %1872
    %1874 = vrot.lane.b32.xlu0 %v1664, 96
    %v1875 = vpop.permute.xlu0 %1874
    %1876 = vrot.lane.b32.xlu0 %v1667, 96
    %v1877 = vpop.permute.xlu0 %1876
    %1878 = vrot.lane.b32.xlu0 %v1672, 96
    %v1879 = vpop.permute.xlu0 %1878
    %1880 = vrot.lane.b32.xlu0 %v1675, 96
    %v1881 = vpop.permute.xlu0 %1880
    %1882 = vrot.lane.b32.xlu0 %v1680, 96
    %v1883 = vpop.permute.xlu0 %1882
    %1884 = vrot.lane.b32.xlu0 %v1683, 96
    %v1885 = vpop.permute.xlu0 %1884
    %1886 = vrot.lane.b32.xlu0 %v1688, 96
    %v1887 = vpop.permute.xlu0 %1886
    %1888 = vrot.lane.b32.xlu0 %v1691, 96
    %v1889 = vpop.permute.xlu0 %1888
    %1890 = vrot.lane.b32.xlu0 %v1696, 96
    %v1891 = vpop.permute.xlu0 %1890
    %1892 = vrot.lane.b32.xlu0 %v1699, 96
    %v1893 = vpop.permute.xlu0 %1892
    %v1910 = vadd.f32 %v1830, %v1863
    %v1911 = vadd.f32 %v1831, %v1865
    %v1912 = vadd.f32 %v1832, %v1867
    %v1913 = vadd.f32 %v1833, %v1869
    %v1914 = vadd.f32 %v1834, %v1871
    %v1915 = vadd.f32 %v1835, %v1873
    %v1916 = vadd.f32 %v1836, %v1875
    %v1917 = vadd.f32 %v1837, %v1877
    %v1918 = vadd.f32 %v1838, %v1879
    %v1919 = vadd.f32 %v1839, %v1881
    %v1920 = vadd.f32 %v1840, %v1883
    %v1921 = vadd.f32 %v1841, %v1885
    %v1922 = vadd.f32 %v1842, %v1887
    %v1923 = vadd.f32 %v1843, %v1889
    %v1924 = vadd.f32 %v1844, %v1891
    %v1925 = vadd.f32 %v1845, %v1893
    %v1926 = vadd.f32 %v1910, %v960
    %v1927 = vadd.f32 %v1911, %v960
    %v1928 = vadd.f32 %v1912, %v960
    %v1929 = vadd.f32 %v1913, %v960
    %v1930 = vadd.f32 %v1914, %v960
    %v1931 = vadd.f32 %v1915, %v960
    %v1932 = vadd.f32 %v1916, %v960
    %v1933 = vadd.f32 %v1917, %v960
    %v1934 = vadd.f32 %v1918, %v960
    %v1935 = vadd.f32 %v1919, %v960
    %v1936 = vadd.f32 %v1920, %v960
    %v1937 = vadd.f32 %v1921, %v960
    %v1938 = vadd.f32 %v1922, %v960
    %v1939 = vadd.f32 %v1923, %v960
    %v1940 = vadd.f32 %v1924, %v960
    %v1941 = vadd.f32 %v1925, %v960
    %v1942 = vmax.f32 %v1926, 0.0
    %v1943 = vmax.f32 %v1927, 0.0
    %v1944 = vmax.f32 %v1928, 0.0
    %v1945 = vmax.f32 %v1929, 0.0
    %v1946 = vmax.f32 %v1930, 0.0
    %v1947 = vmax.f32 %v1931, 0.0
    %v1948 = vmax.f32 %v1932, 0.0
    %v1949 = vmax.f32 %v1933, 0.0
    %v1950 = vmax.f32 %v1934, 0.0
    %v1951 = vmax.f32 %v1935, 0.0
    %v1952 = vmax.f32 %v1936, 0.0
    %v1953 = vmax.f32 %v1937, 0.0
    %v1954 = vmax.f32 %v1938, 0.0
    %v1955 = vmax.f32 %v1939, 0.0
    %v1956 = vmax.f32 %v1940, 0.0
    %v1957 = vmax.f32 %v1941, 0.0
    %v1958 = vmul.f32 %v1942, 0.1
    %v1959 = vmul.f32 %v1943, 0.1
    %v1960 = vmul.f32 %v1944, 0.1
    %v1961 = vmul.f32 %v1945, 0.1
    %v1962 = vmul.f32 %v1946, 0.1
    %v1963 = vmul.f32 %v1947, 0.1
    %v1964 = vmul.f32 %v1948, 0.1
    %v1965 = vmul.f32 %v1949, 0.1
    %v1966 = vmul.f32 %v1950, 0.1
    %v1967 = vmul.f32 %v1951, 0.1
    %v1968 = vmul.f32 %v1952, 0.1
    %v1969 = vmul.f32 %v1953, 0.1
    %v1970 = vmul.f32 %v1954, 0.1
    %v1971 = vmul.f32 %v1955, 0.1
    %v1972 = vmul.f32 %v1956, 0.1
    %v1973 = vmul.f32 %v1957, 0.1
    %v1974 = vadd.f32 %v1010, %v1958
    %v1975 = vadd.f32 %v1011, %v1959
    %v1976 = vadd.f32 %v1012, %v1960
    %v1977 = vadd.f32 %v1013, %v1961
    %v1978 = vadd.f32 %v1014, %v1962
    %v1979 = vadd.f32 %v1015, %v1963
    %v1980 = vadd.f32 %v1016, %v1964
    %v1981 = vadd.f32 %v1017, %v1965
    %v1982 = vadd.f32 %v1018, %v1966
    %v1983 = vadd.f32 %v1019, %v1967
    %v1984 = vadd.f32 %v1020, %v1968
    %v1985 = vadd.f32 %v1021, %v1969
    %v1986 = vadd.f32 %v1022, %v1970
    %v1987 = vadd.f32 %v1023, %v1971
    %v1988 = vadd.f32 %v1024, %v1972
    %v1989 = vadd.f32 %v1025, %v1973
    %v1990 = vmul.f32 %v1974, 0.1
    %v1991 = vmul.f32 %v1975, 0.1
    %v1992 = vmul.f32 %v1976, 0.1
    %v1993 = vmul.f32 %v1977, 0.1
    %v1994 = vmul.f32 %v1978, 0.1
    %v1995 = vmul.f32 %v1979, 0.1
    %v1996 = vmul.f32 %v1980, 0.1
    %v1997 = vmul.f32 %v1981, 0.1
    %v1998 = vmul.f32 %v1982, 0.1
    %v1999 = vmul.f32 %v1983, 0.1
    %v2000 = vmul.f32 %v1984, 0.1
    %v2001 = vmul.f32 %v1985, 0.1
    %v2002 = vmul.f32 %v1986, 0.1
    %v2003 = vmul.f32 %v1987, 0.1
    %v2004 = vmul.f32 %v1988, 0.1
    %v2005 = vmul.f32 %v1989, 0.1
    %v2006 = vadd.f32 %v1042, %v1990
    %v2007 = vadd.f32 %v1043, %v1991
    %v2008 = vadd.f32 %v1044, %v1992
    %v2009 = vadd.f32 %v1045, %v1993
    %v2010 = vadd.f32 %v1046, %v1994
    %v2011 = vadd.f32 %v1047, %v1995
    %v2012 = vadd.f32 %v1048, %v1996
    %v2013 = vadd.f32 %v1049, %v1997
    %v2014 = vadd.f32 %v1050, %v1998
    %v2015 = vadd.f32 %v1051, %v1999
    %v2016 = vadd.f32 %v1052, %v2000
    %v2017 = vadd.f32 %v1053, %v2001
    %v2018 = vadd.f32 %v1054, %v2002
    %v2019 = vadd.f32 %v1055, %v2003
    %v2020 = vadd.f32 %v1056, %v2004
    %v2021 = vadd.f32 %v1057, %v2005
    %v2022 = vmul.f32 %v1062, %v1308
    %v2023 = vmul.f32 %v1062, %v1309
    %v2024 = vmul.f32 %v1062, %v1310
    %v2025 = vmul.f32 %v1062, %v1311
    %v2026 = vmul.f32 %v1062, %v1312
    %v2027 = vmul.f32 %v1062, %v1313
    %v2028 = vmul.f32 %v1062, %v1314
    %v2029 = vmul.f32 %v1062, %v1315
    %v2030 = vmul.f32 %v1062, %v1316
    %v2031 = vmul.f32 %v1062, %v1317
    %v2032 = vmul.f32 %v1062, %v1318
    %v2033 = vmul.f32 %v1062, %v1319
    %v2034 = vmul.f32 %v1062, %v1320
    %v2035 = vmul.f32 %v1062, %v1321
    %v2036 = vmul.f32 %v1062, %v1322
    %v2037 = vmul.f32 %v1062, %v1323
    %v2038 = vpack.c.bf16 %v1815, %v1814
    %v2039 = vpack.c.bf16 %v1817, %v1816
    %v2040 = vpack.c.bf16 %v1819, %v1818
    %v2041 = vpack.c.bf16 %v1821, %v1820
    %v2042 = vpack.c.bf16 %v1823, %v1822
    %v2043 = vpack.c.bf16 %v1825, %v1824
    %v2044 = vpack.c.bf16 %v1827, %v1826
    %v2045 = vpack.c.bf16 %v1829, %v1828
    %v2047 = vsel %vm219, %v2038, 0
    %v2050 = vsel %vm219, %v2039, 0
    %v2053 = vsel %vm219, %v2040, 0
    %v2056 = vsel %vm219, %v2041, 0
    %v2059 = vsel %vm219, %v2042, 0
    %v2062 = vsel %vm219, %v2043, 0
    %v2065 = vsel %vm219, %v2044, 0
    %v2068 = vsel %vm219, %v2045, 0
    %2070 = vmatprep.subr.bf16.mxu0 0
    %2071 = vmatpush1.bf16.msra.mxu0 %v1081
    %2072 = vmatprep.subr.bf16.mxu0 0
    %2073 = vmatpush1.bf16.msra.mxu0 %v1082
    %2074 = vmatprep.subr.bf16.mxu0 0
    %2075 = vmatpush1.bf16.msra.mxu0 0
    %2076 = vmatprep.subr.bf16.mxu0 0
    %2077 = vmatpush1.bf16.msra.mxu0 0
    %2078 = vmatprep.subr.bf16.mxu0 0
    %2079 = vmatpush1.bf16.msra.mxu0 0
    %2080 = vmatprep.subr.bf16.mxu0 0
    %2081 = vmatpush1.bf16.msra.mxu0 0
    %2082 = vmatprep.subr.bf16.mxu0 0
    %2083 = vmatpush1.bf16.msra.mxu0 0
    %2084 = vmatprep.subr.bf16.mxu0 0
    %2085 = vmatpush1.bf16.msra.mxu0 0
    %2086 = vmatprep.subr.bf16.mxu0 0
    %2087 = vmatpush1.bf16.msra.mxu0 0
    %2088 = vmatprep.subr.bf16.mxu0 0
    %2089 = vmatpush1.bf16.msra.mxu0 0
    %2090 = vmatprep.subr.bf16.mxu0 0
    %2091 = vmatpush1.bf16.msra.mxu0 0
    %2092 = vmatprep.subr.bf16.mxu0 0
    %2093 = vmatpush1.bf16.msra.mxu0 0
    %2094 = vmatprep.subr.bf16.mxu0 0
    %2095 = vmatpush1.bf16.msra.mxu0 0
    %2096 = vmatprep.subr.bf16.mxu0 0
    %2097 = vmatpush1.bf16.msra.mxu0 0
    %2098 = vmatprep.subr.bf16.mxu0 0
    %2099 = vmatpush1.bf16.msra.mxu0 0
    %2100 = vmatprep.subr.bf16.mxu0 0
    %2101 = vmatpush1.bf16.msra.mxu0 0
    %2102 = vmatprep.mubr.bf16.mxu0 0
    %2103 = vmatmul.mubr.bf16.gmra.mrb[0].mxu0 %v2047
    %v2104 = vpop.f32.mrb[0].mxu0
    %v2105 = vadd.f32 0.0, %v2104
    %v2106 = vpop.f32.mrb[0].mxu0
    %v2107 = vpop.f32.mrb[0].mxu0
    %v2108 = vadd.f32 0.0, %v2107
    %v2109 = vpop.f32.mrb[0].mxu0
    %2110 = vmatprep.mubr.bf16.mxu0 0
    %2111 = vmatmul.mubr.bf16.gmra.mrb[0].mxu0 %v2050
    %v2112 = vpop.f32.mrb[0].mxu0
    %v2113 = vadd.f32 0.0, %v2112
    %v2114 = vpop.f32.mrb[0].mxu0
    %v2115 = vpop.f32.mrb[0].mxu0
    %v2116 = vadd.f32 0.0, %v2115
    %v2117 = vpop.f32.mrb[0].mxu0
    %2118 = vmatprep.mubr.bf16.mxu0 0
    %2119 = vmatmul.mubr.bf16.gmra.mrb[0].mxu0 %v2053
    %v2120 = vpop.f32.mrb[0].mxu0
    %v2121 = vadd.f32 0.0, %v2120
    %v2122 = vpop.f32.mrb[0].mxu0
    %v2123 = vpop.f32.mrb[0].mxu0
    %v2124 = vadd.f32 0.0, %v2123
    %v2125 = vpop.f32.mrb[0].mxu0
    %2126 = vmatprep.mubr.bf16.mxu0 0
    %2127 = vmatmul.mubr.bf16.gmra.mrb[0].mxu0 %v2056
    %v2128 = vpop.f32.mrb[0].mxu0
    %v2129 = vadd.f32 0.0, %v2128
    %v2130 = vpop.f32.mrb[0].mxu0
    %v2131 = vpop.f32.mrb[0].mxu0
    %v2132 = vadd.f32 0.0, %v2131
    %v2133 = vpop.f32.mrb[0].mxu0
    %2134 = vmatprep.mubr.bf16.mxu0 0
    %2135 = vmatmul.mubr.bf16.gmra.mrb[0].mxu0 %v2059
    %v2136 = vpop.f32.mrb[0].mxu0
    %v2137 = vadd.f32 0.0, %v2136
    %v2138 = vpop.f32.mrb[0].mxu0
    %v2139 = vpop.f32.mrb[0].mxu0
    %v2140 = vadd.f32 0.0, %v2139
    %v2141 = vpop.f32.mrb[0].mxu0
    %2142 = vmatprep.mubr.bf16.mxu0 0
    %2143 = vmatmul.mubr.bf16.gmra.mrb[0].mxu0 %v2062
    %v2144 = vpop.f32.mrb[0].mxu0
    %v2145 = vadd.f32 0.0, %v2144
    %v2146 = vpop.f32.mrb[0].mxu0
    %v2147 = vpop.f32.mrb[0].mxu0
    %v2148 = vadd.f32 0.0, %v2147
    %v2149 = vpop.f32.mrb[0].mxu0
    %2150 = vmatprep.mubr.bf16.mxu0 0
    %2151 = vmatmul.mubr.bf16.gmra.mrb[0].mxu0 %v2065
    %v2152 = vpop.f32.mrb[0].mxu0
    %v2153 = vadd.f32 0.0, %v2152
    %v2154 = vpop.f32.mrb[0].mxu0
    %v2155 = vpop.f32.mrb[0].mxu0
    %v2156 = vadd.f32 0.0, %v2155
    %v2157 = vpop.f32.mrb[0].mxu0
    %2158 = vmatprep.mubr.bf16.mxu0 0
    %2159 = vmatmul.mubr.bf16.gmra.mrb[0].mxu0 %v2068
    %v2160 = vpop.f32.mrb[0].mxu0
    %v2161 = vadd.f32 0.0, %v2160
    %v2162 = vpop.f32.mrb[0].mxu0
    %v2163 = vpop.f32.mrb[0].mxu0
    %v2164 = vadd.f32 0.0, %v2163
    %v2165 = vpop.f32.mrb[0].mxu0
    %2166 = vdwg.mxu0
    %v2167 = vadd.f32 %v2022, %v2105
    %v2168 = vadd.f32 %v2023, %v2108
    %v2169 = vadd.f32 %v2024, %v2113
    %v2170 = vadd.f32 %v2025, %v2116
    %v2171 = vadd.f32 %v2026, %v2121
    %v2172 = vadd.f32 %v2027, %v2124
    %v2173 = vadd.f32 %v2028, %v2129
    %v2174 = vadd.f32 %v2029, %v2132
    %v2175 = vadd.f32 %v2030, %v2137
    %v2176 = vadd.f32 %v2031, %v2140
    %v2177 = vadd.f32 %v2032, %v2145
    %v2178 = vadd.f32 %v2033, %v2148
    %v2179 = vadd.f32 %v2034, %v2153
    %v2180 = vadd.f32 %v2035, %v2156
    %v2181 = vadd.f32 %v2036, %v2161
    %v2182 = vadd.f32 %v2037, %v2164
    %v2183 = vadd.f32 %v2167, %v1226
    %v2184 = vadd.f32 %v2168, %v1226
    %v2185 = vadd.f32 %v2169, %v1226
    %v2186 = vadd.f32 %v2170, %v1226
    %v2187 = vadd.f32 %v2171, %v1226
    %v2188 = vadd.f32 %v2172, %v1226
    %v2189 = vadd.f32 %v2173, %v1226
    %v2190 = vadd.f32 %v2174, %v1226
    %v2191 = vadd.f32 %v2175, %v1226
    %v2192 = vadd.f32 %v2176, %v1226
    %v2193 = vadd.f32 %v2177, %v1226
    %v2194 = vadd.f32 %v2178, %v1226
    %v2195 = vadd.f32 %v2179, %v1226
    %v2196 = vadd.f32 %v2180, %v1226
    %v2197 = vadd.f32 %v2181, %v1226
    %v2198 = vadd.f32 %v2182, %v1226
    %v2199 = vmax.f32 %v2183, 0.0
    %v2200 = vmax.f32 %v2184, 0.0
    %v2201 = vmax.f32 %v2185, 0.0
    %v2202 = vmax.f32 %v2186, 0.0
    %v2203 = vmax.f32 %v2187, 0.0
    %v2204 = vmax.f32 %v2188, 0.0
    %v2205 = vmax.f32 %v2189, 0.0
    %v2206 = vmax.f32 %v2190, 0.0
    %v2207 = vmax.f32 %v2191, 0.0
    %v2208 = vmax.f32 %v2192, 0.0
    %v2209 = vmax.f32 %v2193, 0.0
    %v2210 = vmax.f32 %v2194, 0.0
    %v2211 = vmax.f32 %v2195, 0.0
    %v2212 = vmax.f32 %v2196, 0.0
    %v2213 = vmax.f32 %v2197, 0.0
    %v2214 = vmax.f32 %v2198, 0.0
    %v2215 = vmul.f32 %v2199, 0.1
    %v2216 = vmul.f32 %v2200, 0.1
    %v2217 = vmul.f32 %v2201, 0.1
    %v2218 = vmul.f32 %v2202, 0.1
    %v2219 = vmul.f32 %v2203, 0.1
    %v2220 = vmul.f32 %v2204, 0.1
    %v2221 = vmul.f32 %v2205, 0.1
    %v2222 = vmul.f32 %v2206, 0.1
    %v2223 = vmul.f32 %v2207, 0.1
    %v2224 = vmul.f32 %v2208, 0.1
    %v2225 = vmul.f32 %v2209, 0.1
    %v2226 = vmul.f32 %v2210, 0.1
    %v2227 = vmul.f32 %v2211, 0.1
    %v2228 = vmul.f32 %v2212, 0.1
    %v2229 = vmul.f32 %v2213, 0.1
    %v2230 = vmul.f32 %v2214, 0.1
    %v2231 = vadd.f32 %v1276, %v2215
    %v2232 = vadd.f32 %v1277, %v2216
    %v2233 = vadd.f32 %v1278, %v2217
    %v2234 = vadd.f32 %v1279, %v2218
    %v2235 = vadd.f32 %v1280, %v2219
    %v2236 = vadd.f32 %v1281, %v2220
    %v2237 = vadd.f32 %v1282, %v2221
    %v2238 = vadd.f32 %v1283, %v2222
    %v2239 = vadd.f32 %v1284, %v2223
    %v2240 = vadd.f32 %v1285, %v2224
    %v2241 = vadd.f32 %v1286, %v2225
    %v2242 = vadd.f32 %v1287, %v2226
    %v2243 = vadd.f32 %v1288, %v2227
    %v2244 = vadd.f32 %v1289, %v2228
    %v2245 = vadd.f32 %v1290, %v2229
    %v2246 = vadd.f32 %v1291, %v2230
    %v2247 = vmul.f32 %v2231, 0.1
    %v2248 = vmul.f32 %v2232, 0.1
    %v2249 = vmul.f32 %v2233, 0.1
    %v2250 = vmul.f32 %v2234, 0.1
    %v2251 = vmul.f32 %v2235, 0.1
    %v2252 = vmul.f32 %v2236, 0.1
    %v2253 = vmul.f32 %v2237, 0.1
    %v2254 = vmul.f32 %v2238, 0.1
    %v2255 = vmul.f32 %v2239, 0.1
    %v2256 = vmul.f32 %v2240, 0.1
    %v2257 = vmul.f32 %v2241, 0.1
    %v2258 = vmul.f32 %v2242, 0.1
    %v2259 = vmul.f32 %v2243, 0.1
    %v2260 = vmul.f32 %v2244, 0.1
    %v2261 = vmul.f32 %v2245, 0.1
    %v2262 = vmul.f32 %v2246, 0.1
    %v2263 = vadd.f32 %v1308, %v2247
    %v2264 = vadd.f32 %v1309, %v2248
    %v2265 = vadd.f32 %v1310, %v2249
    %v2266 = vadd.f32 %v1311, %v2250
    %v2267 = vadd.f32 %v1312, %v2251
    %v2268 = vadd.f32 %v1313, %v2252
    %v2269 = vadd.f32 %v1314, %v2253
    %v2270 = vadd.f32 %v1315, %v2254
    %v2271 = vadd.f32 %v1316, %v2255
    %v2272 = vadd.f32 %v1317, %v2256
    %v2273 = vadd.f32 %v1318, %v2257
    %v2274 = vadd.f32 %v1319, %v2258
    %v2275 = vadd.f32 %v1320, %v2259
    %v2276 = vadd.f32 %v1321, %v2260
    %v2277 = vadd.f32 %v1322, %v2261
    %v2278 = vadd.f32 %v1323, %v2262
    %v2279 = vpack.c.bf16 %v1478, %v1477
    %v2280 = vpack.c.bf16 %v1480, %v1479
    %v2281 = vpack.c.bf16 %v1482, %v1481
    %v2282 = vpack.c.bf16 %v1484, %v1483
    %v2283 = vpack.c.bf16 %v1486, %v1485
    %v2284 = vpack.c.bf16 %v1488, %v1487
    %v2285 = vpack.c.bf16 %v1490, %v1489
    %v2286 = vpack.c.bf16 %v1492, %v1491
    %2287 = vmatprep.subr.bf16.mxu0 0
    %2288 = vmatpush1.bf16.msra.mxu0 %v2279
    %2289 = vmatprep.subr.bf16.mxu0 0
    %2290 = vmatpush1.bf16.msra.mxu0 %v2280
    %2291 = vmatprep.subr.bf16.mxu0 0
    %2292 = vmatpush1.bf16.msra.mxu0 %v2281
    %2293 = vmatprep.subr.bf16.mxu0 0
    %2294 = vmatpush1.bf16.msra.mxu0 %v2282
    %2295 = vmatprep.subr.bf16.mxu0 0
    %2296 = vmatpush1.bf16.msra.mxu0 %v2283
    %2297 = vmatprep.subr.bf16.mxu0 0
    %2298 = vmatpush1.bf16.msra.mxu0 %v2284
    %2299 = vmatprep.subr.bf16.mxu0 0
    %2300 = vmatpush1.bf16.msra.mxu0 %v2285
    %2301 = vmatprep.subr.bf16.mxu0 0
    %2302 = vmatpush1.bf16.msra.mxu0 %v2286
    %2303 = vmatprep.subr.bf16.mxu0 0
    %2304 = vmatpush1.bf16.msra.mxu0 0
    %2305 = vmatprep.subr.bf16.mxu0 0
    %2306 = vmatpush1.bf16.msra.mxu0 0
    %2307 = vmatprep.subr.bf16.mxu0 0
    %2308 = vmatpush1.bf16.msra.mxu0 0
    %2309 = vmatprep.subr.bf16.mxu0 0
    %2310 = vmatpush1.bf16.msra.mxu0 0
    %2311 = vmatprep.subr.bf16.mxu0 0
    %2312 = vmatpush1.bf16.msra.mxu0 0
    %2313 = vmatprep.subr.bf16.mxu0 0
    %2314 = vmatpush1.bf16.msra.mxu0 0
    %2315 = vmatprep.subr.bf16.mxu0 0
    %2316 = vmatpush1.bf16.msra.mxu0 0
    %2317 = vmatprep.subr.bf16.mxu0 0
    %2318 = vmatpush1.bf16.msra.mxu0 0
    %2319 = vmatprep.mubr.bf16.mxu0 0
    %2320 = vmatmul.mubr.bf16.gmra.mrb[0].mxu0 %v397
    %v2321 = vpop.f32.mrb[0].mxu0
    %v2322 = vadd.f32 0.0, %v2321
    %v2323 = vpop.f32.mrb[0].mxu0
    %v2324 = vpop.f32.mrb[0].mxu0
    %v2325 = vadd.f32 0.0, %v2324
    %v2326 = vpop.f32.mrb[0].mxu0
    %2327 = vmatprep.mubr.bf16.mxu0 0
    %2328 = vmatmul.mubr.bf16.gmra.mrb[0].mxu0 %v398
    %v2329 = vpop.f32.mrb[0].mxu0
    %v2330 = vadd.f32 0.0, %v2329
    %v2331 = vpop.f32.mrb[0].mxu0
    %v2332 = vpop.f32.mrb[0].mxu0
    %v2333 = vadd.f32 0.0, %v2332
    %v2334 = vpop.f32.mrb[0].mxu0
    %2335 = vmatprep.mubr.bf16.mxu0 0
    %2336 = vmatmul.mubr.bf16.gmra.mrb[0].mxu0 %v399
    %v2337 = vpop.f32.mrb[0].mxu0
    %v2338 = vadd.f32 0.0, %v2337
    %v2339 = vpop.f32.mrb[0].mxu0
    %v2340 = vpop.f32.mrb[0].mxu0
    %v2341 = vadd.f32 0.0, %v2340
    %v2342 = vpop.f32.mrb[0].mxu0
    %2343 = vmatprep.mubr.bf16.mxu0 0
    %2344 = vmatmul.mubr.bf16.gmra.mrb[0].mxu0 %v400
    %v2345 = vpop.f32.mrb[0].mxu0
    %v2346 = vadd.f32 0.0, %v2345
    %v2347 = vpop.f32.mrb[0].mxu0
    %v2348 = vpop.f32.mrb[0].mxu0
    %v2349 = vadd.f32 0.0, %v2348
    %v2350 = vpop.f32.mrb[0].mxu0
    %2351 = vmatprep.mubr.bf16.mxu0 0
    %2352 = vmatmul.mubr.bf16.gmra.mrb[0].mxu0 %v401
    %v2353 = vpop.f32.mrb[0].mxu0
    %v2354 = vadd.f32 0.0, %v2353
    %v2355 = vpop.f32.mrb[0].mxu0
    %v2356 = vpop.f32.mrb[0].mxu0
    %v2357 = vadd.f32 0.0, %v2356
    %v2358 = vpop.f32.mrb[0].mxu0
    %2359 = vmatprep.mubr.bf16.mxu0 0
    %2360 = vmatmul.mubr.bf16.gmra.mrb[0].mxu0 %v402
    %v2361 = vpop.f32.mrb[0].mxu0
    %v2362 = vadd.f32 0.0, %v2361
    %v2363 = vpop.f32.mrb[0].mxu0
    %v2364 = vpop.f32.mrb[0].mxu0
    %v2365 = vadd.f32 0.0, %v2364
    %v2366 = vpop.f32.mrb[0].mxu0
    %2367 = vmatprep.mubr.bf16.mxu0 0
    %2368 = vmatmul.mubr.bf16.gmra.mrb[0].mxu0 %v403
    %v2369 = vpop.f32.mrb[0].mxu0
    %v2370 = vadd.f32 0.0, %v2369
    %v2371 = vpop.f32.mrb[0].mxu0
    %v2372 = vpop.f32.mrb[0].mxu0
    %v2373 = vadd.f32 0.0, %v2372
    %v2374 = vpop.f32.mrb[0].mxu0
    %2375 = vmatprep.mubr.bf16.mxu0 0
    %2376 = vmatmul.mubr.bf16.gmra.mrb[0].mxu0 %v404
    %v2377 = vpop.f32.mrb[0].mxu0
    %v2378 = vadd.f32 0.0, %v2377
    %v2379 = vpop.f32.mrb[0].mxu0
    %v2380 = vpop.f32.mrb[0].mxu0
    %v2381 = vadd.f32 0.0, %v2380
    %v2382 = vpop.f32.mrb[0].mxu0
    %2383 = vdwg.mxu0
    %v2384 = vmul.f32 %v2322, 0.1
    %v2385 = vmul.f32 %v2325, 0.1
    %v2386 = vmul.f32 %v2330, 0.1
    %v2387 = vmul.f32 %v2333, 0.1
    %v2388 = vmul.f32 %v2338, 0.1
    %v2389 = vmul.f32 %v2341, 0.1
    %v2390 = vmul.f32 %v2346, 0.1
    %v2391 = vmul.f32 %v2349, 0.1
    %v2392 = vmul.f32 %v2354, 0.1
    %v2393 = vmul.f32 %v2357, 0.1
    %v2394 = vmul.f32 %v2362, 0.1
    %v2395 = vmul.f32 %v2365, 0.1
    %v2396 = vmul.f32 %v2370, 0.1
    %v2397 = vmul.f32 %v2373, 0.1
    %v2398 = vmul.f32 %v2378, 0.1
    %v2399 = vmul.f32 %v2381, 0.1
    %v2400 = vsub.f32 %v1445, %v2384
    %v2401 = vsub.f32 %v1446, %v2385
    %v2402 = vsub.f32 %v1447, %v2386
    %v2403 = vsub.f32 %v1448, %v2387
    %v2404 = vsub.f32 %v1449, %v2388
    %v2405 = vsub.f32 %v1450, %v2389
    %v2406 = vsub.f32 %v1451, %v2390
    %v2407 = vsub.f32 %v1452, %v2391
    %v2408 = vsub.f32 %v1453, %v2392
    %v2409 = vsub.f32 %v1454, %v2393
    %v2410 = vsub.f32 %v1455, %v2394
    %v2411 = vsub.f32 %v1456, %v2395
    %v2412 = vsub.f32 %v1457, %v2396
    %v2413 = vsub.f32 %v1458, %v2397
    %v2414 = vsub.f32 %v1459, %v2398
    %v2415 = vsub.f32 %v1460, %v2399
    %v2416 = vmul.f32 %v2400, 0.1
    %v2417 = vmul.f32 %v2401, 0.1
    %v2418 = vmul.f32 %v2402, 0.1
    %v2419 = vmul.f32 %v2403, 0.1
    %v2420 = vmul.f32 %v2404, 0.1
    %v2421 = vmul.f32 %v2405, 0.1
    %v2422 = vmul.f32 %v2406, 0.1
    %v2423 = vmul.f32 %v2407, 0.1
    %v2424 = vmul.f32 %v2408, 0.1
    %v2425 = vmul.f32 %v2409, 0.1
    %v2426 = vmul.f32 %v2410, 0.1
    %v2427 = vmul.f32 %v2411, 0.1
    %v2428 = vmul.f32 %v2412, 0.1
    %v2429 = vmul.f32 %v2413, 0.1
    %v2430 = vmul.f32 %v2414, 0.1
    %v2431 = vmul.f32 %v2415, 0.1
    %v2432 = vadd.f32 %v1477, %v2416
    %v2433 = vadd.f32 %v1478, %v2417
    %v2434 = vadd.f32 %v1479, %v2418
    %v2435 = vadd.f32 %v1480, %v2419
    %v2436 = vadd.f32 %v1481, %v2420
    %v2437 = vadd.f32 %v1482, %v2421
    %v2438 = vadd.f32 %v1483, %v2422
    %v2439 = vadd.f32 %v1484, %v2423
    %v2440 = vadd.f32 %v1485, %v2424
    %v2441 = vadd.f32 %v1486, %v2425
    %v2442 = vadd.f32 %v1487, %v2426
    %v2443 = vadd.f32 %v1488, %v2427
    %v2444 = vadd.f32 %v1489, %v2428
    %v2445 = vadd.f32 %v1490, %v2429
    %v2446 = vadd.f32 %v1491, %v2430
    %v2447 = vadd.f32 %v1492, %v2431
    %2464 = vrot.lane.b32.xlu0 %v2263, 32
    %v2465 = vpop.permute.xlu0 %2464
    %2466 = vrot.lane.b32.xlu0 %v2264, 32
    %v2467 = vpop.permute.xlu0 %2466
    %2468 = vrot.lane.b32.xlu0 %v2265, 32
    %v2469 = vpop.permute.xlu0 %2468
    %2470 = vrot.lane.b32.xlu0 %v2266, 32
    %v2471 = vpop.permute.xlu0 %2470
    %2472 = vrot.lane.b32.xlu0 %v2267, 32
    %v2473 = vpop.permute.xlu0 %2472
    %2474 = vrot.lane.b32.xlu0 %v2268, 32
    %v2475 = vpop.permute.xlu0 %2474
    %2476 = vrot.lane.b32.xlu0 %v2269, 32
    %v2477 = vpop.permute.xlu0 %2476
    %2478 = vrot.lane.b32.xlu0 %v2270, 32
    %v2479 = vpop.permute.xlu0 %2478
    %2480 = vrot.lane.b32.xlu0 %v2271, 32
    %v2481 = vpop.permute.xlu0 %2480
    %2482 = vrot.lane.b32.xlu0 %v2272, 32
    %v2483 = vpop.permute.xlu0 %2482
    %2484 = vrot.lane.b32.xlu0 %v2273, 32
    %v2485 = vpop.permute.xlu0 %2484
    %2486 = vrot.lane.b32.xlu0 %v2274, 32
    %v2487 = vpop.permute.xlu0 %2486
    %2488 = vrot.lane.b32.xlu0 %v2275, 32
    %v2489 = vpop.permute.xlu0 %2488
    %2490 = vrot.lane.b32.xlu0 %v2276, 32
    %v2491 = vpop.permute.xlu0 %2490
    %2492 = vrot.lane.b32.xlu0 %v2277, 32
    %v2493 = vpop.permute.xlu0 %2492
    %2494 = vrot.lane.b32.xlu0 %v2278, 32
    %v2495 = vpop.permute.xlu0 %2494
    %v2512 = vsel %vm219, %v2432, %v2465
    %v2513 = vsel %vm219, %v2433, %v2467
    %v2514 = vsel %vm219, %v2434, %v2469
    %v2515 = vsel %vm219, %v2435, %v2471
    %v2516 = vsel %vm219, %v2436, %v2473
    %v2517 = vsel %vm219, %v2437, %v2475
    %v2518 = vsel %vm219, %v2438, %v2477
    %v2519 = vsel %vm219, %v2439, %v2479
    %v2520 = vsel %vm219, %v2440, %v2481
    %v2521 = vsel %vm219, %v2441, %v2483
    %v2522 = vsel %vm219, %v2442, %v2485
    %v2523 = vsel %vm219, %v2443, %v2487
    %v2524 = vsel %vm219, %v2444, %v2489
    %v2525 = vsel %vm219, %v2445, %v2491
    %v2526 = vsel %vm219, %v2446, %v2493
    %v2527 = vsel %vm219, %v2447, %v2495
    %v2528 = vpack.c.bf16 %v2513, %v2512
    %v2529 = vpack.c.bf16 %v2515, %v2514
    %v2530 = vpack.c.bf16 %v2517, %v2516
    %v2531 = vpack.c.bf16 %v2519, %v2518
    %v2532 = vpack.c.bf16 %v2521, %v2520
    %v2533 = vpack.c.bf16 %v2523, %v2522
    %v2534 = vpack.c.bf16 %v2525, %v2524
    %v2535 = vpack.c.bf16 %v2527, %v2526
    %v2537 = vsel %vm622, %v2528, 0
    %v2540 = vsel %vm622, %v2529, 0
    %v2543 = vsel %vm622, %v2530, 0
    %v2546 = vsel %vm622, %v2531, 0
    %v2549 = vsel %vm622, %v2532, 0
    %v2552 = vsel %vm622, %v2533, 0
    %v2555 = vsel %vm622, %v2534, 0
    %v2558 = vsel %vm622, %v2535, 0
    %2560 = vmatprep.subr.bf16.mxu0 0
    %2561 = vmatpush1.bf16.msra.mxu0 %v614
    %2562 = vmatprep.subr.bf16.mxu0 0
    %2563 = vmatpush1.bf16.msra.mxu0 %v615
    %2564 = vmatprep.subr.bf16.mxu0 0
    %2565 = vmatpush1.bf16.msra.mxu0 %v616
    %2566 = vmatprep.subr.bf16.mxu0 0
    %2567 = vmatpush1.bf16.msra.mxu0 %v617
    %2568 = vmatprep.subr.bf16.mxu0 0
    %2569 = vmatpush1.bf16.msra.mxu0 0
    %2570 = vmatprep.subr.bf16.mxu0 0
    %2571 = vmatpush1.bf16.msra.mxu0 0
    %2572 = vmatprep.subr.bf16.mxu0 0
    %2573 = vmatpush1.bf16.msra.mxu0 0
    %2574 = vmatprep.subr.bf16.mxu0 0
    %2575 = vmatpush1.bf16.msra.mxu0 0
    %2576 = vmatprep.subr.bf16.mxu0 0
    %2577 = vmatpush1.bf16.msra.mxu0 0
    %2578 = vmatprep.subr.bf16.mxu0 0
    %2579 = vmatpush1.bf16.msra.mxu0 0
    %2580 = vmatprep.subr.bf16.mxu0 0
    %2581 = vmatpush1.bf16.msra.mxu0 0
    %2582 = vmatprep.subr.bf16.mxu0 0
    %2583 = vmatpush1.bf16.msra.mxu0 0
    %2584 = vmatprep.subr.bf16.mxu0 0
    %2585 = vmatpush1.bf16.msra.mxu0 0
    %2586 = vmatprep.subr.bf16.mxu0 0
    %2587 = vmatpush1.bf16.msra.mxu0 0
    %2588 = vmatprep.subr.bf16.mxu0 0
    %2589 = vmatpush1.bf16.msra.mxu0 0
    %2590 = vmatprep.subr.bf16.mxu0 0
    %2591 = vmatpush1.bf16.msra.mxu0 0
    %2592 = vmatprep.mubr.bf16.mxu0 0
    %2593 = vmatmul.mubr.bf16.gmra.mrb[0].mxu0 %v2537
    %v2594 = vpop.f32.mrb[0].mxu0
    %v2595 = vadd.f32 0.0, %v2594
    %v2596 = vpop.f32.mrb[0].mxu0
    %v2597 = vpop.f32.mrb[0].mxu0
    %v2598 = vadd.f32 0.0, %v2597
    %v2599 = vpop.f32.mrb[0].mxu0
    %2600 = vmatprep.mubr.bf16.mxu0 0
    %2601 = vmatmul.mubr.bf16.gmra.mrb[0].mxu0 %v2540
    %v2602 = vpop.f32.mrb[0].mxu0
    %v2603 = vadd.f32 0.0, %v2602
    %v2604 = vpop.f32.mrb[0].mxu0
    %v2605 = vpop.f32.mrb[0].mxu0
    %v2606 = vadd.f32 0.0, %v2605
    %v2607 = vpop.f32.mrb[0].mxu0
    %2608 = vmatprep.mubr.bf16.mxu0 0
    %2609 = vmatmul.mubr.bf16.gmra.mrb[0].mxu0 %v2543
    %v2610 = vpop.f32.mrb[0].mxu0
    %v2611 = vadd.f32 0.0, %v2610
    %v2612 = vpop.f32.mrb[0].mxu0
    %v2613 = vpop.f32.mrb[0].mxu0
    %v2614 = vadd.f32 0.0, %v2613
    %v2615 = vpop.f32.mrb[0].mxu0
    %2616 = vmatprep.mubr.bf16.mxu0 0
    %2617 = vmatmul.mubr.bf16.gmra.mrb[0].mxu0 %v2546
    %v2618 = vpop.f32.mrb[0].mxu0
    %v2619 = vadd.f32 0.0, %v2618
    %v2620 = vpop.f32.mrb[0].mxu0
    %v2621 = vpop.f32.mrb[0].mxu0
    %v2622 = vadd.f32 0.0, %v2621
    %v2623 = vpop.f32.mrb[0].mxu0
    %2624 = vmatprep.mubr.bf16.mxu0 0
    %2625 = vmatmul.mubr.bf16.gmra.mrb[0].mxu0 %v2549
    %v2626 = vpop.f32.mrb[0].mxu0
    %v2627 = vadd.f32 0.0, %v2626
    %v2628 = vpop.f32.mrb[0].mxu0
    %v2629 = vpop.f32.mrb[0].mxu0
    %v2630 = vadd.f32 0.0, %v2629
    %v2631 = vpop.f32.mrb[0].mxu0
    %2632 = vmatprep.mubr.bf16.mxu0 0
    %2633 = vmatmul.mubr.bf16.gmra.mrb[0].mxu0 %v2552
    %v2634 = vpop.f32.mrb[0].mxu0
    %v2635 = vadd.f32 0.0, %v2634
    %v2636 = vpop.f32.mrb[0].mxu0
    %v2637 = vpop.f32.mrb[0].mxu0
    %v2638 = vadd.f32 0.0, %v2637
    %v2639 = vpop.f32.mrb[0].mxu0
    %2640 = vmatprep.mubr.bf16.mxu0 0
    %2641 = vmatmul.mubr.bf16.gmra.mrb[0].mxu0 %v2555
    %v2642 = vpop.f32.mrb[0].mxu0
    %v2643 = vadd.f32 0.0, %v2642
    %v2644 = vpop.f32.mrb[0].mxu0
    %v2645 = vpop.f32.mrb[0].mxu0
    %v2646 = vadd.f32 0.0, %v2645
    %v2647 = vpop.f32.mrb[0].mxu0
    %2648 = vmatprep.mubr.bf16.mxu0 0
    %2649 = vmatmul.mubr.bf16.gmra.mrb[0].mxu0 %v2558
    %v2650 = vpop.f32.mrb[0].mxu0
    %v2651 = vadd.f32 0.0, %v2650
    %v2652 = vpop.f32.mrb[0].mxu0
    %v2653 = vpop.f32.mrb[0].mxu0
    %v2654 = vadd.f32 0.0, %v2653
    %v2655 = vpop.f32.mrb[0].mxu0
    %2656 = vdwg.mxu0
    %v2657 = vmul.f32 %v748, %v1814
    %v2658 = vmul.f32 %v748, %v1815
    %v2659 = vmul.f32 %v748, %v1816
    %v2660 = vmul.f32 %v748, %v1817
    %v2661 = vmul.f32 %v748, %v1818
    %v2662 = vmul.f32 %v748, %v1819
    %v2663 = vmul.f32 %v748, %v1820
    %v2664 = vmul.f32 %v748, %v1821
    %v2665 = vmul.f32 %v748, %v1822
    %v2666 = vmul.f32 %v748, %v1823
    %v2667 = vmul.f32 %v748, %v1824
    %v2668 = vmul.f32 %v748, %v1825
    %v2669 = vmul.f32 %v748, %v1826
    %v2670 = vmul.f32 %v748, %v1827
    %v2671 = vmul.f32 %v748, %v1828
    %v2672 = vmul.f32 %v748, %v1829
    %v2673 = vadd.f32 %v2657, %v2595
    %v2674 = vadd.f32 %v2658, %v2598
    %v2675 = vadd.f32 %v2659, %v2603
    %v2676 = vadd.f32 %v2660, %v2606
    %v2677 = vadd.f32 %v2661, %v2611
    %v2678 = vadd.f32 %v2662, %v2614
    %v2679 = vadd.f32 %v2663, %v2619
    %v2680 = vadd.f32 %v2664, %v2622
    %v2681 = vadd.f32 %v2665, %v2627
    %v2682 = vadd.f32 %v2666, %v2630
    %v2683 = vadd.f32 %v2667, %v2635
    %v2684 = vadd.f32 %v2668, %v2638
    %v2685 = vadd.f32 %v2669, %v2643
    %v2686 = vadd.f32 %v2670, %v2646
    %v2687 = vadd.f32 %v2671, %v2651
    %v2688 = vadd.f32 %v2672, %v2654
    %v2689 = vadd.f32 %v2673, %v771
    %v2690 = vadd.f32 %v2674, %v771
    %v2691 = vadd.f32 %v2675, %v771
    %v2692 = vadd.f32 %v2676, %v771
    %v2693 = vadd.f32 %v2677, %v771
    %v2694 = vadd.f32 %v2678, %v771
    %v2695 = vadd.f32 %v2679, %v771
    %v2696 = vadd.f32 %v2680, %v771
    %v2697 = vadd.f32 %v2681, %v771
    %v2698 = vadd.f32 %v2682, %v771
    %v2699 = vadd.f32 %v2683, %v771
    %v2700 = vadd.f32 %v2684, %v771
    %v2701 = vadd.f32 %v2685, %v771
    %v2702 = vadd.f32 %v2686, %v771
    %v2703 = vadd.f32 %v2687, %v771
    %v2704 = vadd.f32 %v2688, %v771
    %v2705 = vmax.f32 %v2689, 0.0
    %v2706 = vmax.f32 %v2690, 0.0
    %v2707 = vmax.f32 %v2691, 0.0
    %v2708 = vmax.f32 %v2692, 0.0
    %v2709 = vmax.f32 %v2693, 0.0
    %v2710 = vmax.f32 %v2694, 0.0
    %v2711 = vmax.f32 %v2695, 0.0
    %v2712 = vmax.f32 %v2696, 0.0
    %v2713 = vmax.f32 %v2697, 0.0
    %v2714 = vmax.f32 %v2698, 0.0
    %v2715 = vmax.f32 %v2699, 0.0
    %v2716 = vmax.f32 %v2700, 0.0
    %v2717 = vmax.f32 %v2701, 0.0
    %v2718 = vmax.f32 %v2702, 0.0
    %v2719 = vmax.f32 %v2703, 0.0
    %v2720 = vmax.f32 %v2704, 0.0
    %v2721 = vmul.f32 %v2705, 0.1
    %v2722 = vmul.f32 %v2706, 0.1
    %v2723 = vmul.f32 %v2707, 0.1
    %v2724 = vmul.f32 %v2708, 0.1
    %v2725 = vmul.f32 %v2709, 0.1
    %v2726 = vmul.f32 %v2710, 0.1
    %v2727 = vmul.f32 %v2711, 0.1
    %v2728 = vmul.f32 %v2712, 0.1
    %v2729 = vmul.f32 %v2713, 0.1
    %v2730 = vmul.f32 %v2714, 0.1
    %v2731 = vmul.f32 %v2715, 0.1
    %v2732 = vmul.f32 %v2716, 0.1
    %v2733 = vmul.f32 %v2717, 0.1
    %v2734 = vmul.f32 %v2718, 0.1
    %v2735 = vmul.f32 %v2719, 0.1
    %v2736 = vmul.f32 %v2720, 0.1
    %v2737 = vadd.f32 %v1782, %v2721
    %v2738 = vadd.f32 %v1783, %v2722
    %v2739 = vadd.f32 %v1784, %v2723
    %v2740 = vadd.f32 %v1785, %v2724
    %v2741 = vadd.f32 %v1786, %v2725
    %v2742 = vadd.f32 %v1787, %v2726
    %v2743 = vadd.f32 %v1788, %v2727
    %v2744 = vadd.f32 %v1789, %v2728
    %v2745 = vadd.f32 %v1790, %v2729
    %v2746 = vadd.f32 %v1791, %v2730
    %v2747 = vadd.f32 %v1792, %v2731
    %v2748 = vadd.f32 %v1793, %v2732
    %v2749 = vadd.f32 %v1794, %v2733
    %v2750 = vadd.f32 %v1795, %v2734
    %v2751 = vadd.f32 %v1796, %v2735
    %v2752 = vadd.f32 %v1797, %v2736
    %v2753 = vmul.f32 %v2737, 0.1
    %v2754 = vmul.f32 %v2738, 0.1
    %v2755 = vmul.f32 %v2739, 0.1
    %v2756 = vmul.f32 %v2740, 0.1
    %v2757 = vmul.f32 %v2741, 0.1
    %v2758 = vmul.f32 %v2742, 0.1
    %v2759 = vmul.f32 %v2743, 0.1
    %v2760 = vmul.f32 %v2744, 0.1
    %v2761 = vmul.f32 %v2745, 0.1
    %v2762 = vmul.f32 %v2746, 0.1
    %v2763 = vmul.f32 %v2747, 0.1
    %v2764 = vmul.f32 %v2748, 0.1
    %v2765 = vmul.f32 %v2749, 0.1
    %v2766 = vmul.f32 %v2750, 0.1
    %v2767 = vmul.f32 %v2751, 0.1
    %v2768 = vmul.f32 %v2752, 0.1
    %v2769 = vadd.f32 %v1814, %v2753
    %v2770 = vadd.f32 %v1815, %v2754
    %v2771 = vadd.f32 %v1816, %v2755
    %v2772 = vadd.f32 %v1817, %v2756
    %v2773 = vadd.f32 %v1818, %v2757
    %v2774 = vadd.f32 %v1819, %v2758
    %v2775 = vadd.f32 %v1820, %v2759
    %v2776 = vadd.f32 %v1821, %v2760
    %v2777 = vadd.f32 %v1822, %v2761
    %v2778 = vadd.f32 %v1823, %v2762
    %v2779 = vadd.f32 %v1824, %v2763
    %v2780 = vadd.f32 %v1825, %v2764
    %v2781 = vadd.f32 %v1826, %v2765
    %v2782 = vadd.f32 %v1827, %v2766
    %v2783 = vadd.f32 %v1828, %v2767
    %v2784 = vadd.f32 %v1829, %v2768
    %v2785 = vmul.f32 %v873, %v2006
    %v2786 = vmul.f32 %v873, %v2007
    %v2787 = vmul.f32 %v873, %v2008
    %v2788 = vmul.f32 %v873, %v2009
    %v2789 = vmul.f32 %v873, %v2010
    %v2790 = vmul.f32 %v873, %v2011
    %v2791 = vmul.f32 %v873, %v2012
    %v2792 = vmul.f32 %v873, %v2013
    %v2793 = vmul.f32 %v873, %v2014
    %v2794 = vmul.f32 %v873, %v2015
    %v2795 = vmul.f32 %v873, %v2016
    %v2796 = vmul.f32 %v873, %v2017
    %v2797 = vmul.f32 %v873, %v2018
    %v2798 = vmul.f32 %v873, %v2019
    %v2799 = vmul.f32 %v873, %v2020
    %v2800 = vmul.f32 %v873, %v2021
    %2817 = vrot.lane.b32.xlu0 %v2595, 96
    %v2818 = vpop.permute.xlu0 %2817
    %2819 = vrot.lane.b32.xlu0 %v2598, 96
    %v2820 = vpop.permute.xlu0 %2819
    %2821 = vrot.lane.b32.xlu0 %v2603, 96
    %v2822 = vpop.permute.xlu0 %2821
    %2823 = vrot.lane.b32.xlu0 %v2606, 96
    %v2824 = vpop.permute.xlu0 %2823
    %2825 = vrot.lane.b32.xlu0 %v2611, 96
    %v2826 = vpop.permute.xlu0 %2825
    %2827 = vrot.lane.b32.xlu0 %v2614, 96
    %v2828 = vpop.permute.xlu0 %2827
    %2829 = vrot.lane.b32.xlu0 %v2619, 96
    %v2830 = vpop.permute.xlu0 %2829
    %2831 = vrot.lane.b32.xlu0 %v2622, 96
    %v2832 = vpop.permute.xlu0 %2831
    %2833 = vrot.lane.b32.xlu0 %v2627, 96
    %v2834 = vpop.permute.xlu0 %2833
    %2835 = vrot.lane.b32.xlu0 %v2630, 96
    %v2836 = vpop.permute.xlu0 %2835
    %2837 = vrot.lane.b32.xlu0 %v2635, 96
    %v2838 = vpop.permute.xlu0 %2837
    %2839 = vrot.lane.b32.xlu0 %v2638, 96
    %v2840 = vpop.permute.xlu0 %2839
    %2841 = vrot.lane.b32.xlu0 %v2643, 96
    %v2842 = vpop.permute.xlu0 %2841
    %2843 = vrot.lane.b32.xlu0 %v2646, 96
    %v2844 = vpop.permute.xlu0 %2843
    %2845 = vrot.lane.b32.xlu0 %v2651, 96
    %v2846 = vpop.permute.xlu0 %2845
    %2847 = vrot.lane.b32.xlu0 %v2654, 96
    %v2848 = vpop.permute.xlu0 %2847
    %v2865 = vadd.f32 %v2785, %v2818
    %v2866 = vadd.f32 %v2786, %v2820
    %v2867 = vadd.f32 %v2787, %v2822
    %v2868 = vadd.f32 %v2788, %v2824
    %v2869 = vadd.f32 %v2789, %v2826
    %v2870 = vadd.f32 %v2790, %v2828
    %v2871 = vadd.f32 %v2791, %v2830
    %v2872 = vadd.f32 %v2792, %v2832
    %v2873 = vadd.f32 %v2793, %v2834
    %v2874 = vadd.f32 %v2794, %v2836
    %v2875 = vadd.f32 %v2795, %v2838
    %v2876 = vadd.f32 %v2796, %v2840
    %v2877 = vadd.f32 %v2797, %v2842
    %v2878 = vadd.f32 %v2798, %v2844
    %v2879 = vadd.f32 %v2799, %v2846
    %v2880 = vadd.f32 %v2800, %v2848
    %v2881 = vadd.f32 %v2865, %v960
    %v2882 = vadd.f32 %v2866, %v960
    %v2883 = vadd.f32 %v2867, %v960
    %v2884 = vadd.f32 %v2868, %v960
    %v2885 = vadd.f32 %v2869, %v960
    %v2886 = vadd.f32 %v2870, %v960
    %v2887 = vadd.f32 %v2871, %v960
    %v2888 = vadd.f32 %v2872, %v960
    %v2889 = vadd.f32 %v2873, %v960
    %v2890 = vadd.f32 %v2874, %v960
    %v2891 = vadd.f32 %v2875, %v960
    %v2892 = vadd.f32 %v2876, %v960
    %v2893 = vadd.f32 %v2877, %v960
    %v2894 = vadd.f32 %v2878, %v960
    %v2895 = vadd.f32 %v2879, %v960
    %v2896 = vadd.f32 %v2880, %v960
    %v2897 = vmax.f32 %v2881, 0.0
    %v2898 = vmax.f32 %v2882, 0.0
    %v2899 = vmax.f32 %v2883, 0.0
    %v2900 = vmax.f32 %v2884, 0.0
    %v2901 = vmax.f32 %v2885, 0.0
    %v2902 = vmax.f32 %v2886, 0.0
    %v2903 = vmax.f32 %v2887, 0.0
    %v2904 = vmax.f32 %v2888, 0.0
    %v2905 = vmax.f32 %v2889, 0.0
    %v2906 = vmax.f32 %v2890, 0.0
    %v2907 = vmax.f32 %v2891, 0.0
    %v2908 = vmax.f32 %v2892, 0.0
    %v2909 = vmax.f32 %v2893, 0.0
    %v2910 = vmax.f32 %v2894, 0.0
    %v2911 = vmax.f32 %v2895, 0.0
    %v2912 = vmax.f32 %v2896, 0.0
    %v2913 = vmul.f32 %v2897, 0.1
    %v2914 = vmul.f32 %v2898, 0.1
    %v2915 = vmul.f32 %v2899, 0.1
    %v2916 = vmul.f32 %v2900, 0.1
    %v2917 = vmul.f32 %v2901, 0.1
    %v2918 = vmul.f32 %v2902, 0.1
    %v2919 = vmul.f32 %v2903, 0.1
    %v2920 = vmul.f32 %v2904, 0.1
    %v2921 = vmul.f32 %v2905, 0.1
    %v2922 = vmul.f32 %v2906, 0.1
    %v2923 = vmul.f32 %v2907, 0.1
    %v2924 = vmul.f32 %v2908, 0.1
    %v2925 = vmul.f32 %v2909, 0.1
    %v2926 = vmul.f32 %v2910, 0.1
    %v2927 = vmul.f32 %v2911, 0.1
    %v2928 = vmul.f32 %v2912, 0.1
    %v2929 = vadd.f32 %v1974, %v2913
    %v2930 = vadd.f32 %v1975, %v2914
    %v2931 = vadd.f32 %v1976, %v2915
    %v2932 = vadd.f32 %v1977, %v2916
    %v2933 = vadd.f32 %v1978, %v2917
    %v2934 = vadd.f32 %v1979, %v2918
    %v2935 = vadd.f32 %v1980, %v2919
    %v2936 = vadd.f32 %v1981, %v2920
    %v2937 = vadd.f32 %v1982, %v2921
    %v2938 = vadd.f32 %v1983, %v2922
    %v2939 = vadd.f32 %v1984, %v2923
    %v2940 = vadd.f32 %v1985, %v2924
    %v2941 = vadd.f32 %v1986, %v2925
    %v2942 = vadd.f32 %v1987, %v2926
    %v2943 = vadd.f32 %v1988, %v2927
    %v2944 = vadd.f32 %v1989, %v2928
    %v2945 = vmul.f32 %v2929, 0.1
    %v2946 = vmul.f32 %v2930, 0.1
    %v2947 = vmul.f32 %v2931, 0.1
    %v2948 = vmul.f32 %v2932, 0.1
    %v2949 = vmul.f32 %v2933, 0.1
    %v2950 = vmul.f32 %v2934, 0.1
    %v2951 = vmul.f32 %v2935, 0.1
    %v2952 = vmul.f32 %v2936, 0.1
    %v2953 = vmul.f32 %v2937, 0.1
    %v2954 = vmul.f32 %v2938, 0.1
    %v2955 = vmul.f32 %v2939, 0.1
    %v2956 = vmul.f32 %v2940, 0.1
    %v2957 = vmul.f32 %v2941, 0.1
    %v2958 = vmul.f32 %v2942, 0.1
    %v2959 = vmul.f32 %v2943, 0.1
    %v2960 = vmul.f32 %v2944, 0.1
    %v2961 = vadd.f32 %v2006, %v2945
    %v2962 = vadd.f32 %v2007, %v2946
    %v2963 = vadd.f32 %v2008, %v2947
    %v2964 = vadd.f32 %v2009, %v2948
    %v2965 = vadd.f32 %v2010, %v2949
    %v2966 = vadd.f32 %v2011, %v2950
    %v2967 = vadd.f32 %v2012, %v2951
    %v2968 = vadd.f32 %v2013, %v2952
    %v2969 = vadd.f32 %v2014, %v2953
    %v2970 = vadd.f32 %v2015, %v2954
    %v2971 = vadd.f32 %v2016, %v2955
    %v2972 = vadd.f32 %v2017, %v2956
    %v2973 = vadd.f32 %v2018, %v2957
    %v2974 = vadd.f32 %v2019, %v2958
    %v2975 = vadd.f32 %v2020, %v2959
    %v2976 = vadd.f32 %v2021, %v2960
    %v2977 = vmul.f32 %v1062, %v2263
    %v2978 = vmul.f32 %v1062, %v2264
    %v2979 = vmul.f32 %v1062, %v2265
    %v2980 = vmul.f32 %v1062, %v2266
    %v2981 = vmul.f32 %v1062, %v2267
    %v2982 = vmul.f32 %v1062, %v2268
    %v2983 = vmul.f32 %v1062, %v2269
    %v2984 = vmul.f32 %v1062, %v2270
    %v2985 = vmul.f32 %v1062, %v2271
    %v2986 = vmul.f32 %v1062, %v2272
    %v2987 = vmul.f32 %v1062, %v2273
    %v2988 = vmul.f32 %v1062, %v2274
    %v2989 = vmul.f32 %v1062, %v2275
    %v2990 = vmul.f32 %v1062, %v2276
    %v2991 = vmul.f32 %v1062, %v2277
    %v2992 = vmul.f32 %v1062, %v2278
    %v2993 = vpack.c.bf16 %v2770, %v2769
    %v2994 = vpack.c.bf16 %v2772, %v2771
    %v2995 = vpack.c.bf16 %v2774, %v2773
    %v2996 = vpack.c.bf16 %v2776, %v2775
    %v2997 = vpack.c.bf16 %v2778, %v2777
    %v2998 = vpack.c.bf16 %v2780, %v2779
    %v2999 = vpack.c.bf16 %v2782, %v2781
    %v3000 = vpack.c.bf16 %v2784, %v2783
    %v3002 = vsel %vm219, %v2993, 0
    %v3005 = vsel %vm219, %v2994, 0
    %v3008 = vsel %vm219, %v2995, 0
    %v3011 = vsel %vm219, %v2996, 0
    %v3014 = vsel %vm219, %v2997, 0
    %v3017 = vsel %vm219, %v2998, 0
    %v3020 = vsel %vm219, %v2999, 0
    %v3023 = vsel %vm219, %v3000, 0
    %3025 = vmatprep.subr.bf16.mxu0 0
    %3026 = vmatpush1.bf16.msra.mxu0 %v1081
    %3027 = vmatprep.subr.bf16.mxu0 0
    %3028 = vmatpush1.bf16.msra.mxu0 %v1082
    %3029 = vmatprep.subr.bf16.mxu0 0
    %3030 = vmatpush1.bf16.msra.mxu0 0
    %3031 = vmatprep.subr.bf16.mxu0 0
    %3032 = vmatpush1.bf16.msra.mxu0 0
    %3033 = vmatprep.subr.bf16.mxu0 0
    %3034 = vmatpush1.bf16.msra.mxu0 0
    %3035 = vmatprep.subr.bf16.mxu0 0
    %3036 = vmatpush1.bf16.msra.mxu0 0
    %3037 = vmatprep.subr.bf16.mxu0 0
    %3038 = vmatpush1.bf16.msra.mxu0 0
    %3039 = vmatprep.subr.bf16.mxu0 0
    %3040 = vmatpush1.bf16.msra.mxu0 0
    %3041 = vmatprep.subr.bf16.mxu0 0
    %3042 = vmatpush1.bf16.msra.mxu0 0
    %3043 = vmatprep.subr.bf16.mxu0 0
    %3044 = vmatpush1.bf16.msra.mxu0 0
    %3045 = vmatprep.subr.bf16.mxu0 0
    %3046 = vmatpush1.bf16.msra.mxu0 0
    %3047 = vmatprep.subr.bf16.mxu0 0
    %3048 = vmatpush1.bf16.msra.mxu0 0
    %3049 = vmatprep.subr.bf16.mxu0 0
    %3050 = vmatpush1.bf16.msra.mxu0 0
    %3051 = vmatprep.subr.bf16.mxu0 0
    %3052 = vmatpush1.bf16.msra.mxu0 0
    %3053 = vmatprep.subr.bf16.mxu0 0
    %3054 = vmatpush1.bf16.msra.mxu0 0
    %3055 = vmatprep.subr.bf16.mxu0 0
    %3056 = vmatpush1.bf16.msra.mxu0 0
    %3057 = vmatprep.mubr.bf16.mxu0 0
    %3058 = vmatmul.mubr.bf16.gmra.mrb[0].mxu0 %v3002
    %v3059 = vpop.f32.mrb[0].mxu0
    %v3060 = vadd.f32 0.0, %v3059
    %v3061 = vpop.f32.mrb[0].mxu0
    %v3062 = vpop.f32.mrb[0].mxu0
    %v3063 = vadd.f32 0.0, %v3062
    %v3064 = vpop.f32.mrb[0].mxu0
    %3065 = vmatprep.mubr.bf16.mxu0 0
    %3066 = vmatmul.mubr.bf16.gmra.mrb[0].mxu0 %v3005
    %v3067 = vpop.f32.mrb[0].mxu0
    %v3068 = vadd.f32 0.0, %v3067
    %v3069 = vpop.f32.mrb[0].mxu0
    %v3070 = vpop.f32.mrb[0].mxu0
    %v3071 = vadd.f32 0.0, %v3070
    %v3072 = vpop.f32.mrb[0].mxu0
    %3073 = vmatprep.mubr.bf16.mxu0 0
    %3074 = vmatmul.mubr.bf16.gmra.mrb[0].mxu0 %v3008
    %v3075 = vpop.f32.mrb[0].mxu0
    %v3076 = vadd.f32 0.0, %v3075
    %v3077 = vpop.f32.mrb[0].mxu0
    %v3078 = vpop.f32.mrb[0].mxu0
    %v3079 = vadd.f32 0.0, %v3078
    %v3080 = vpop.f32.mrb[0].mxu0
    %3081 = vmatprep.mubr.bf16.mxu0 0
    %3082 = vmatmul.mubr.bf16.gmra.mrb[0].mxu0 %v3011
    %v3083 = vpop.f32.mrb[0].mxu0
    %v3084 = vadd.f32 0.0, %v3083
    %v3085 = vpop.f32.mrb[0].mxu0
    %v3086 = vpop.f32.mrb[0].mxu0
    %v3087 = vadd.f32 0.0, %v3086
    %v3088 = vpop.f32.mrb[0].mxu0
    %3089 = vmatprep.mubr.bf16.mxu0 0
    %3090 = vmatmul.mubr.bf16.gmra.mrb[0].mxu0 %v3014
    %v3091 = vpop.f32.mrb[0].mxu0
    %v3092 = vadd.f32 0.0, %v3091
    %v3093 = vpop.f32.mrb[0].mxu0
    %v3094 = vpop.f32.mrb[0].mxu0
    %v3095 = vadd.f32 0.0, %v3094
    %v3096 = vpop.f32.mrb[0].mxu0
    %3097 = vmatprep.mubr.bf16.mxu0 0
    %3098 = vmatmul.mubr.bf16.gmra.mrb[0].mxu0 %v3017
    %v3099 = vpop.f32.mrb[0].mxu0
    %v3100 = vadd.f32 0.0, %v3099
    %v3101 = vpop.f32.mrb[0].mxu0
    %v3102 = vpop.f32.mrb[0].mxu0
    %v3103 = vadd.f32 0.0, %v3102
    %v3104 = vpop.f32.mrb[0].mxu0
    %3105 = vmatprep.mubr.bf16.mxu0 0
    %3106 = vmatmul.mubr.bf16.gmra.mrb[0].mxu0 %v3020
    %v3107 = vpop.f32.mrb[0].mxu0
    %v3108 = vadd.f32 0.0, %v3107
    %v3109 = vpop.f32.mrb[0].mxu0
    %v3110 = vpop.f32.mrb[0].mxu0
    %v3111 = vadd.f32 0.0, %v3110
    %v3112 = vpop.f32.mrb[0].mxu0
    %3113 = vmatprep.mubr.bf16.mxu0 0
    %3114 = vmatmul.mubr.bf16.gmra.mrb[0].mxu0 %v3023
    %v3115 = vpop.f32.mrb[0].mxu0
    %v3116 = vadd.f32 0.0, %v3115
    %v3117 = vpop.f32.mrb[0].mxu0
    %v3118 = vpop.f32.mrb[0].mxu0
    %v3119 = vadd.f32 0.0, %v3118
    %v3120 = vpop.f32.mrb[0].mxu0
    %3121 = vdwg.mxu0
    %v3122 = vadd.f32 %v2977, %v3060
    %v3123 = vadd.f32 %v2978, %v3063
    %v3124 = vadd.f32 %v2979, %v3068
    %v3125 = vadd.f32 %v2980, %v3071
    %v3126 = vadd.f32 %v2981, %v3076
    %v3127 = vadd.f32 %v2982, %v3079
    %v3128 = vadd.f32 %v2983, %v3084
    %v3129 = vadd.f32 %v2984, %v3087
    %v3130 = vadd.f32 %v2985, %v3092
    %v3131 = vadd.f32 %v2986, %v3095
    %v3132 = vadd.f32 %v2987, %v3100
    %v3133 = vadd.f32 %v2988, %v3103
    %v3134 = vadd.f32 %v2989, %v3108
    %v3135 = vadd.f32 %v2990, %v3111
    %v3136 = vadd.f32 %v2991, %v3116
    %v3137 = vadd.f32 %v2992, %v3119
    %v3138 = vadd.f32 %v3122, %v1226
    %v3139 = vadd.f32 %v3123, %v1226
    %v3140 = vadd.f32 %v3124, %v1226
    %v3141 = vadd.f32 %v3125, %v1226
    %v3142 = vadd.f32 %v3126, %v1226
    %v3143 = vadd.f32 %v3127, %v1226
    %v3144 = vadd.f32 %v3128, %v1226
    %v3145 = vadd.f32 %v3129, %v1226
    %v3146 = vadd.f32 %v3130, %v1226
    %v3147 = vadd.f32 %v3131, %v1226
    %v3148 = vadd.f32 %v3132, %v1226
    %v3149 = vadd.f32 %v3133, %v1226
    %v3150 = vadd.f32 %v3134, %v1226
    %v3151 = vadd.f32 %v3135, %v1226
    %v3152 = vadd.f32 %v3136, %v1226
    %v3153 = vadd.f32 %v3137, %v1226
    %v3154 = vmax.f32 %v3138, 0.0
    %v3155 = vmax.f32 %v3139, 0.0
    %v3156 = vmax.f32 %v3140, 0.0
    %v3157 = vmax.f32 %v3141, 0.0
    %v3158 = vmax.f32 %v3142, 0.0
    %v3159 = vmax.f32 %v3143, 0.0
    %v3160 = vmax.f32 %v3144, 0.0
    %v3161 = vmax.f32 %v3145, 0.0
    %v3162 = vmax.f32 %v3146, 0.0
    %v3163 = vmax.f32 %v3147, 0.0
    %v3164 = vmax.f32 %v3148, 0.0
    %v3165 = vmax.f32 %v3149, 0.0
    %v3166 = vmax.f32 %v3150, 0.0
    %v3167 = vmax.f32 %v3151, 0.0
    %v3168 = vmax.f32 %v3152, 0.0
    %v3169 = vmax.f32 %v3153, 0.0
    %v3170 = vmul.f32 %v3154, 0.1
    %v3171 = vmul.f32 %v3155, 0.1
    %v3172 = vmul.f32 %v3156, 0.1
    %v3173 = vmul.f32 %v3157, 0.1
    %v3174 = vmul.f32 %v3158, 0.1
    %v3175 = vmul.f32 %v3159, 0.1
    %v3176 = vmul.f32 %v3160, 0.1
    %v3177 = vmul.f32 %v3161, 0.1
    %v3178 = vmul.f32 %v3162, 0.1
    %v3179 = vmul.f32 %v3163, 0.1
    %v3180 = vmul.f32 %v3164, 0.1
    %v3181 = vmul.f32 %v3165, 0.1
    %v3182 = vmul.f32 %v3166, 0.1
    %v3183 = vmul.f32 %v3167, 0.1
    %v3184 = vmul.f32 %v3168, 0.1
    %v3185 = vmul.f32 %v3169, 0.1
    %v3186 = vadd.f32 %v2231, %v3170
    %v3187 = vadd.f32 %v2232, %v3171
    %v3188 = vadd.f32 %v2233, %v3172
    %v3189 = vadd.f32 %v2234, %v3173
    %v3190 = vadd.f32 %v2235, %v3174
    %v3191 = vadd.f32 %v2236, %v3175
    %v3192 = vadd.f32 %v2237, %v3176
    %v3193 = vadd.f32 %v2238, %v3177
    %v3194 = vadd.f32 %v2239, %v3178
    %v3195 = vadd.f32 %v2240, %v3179
    %v3196 = vadd.f32 %v2241, %v3180
    %v3197 = vadd.f32 %v2242, %v3181
    %v3198 = vadd.f32 %v2243, %v3182
    %v3199 = vadd.f32 %v2244, %v3183
    %v3200 = vadd.f32 %v2245, %v3184
    %v3201 = vadd.f32 %v2246, %v3185
    %v3202 = vmul.f32 %v3186, 0.1
    %v3203 = vmul.f32 %v3187, 0.1
    %v3204 = vmul.f32 %v3188, 0.1
    %v3205 = vmul.f32 %v3189, 0.1
    %v3206 = vmul.f32 %v3190, 0.1
    %v3207 = vmul.f32 %v3191, 0.1
    %v3208 = vmul.f32 %v3192, 0.1
    %v3209 = vmul.f32 %v3193, 0.1
    %v3210 = vmul.f32 %v3194, 0.1
    %v3211 = vmul.f32 %v3195, 0.1
    %v3212 = vmul.f32 %v3196, 0.1
    %v3213 = vmul.f32 %v3197, 0.1
    %v3214 = vmul.f32 %v3198, 0.1
    %v3215 = vmul.f32 %v3199, 0.1
    %v3216 = vmul.f32 %v3200, 0.1
    %v3217 = vmul.f32 %v3201, 0.1
    %v3218 = vadd.f32 %v2263, %v3202
    %v3219 = vadd.f32 %v2264, %v3203
    %v3220 = vadd.f32 %v2265, %v3204
    %v3221 = vadd.f32 %v2266, %v3205
    %v3222 = vadd.f32 %v2267, %v3206
    %v3223 = vadd.f32 %v2268, %v3207
    %v3224 = vadd.f32 %v2269, %v3208
    %v3225 = vadd.f32 %v2270, %v3209
    %v3226 = vadd.f32 %v2271, %v3210
    %v3227 = vadd.f32 %v2272, %v3211
    %v3228 = vadd.f32 %v2273, %v3212
    %v3229 = vadd.f32 %v2274, %v3213
    %v3230 = vadd.f32 %v2275, %v3214
    %v3231 = vadd.f32 %v2276, %v3215
    %v3232 = vadd.f32 %v2277, %v3216
    %v3233 = vadd.f32 %v2278, %v3217
    %v3234 = vpack.c.bf16 %v2433, %v2432
    %v3235 = vpack.c.bf16 %v2435, %v2434
    %v3236 = vpack.c.bf16 %v2437, %v2436
    %v3237 = vpack.c.bf16 %v2439, %v2438
    %v3238 = vpack.c.bf16 %v2441, %v2440
    %v3239 = vpack.c.bf16 %v2443, %v2442
    %v3240 = vpack.c.bf16 %v2445, %v2444
    %v3241 = vpack.c.bf16 %v2447, %v2446
    %3242 = vmatprep.subr.bf16.mxu0 0
    %3243 = vmatpush1.bf16.msra.mxu0 %v3234
    %3244 = vmatprep.subr.bf16.mxu0 0
    %3245 = vmatpush1.bf16.msra.mxu0 %v3235
    %3246 = vmatprep.subr.bf16.mxu0 0
    %3247 = vmatpush1.bf16.msra.mxu0 %v3236
    %3248 = vmatprep.subr.bf16.mxu0 0
    %3249 = vmatpush1.bf16.msra.mxu0 %v3237
    %3250 = vmatprep.subr.bf16.mxu0 0
    %3251 = vmatpush1.bf16.msra.mxu0 %v3238
    %3252 = vmatprep.subr.bf16.mxu0 0
    %3253 = vmatpush1.bf16.msra.mxu0 %v3239
    %3254 = vmatprep.subr.bf16.mxu0 0
    %3255 = vmatpush1.bf16.msra.mxu0 %v3240
    %3256 = vmatprep.subr.bf16.mxu0 0
    %3257 = vmatpush1.bf16.msra.mxu0 %v3241
    %3258 = vmatprep.subr.bf16.mxu0 0
    %3259 = vmatpush1.bf16.msra.mxu0 0
    %3260 = vmatprep.subr.bf16.mxu0 0
    %3261 = vmatpush1.bf16.msra.mxu0 0
    %3262 = vmatprep.subr.bf16.mxu0 0
    %3263 = vmatpush1.bf16.msra.mxu0 0
    %3264 = vmatprep.subr.bf16.mxu0 0
    %3265 = vmatpush1.bf16.msra.mxu0 0
    %3266 = vmatprep.subr.bf16.mxu0 0
    %3267 = vmatpush1.bf16.msra.mxu0 0
    %3268 = vmatprep.subr.bf16.mxu0 0
    %3269 = vmatpush1.bf16.msra.mxu0 0
    %3270 = vmatprep.subr.bf16.mxu0 0
    %3271 = vmatpush1.bf16.msra.mxu0 0
    %3272 = vmatprep.subr.bf16.mxu0 0
    %3273 = vmatpush1.bf16.msra.mxu0 0
    %3274 = vmatprep.mubr.bf16.mxu0 0
    %3275 = vmatmul.mubr.bf16.gmra.mrb[0].mxu0 %v397
    %v3276 = vpop.f32.mrb[0].mxu0
    %v3277 = vadd.f32 0.0, %v3276
    %v3278 = vpop.f32.mrb[0].mxu0
    %v3279 = vpop.f32.mrb[0].mxu0
    %v3280 = vadd.f32 0.0, %v3279
    %v3281 = vpop.f32.mrb[0].mxu0
    %3282 = vmatprep.mubr.bf16.mxu0 0
    %3283 = vmatmul.mubr.bf16.gmra.mrb[0].mxu0 %v398
    %v3284 = vpop.f32.mrb[0].mxu0
    %v3285 = vadd.f32 0.0, %v3284
    %v3286 = vpop.f32.mrb[0].mxu0
    %v3287 = vpop.f32.mrb[0].mxu0
    %v3288 = vadd.f32 0.0, %v3287
    %v3289 = vpop.f32.mrb[0].mxu0
    %3290 = vmatprep.mubr.bf16.mxu0 0
    %3291 = vmatmul.mubr.bf16.gmra.mrb[0].mxu0 %v399
    %v3292 = vpop.f32.mrb[0].mxu0
    %v3293 = vadd.f32 0.0, %v3292
    %v3294 = vpop.f32.mrb[0].mxu0
    %v3295 = vpop.f32.mrb[0].mxu0
    %v3296 = vadd.f32 0.0, %v3295
    %v3297 = vpop.f32.mrb[0].mxu0
    %3298 = vmatprep.mubr.bf16.mxu0 0
    %3299 = vmatmul.mubr.bf16.gmra.mrb[0].mxu0 %v400
    %v3300 = vpop.f32.mrb[0].mxu0
    %v3301 = vadd.f32 0.0, %v3300
    %v3302 = vpop.f32.mrb[0].mxu0
    %v3303 = vpop.f32.mrb[0].mxu0
    %v3304 = vadd.f32 0.0, %v3303
    %v3305 = vpop.f32.mrb[0].mxu0
    %3306 = vmatprep.mubr.bf16.mxu0 0
    %3307 = vmatmul.mubr.bf16.gmra.mrb[0].mxu0 %v401
    %v3308 = vpop.f32.mrb[0].mxu0
    %v3309 = vadd.f32 0.0, %v3308
    %v3310 = vpop.f32.mrb[0].mxu0
    %v3311 = vpop.f32.mrb[0].mxu0
    %v3312 = vadd.f32 0.0, %v3311
    %v3313 = vpop.f32.mrb[0].mxu0
    %3314 = vmatprep.mubr.bf16.mxu0 0
    %3315 = vmatmul.mubr.bf16.gmra.mrb[0].mxu0 %v402
    %v3316 = vpop.f32.mrb[0].mxu0
    %v3317 = vadd.f32 0.0, %v3316
    %v3318 = vpop.f32.mrb[0].mxu0
    %v3319 = vpop.f32.mrb[0].mxu0
    %v3320 = vadd.f32 0.0, %v3319
    %v3321 = vpop.f32.mrb[0].mxu0
    %3322 = vmatprep.mubr.bf16.mxu0 0
    %3323 = vmatmul.mubr.bf16.gmra.mrb[0].mxu0 %v403
    %v3324 = vpop.f32.mrb[0].mxu0
    %v3325 = vadd.f32 0.0, %v3324
    %v3326 = vpop.f32.mrb[0].mxu0
    %v3327 = vpop.f32.mrb[0].mxu0
    %v3328 = vadd.f32 0.0, %v3327
    %v3329 = vpop.f32.mrb[0].mxu0
    %3330 = vmatprep.mubr.bf16.mxu0 0
    %3331 = vmatmul.mubr.bf16.gmra.mrb[0].mxu0 %v404
    %v3332 = vpop.f32.mrb[0].mxu0
    %v3333 = vadd.f32 0.0, %v3332
    %v3334 = vpop.f32.mrb[0].mxu0
    %v3335 = vpop.f32.mrb[0].mxu0
    %v3336 = vadd.f32 0.0, %v3335
    %v3337 = vpop.f32.mrb[0].mxu0
    %3338 = vdwg.mxu0
    %v3339 = vmul.f32 %v3277, 0.1
    %v3340 = vmul.f32 %v3280, 0.1
    %v3341 = vmul.f32 %v3285, 0.1
    %v3342 = vmul.f32 %v3288, 0.1
    %v3343 = vmul.f32 %v3293, 0.1
    %v3344 = vmul.f32 %v3296, 0.1
    %v3345 = vmul.f32 %v3301, 0.1
    %v3346 = vmul.f32 %v3304, 0.1
    %v3347 = vmul.f32 %v3309, 0.1
    %v3348 = vmul.f32 %v3312, 0.1
    %v3349 = vmul.f32 %v3317, 0.1
    %v3350 = vmul.f32 %v3320, 0.1
    %v3351 = vmul.f32 %v3325, 0.1
    %v3352 = vmul.f32 %v3328, 0.1
    %v3353 = vmul.f32 %v3333, 0.1
    %v3354 = vmul.f32 %v3336, 0.1
    %v3355 = vsub.f32 %v2400, %v3339
    %v3356 = vsub.f32 %v2401, %v3340
    %v3357 = vsub.f32 %v2402, %v3341
    %v3358 = vsub.f32 %v2403, %v3342
    %v3359 = vsub.f32 %v2404, %v3343
    %v3360 = vsub.f32 %v2405, %v3344
    %v3361 = vsub.f32 %v2406, %v3345
    %v3362 = vsub.f32 %v2407, %v3346
    %v3363 = vsub.f32 %v2408, %v3347
    %v3364 = vsub.f32 %v2409, %v3348
    %v3365 = vsub.f32 %v2410, %v3349
    %v3366 = vsub.f32 %v2411, %v3350
    %v3367 = vsub.f32 %v2412, %v3351
    %v3368 = vsub.f32 %v2413, %v3352
    %v3369 = vsub.f32 %v2414, %v3353
    %v3370 = vsub.f32 %v2415, %v3354
    %v3371 = vmul.f32 %v3355, 0.1
    %v3372 = vmul.f32 %v3356, 0.1
    %v3373 = vmul.f32 %v3357, 0.1
    %v3374 = vmul.f32 %v3358, 0.1
    %v3375 = vmul.f32 %v3359, 0.1
    %v3376 = vmul.f32 %v3360, 0.1
    %v3377 = vmul.f32 %v3361, 0.1
    %v3378 = vmul.f32 %v3362, 0.1
    %v3379 = vmul.f32 %v3363, 0.1
    %v3380 = vmul.f32 %v3364, 0.1
    %v3381 = vmul.f32 %v3365, 0.1
    %v3382 = vmul.f32 %v3366, 0.1
    %v3383 = vmul.f32 %v3367, 0.1
    %v3384 = vmul.f32 %v3368, 0.1
    %v3385 = vmul.f32 %v3369, 0.1
    %v3386 = vmul.f32 %v3370, 0.1
    %v3387 = vadd.f32 %v2432, %v3371
    %v3388 = vadd.f32 %v2433, %v3372
    %v3389 = vadd.f32 %v2434, %v3373
    %v3390 = vadd.f32 %v2435, %v3374
    %v3391 = vadd.f32 %v2436, %v3375
    %v3392 = vadd.f32 %v2437, %v3376
    %v3393 = vadd.f32 %v2438, %v3377
    %v3394 = vadd.f32 %v2439, %v3378
    %v3395 = vadd.f32 %v2440, %v3379
    %v3396 = vadd.f32 %v2441, %v3380
    %v3397 = vadd.f32 %v2442, %v3381
    %v3398 = vadd.f32 %v2443, %v3382
    %v3399 = vadd.f32 %v2444, %v3383
    %v3400 = vadd.f32 %v2445, %v3384
    %v3401 = vadd.f32 %v2446, %v3385
    %v3402 = vadd.f32 %v2447, %v3386
    %3419 = vrot.lane.b32.xlu0 %v3218, 32
    %v3420 = vpop.permute.xlu0 %3419
    %3421 = vrot.lane.b32.xlu0 %v3219, 32
    %v3422 = vpop.permute.xlu0 %3421
    %3423 = vrot.lane.b32.xlu0 %v3220, 32
    %v3424 = vpop.permute.xlu0 %3423
    %3425 = vrot.lane.b32.xlu0 %v3221, 32
    %v3426 = vpop.permute.xlu0 %3425
    %3427 = vrot.lane.b32.xlu0 %v3222, 32
    %v3428 = vpop.permute.xlu0 %3427
    %3429 = vrot.lane.b32.xlu0 %v3223, 32
    %v3430 = vpop.permute.xlu0 %3429
    %3431 = vrot.lane.b32.xlu0 %v3224, 32
    %v3432 = vpop.permute.xlu0 %3431
    %3433 = vrot.lane.b32.xlu0 %v3225, 32
    %v3434 = vpop.permute.xlu0 %3433
    %3435 = vrot.lane.b32.xlu0 %v3226, 32
    %v3436 = vpop.permute.xlu0 %3435
    %3437 = vrot.lane.b32.xlu0 %v3227, 32
    %v3438 = vpop.permute.xlu0 %3437
    %3439 = vrot.lane.b32.xlu0 %v3228, 32
    %v3440 = vpop.permute.xlu0 %3439
    %3441 = vrot.lane.b32.xlu0 %v3229, 32
    %v3442 = vpop.permute.xlu0 %3441
    %3443 = vrot.lane.b32.xlu0 %v3230, 32
    %v3444 = vpop.permute.xlu0 %3443
    %3445 = vrot.lane.b32.xlu0 %v3231, 32
    %v3446 = vpop.permute.xlu0 %3445
    %3447 = vrot.lane.b32.xlu0 %v3232, 32
    %v3448 = vpop.permute.xlu0 %3447
    %3449 = vrot.lane.b32.xlu0 %v3233, 32
    %v3450 = vpop.permute.xlu0 %3449
    %v3467 = vsel %vm219, %v3387, %v3420
    %v3468 = vsel %vm219, %v3388, %v3422
    %v3469 = vsel %vm219, %v3389, %v3424
    %v3470 = vsel %vm219, %v3390, %v3426
    %v3471 = vsel %vm219, %v3391, %v3428
    %v3472 = vsel %vm219, %v3392, %v3430
    %v3473 = vsel %vm219, %v3393, %v3432
    %v3474 = vsel %vm219, %v3394, %v3434
    %v3475 = vsel %vm219, %v3395, %v3436
    %v3476 = vsel %vm219, %v3396, %v3438
    %v3477 = vsel %vm219, %v3397, %v3440
    %v3478 = vsel %vm219, %v3398, %v3442
    %v3479 = vsel %vm219, %v3399, %v3444
    %v3480 = vsel %vm219, %v3400, %v3446
    %v3481 = vsel %vm219, %v3401, %v3448
    %v3482 = vsel %vm219, %v3402, %v3450
    %v3483 = vpack.c.bf16 %v3468, %v3467
    %v3484 = vpack.c.bf16 %v3470, %v3469
    %v3485 = vpack.c.bf16 %v3472, %v3471
    %v3486 = vpack.c.bf16 %v3474, %v3473
    %v3487 = vpack.c.bf16 %v3476, %v3475
    %v3488 = vpack.c.bf16 %v3478, %v3477
    %v3489 = vpack.c.bf16 %v3480, %v3479
    %v3490 = vpack.c.bf16 %v3482, %v3481
    %v3492 = vsel %vm622, %v3483, 0
    %v3495 = vsel %vm622, %v3484, 0
    %v3498 = vsel %vm622, %v3485, 0
    %v3501 = vsel %vm622, %v3486, 0
    %v3504 = vsel %vm622, %v3487, 0
    %v3507 = vsel %vm622, %v3488, 0
    %v3510 = vsel %vm622, %v3489, 0
    %v3513 = vsel %vm622, %v3490, 0
    %3515 = vmatprep.subr.bf16.mxu0 0
    %3516 = vmatpush1.bf16.msra.mxu0 %v614
    %3517 = vmatprep.subr.bf16.mxu0 0
    %3518 = vmatpush1.bf16.msra.mxu0 %v615
    %3519 = vmatprep.subr.bf16.mxu0 0
    %3520 = vmatpush1.bf16.msra.mxu0 %v616
    %3521 = vmatprep.subr.bf16.mxu0 0
    %3522 = vmatpush1.bf16.msra.mxu0 %v617
    %3523 = vmatprep.subr.bf16.mxu0 0
    %3524 = vmatpush1.bf16.msra.mxu0 0
    %3525 = vmatprep.subr.bf16.mxu0 0
    %3526 = vmatpush1.bf16.msra.mxu0 0
    %3527 = vmatprep.subr.bf16.mxu0 0
    %3528 = vmatpush1.bf16.msra.mxu0 0
    %3529 = vmatprep.subr.bf16.mxu0 0
    %3530 = vmatpush1.bf16.msra.mxu0 0
    %3531 = vmatprep.subr.bf16.mxu0 0
    %3532 = vmatpush1.bf16.msra.mxu0 0
    %3533 = vmatprep.subr.bf16.mxu0 0
    %3534 = vmatpush1.bf16.msra.mxu0 0
    %3535 = vmatprep.subr.bf16.mxu0 0
    %3536 = vmatpush1.bf16.msra.mxu0 0
    %3537 = vmatprep.subr.bf16.mxu0 0
    %3538 = vmatpush1.bf16.msra.mxu0 0
    %3539 = vmatprep.subr.bf16.mxu0 0
    %3540 = vmatpush1.bf16.msra.mxu0 0
    %3541 = vmatprep.subr.bf16.mxu0 0
    %3542 = vmatpush1.bf16.msra.mxu0 0
    %3543 = vmatprep.subr.bf16.mxu0 0
    %3544 = vmatpush1.bf16.msra.mxu0 0
    %3545 = vmatprep.subr.bf16.mxu0 0
    %3546 = vmatpush1.bf16.msra.mxu0 0
    %3547 = vmatprep.mubr.bf16.mxu0 0
    %3548 = vmatmul.mubr.bf16.gmra.mrb[0].mxu0 %v3492
    %v3549 = vpop.f32.mrb[0].mxu0
    %v3550 = vadd.f32 0.0, %v3549
    %v3551 = vpop.f32.mrb[0].mxu0
    %v3552 = vpop.f32.mrb[0].mxu0
    %v3553 = vadd.f32 0.0, %v3552
    %v3554 = vpop.f32.mrb[0].mxu0
    %3555 = vmatprep.mubr.bf16.mxu0 0
    %3556 = vmatmul.mubr.bf16.gmra.mrb[0].mxu0 %v3495
    %v3557 = vpop.f32.mrb[0].mxu0
    %v3558 = vadd.f32 0.0, %v3557
    %v3559 = vpop.f32.mrb[0].mxu0
    %v3560 = vpop.f32.mrb[0].mxu0
    %v3561 = vadd.f32 0.0, %v3560
    %v3562 = vpop.f32.mrb[0].mxu0
    %3563 = vmatprep.mubr.bf16.mxu0 0
    %3564 = vmatmul.mubr.bf16.gmra.mrb[0].mxu0 %v3498
    %v3565 = vpop.f32.mrb[0].mxu0
    %v3566 = vadd.f32 0.0, %v3565
    %v3567 = vpop.f32.mrb[0].mxu0
    %v3568 = vpop.f32.mrb[0].mxu0
    %v3569 = vadd.f32 0.0, %v3568
    %v3570 = vpop.f32.mrb[0].mxu0
    %3571 = vmatprep.mubr.bf16.mxu0 0
    %3572 = vmatmul.mubr.bf16.gmra.mrb[0].mxu0 %v3501
    %v3573 = vpop.f32.mrb[0].mxu0
    %v3574 = vadd.f32 0.0, %v3573
    %v3575 = vpop.f32.mrb[0].mxu0
    %v3576 = vpop.f32.mrb[0].mxu0
    %v3577 = vadd.f32 0.0, %v3576
    %v3578 = vpop.f32.mrb[0].mxu0
    %3579 = vmatprep.mubr.bf16.mxu0 0
    %3580 = vmatmul.mubr.bf16.gmra.mrb[0].mxu0 %v3504
    %v3581 = vpop.f32.mrb[0].mxu0
    %v3582 = vadd.f32 0.0, %v3581
    %v3583 = vpop.f32.mrb[0].mxu0
    %v3584 = vpop.f32.mrb[0].mxu0
    %v3585 = vadd.f32 0.0, %v3584
    %v3586 = vpop.f32.mrb[0].mxu0
    %3587 = vmatprep.mubr.bf16.mxu0 0
    %3588 = vmatmul.mubr.bf16.gmra.mrb[0].mxu0 %v3507
    %v3589 = vpop.f32.mrb[0].mxu0
    %v3590 = vadd.f32 0.0, %v3589
    %v3591 = vpop.f32.mrb[0].mxu0
    %v3592 = vpop.f32.mrb[0].mxu0
    %v3593 = vadd.f32 0.0, %v3592
    %v3594 = vpop.f32.mrb[0].mxu0
    %3595 = vmatprep.mubr.bf16.mxu0 0
    %3596 = vmatmul.mubr.bf16.gmra.mrb[0].mxu0 %v3510
    %v3597 = vpop.f32.mrb[0].mxu0
    %v3598 = vadd.f32 0.0, %v3597
    %v3599 = vpop.f32.mrb[0].mxu0
    %v3600 = vpop.f32.mrb[0].mxu0
    %v3601 = vadd.f32 0.0, %v3600
    %v3602 = vpop.f32.mrb[0].mxu0
    %3603 = vmatprep.mubr.bf16.mxu0 0
    %3604 = vmatmul.mubr.bf16.gmra.mrb[0].mxu0 %v3513
    %v3605 = vpop.f32.mrb[0].mxu0
    %v3606 = vadd.f32 0.0, %v3605
    %v3607 = vpop.f32.mrb[0].mxu0
    %v3608 = vpop.f32.mrb[0].mxu0
    %v3609 = vadd.f32 0.0, %v3608
    %v3610 = vpop.f32.mrb[0].mxu0
    %3611 = vdwg.mxu0
    %v3612 = vmul.f32 %v873, %v2961
    %v3613 = vmul.f32 %v873, %v2962
    %v3614 = vmul.f32 %v873, %v2963
    %v3615 = vmul.f32 %v873, %v2964
    %v3616 = vmul.f32 %v873, %v2965
    %v3617 = vmul.f32 %v873, %v2966
    %v3618 = vmul.f32 %v873, %v2967
    %v3619 = vmul.f32 %v873, %v2968
    %v3620 = vmul.f32 %v873, %v2969
    %v3621 = vmul.f32 %v873, %v2970
    %v3622 = vmul.f32 %v873, %v2971
    %v3623 = vmul.f32 %v873, %v2972
    %v3624 = vmul.f32 %v873, %v2973
    %v3625 = vmul.f32 %v873, %v2974
    %v3626 = vmul.f32 %v873, %v2975
    %v3627 = vmul.f32 %v873, %v2976
    %3644 = vrot.lane.b32.xlu0 %v3550, 96
    %v3645 = vpop.permute.xlu0 %3644
    %3646 = vrot.lane.b32.xlu0 %v3553, 96
    %v3647 = vpop.permute.xlu0 %3646
    %3648 = vrot.lane.b32.xlu0 %v3558, 96
    %v3649 = vpop.permute.xlu0 %3648
    %3650 = vrot.lane.b32.xlu0 %v3561, 96
    %v3651 = vpop.permute.xlu0 %3650
    %3652 = vrot.lane.b32.xlu0 %v3566, 96
    %v3653 = vpop.permute.xlu0 %3652
    %3654 = vrot.lane.b32.xlu0 %v3569, 96
    %v3655 = vpop.permute.xlu0 %3654
    %3656 = vrot.lane.b32.xlu0 %v3574, 96
    %v3657 = vpop.permute.xlu0 %3656
    %3658 = vrot.lane.b32.xlu0 %v3577, 96
    %v3659 = vpop.permute.xlu0 %3658
    %3660 = vrot.lane.b32.xlu0 %v3582, 96
    %v3661 = vpop.permute.xlu0 %3660
    %3662 = vrot.lane.b32.xlu0 %v3585, 96
    %v3663 = vpop.permute.xlu0 %3662
    %3664 = vrot.lane.b32.xlu0 %v3590, 96
    %v3665 = vpop.permute.xlu0 %3664
    %3666 = vrot.lane.b32.xlu0 %v3593, 96
    %v3667 = vpop.permute.xlu0 %3666
    %3668 = vrot.lane.b32.xlu0 %v3598, 96
    %v3669 = vpop.permute.xlu0 %3668
    %3670 = vrot.lane.b32.xlu0 %v3601, 96
    %v3671 = vpop.permute.xlu0 %3670
    %3672 = vrot.lane.b32.xlu0 %v3606, 96
    %v3673 = vpop.permute.xlu0 %3672
    %3674 = vrot.lane.b32.xlu0 %v3609, 96
    %v3675 = vpop.permute.xlu0 %3674
    %v3692 = vadd.f32 %v3612, %v3645
    %v3693 = vadd.f32 %v3613, %v3647
    %v3694 = vadd.f32 %v3614, %v3649
    %v3695 = vadd.f32 %v3615, %v3651
    %v3696 = vadd.f32 %v3616, %v3653
    %v3697 = vadd.f32 %v3617, %v3655
    %v3698 = vadd.f32 %v3618, %v3657
    %v3699 = vadd.f32 %v3619, %v3659
    %v3700 = vadd.f32 %v3620, %v3661
    %v3701 = vadd.f32 %v3621, %v3663
    %v3702 = vadd.f32 %v3622, %v3665
    %v3703 = vadd.f32 %v3623, %v3667
    %v3704 = vadd.f32 %v3624, %v3669
    %v3705 = vadd.f32 %v3625, %v3671
    %v3706 = vadd.f32 %v3626, %v3673
    %v3707 = vadd.f32 %v3627, %v3675
    %v3708 = vadd.f32 %v3692, %v960
    %v3709 = vadd.f32 %v3693, %v960
    %v3710 = vadd.f32 %v3694, %v960
    %v3711 = vadd.f32 %v3695, %v960
    %v3712 = vadd.f32 %v3696, %v960
    %v3713 = vadd.f32 %v3697, %v960
    %v3714 = vadd.f32 %v3698, %v960
    %v3715 = vadd.f32 %v3699, %v960
    %v3716 = vadd.f32 %v3700, %v960
    %v3717 = vadd.f32 %v3701, %v960
    %v3718 = vadd.f32 %v3702, %v960
    %v3719 = vadd.f32 %v3703, %v960
    %v3720 = vadd.f32 %v3704, %v960
    %v3721 = vadd.f32 %v3705, %v960
    %v3722 = vadd.f32 %v3706, %v960
    %v3723 = vadd.f32 %v3707, %v960
    %v3724 = vmax.f32 %v3708, 0.0
    %v3725 = vmax.f32 %v3709, 0.0
    %v3726 = vmax.f32 %v3710, 0.0
    %v3727 = vmax.f32 %v3711, 0.0
    %v3728 = vmax.f32 %v3712, 0.0
    %v3729 = vmax.f32 %v3713, 0.0
    %v3730 = vmax.f32 %v3714, 0.0
    %v3731 = vmax.f32 %v3715, 0.0
    %v3732 = vmax.f32 %v3716, 0.0
    %v3733 = vmax.f32 %v3717, 0.0
    %v3734 = vmax.f32 %v3718, 0.0
    %v3735 = vmax.f32 %v3719, 0.0
    %v3736 = vmax.f32 %v3720, 0.0
    %v3737 = vmax.f32 %v3721, 0.0
    %v3738 = vmax.f32 %v3722, 0.0
    %v3739 = vmax.f32 %v3723, 0.0
    %v3740 = vmul.f32 %v3724, 0.1
    %v3741 = vmul.f32 %v3725, 0.1
    %v3742 = vmul.f32 %v3726, 0.1
    %v3743 = vmul.f32 %v3727, 0.1
    %v3744 = vmul.f32 %v3728, 0.1
    %v3745 = vmul.f32 %v3729, 0.1
    %v3746 = vmul.f32 %v3730, 0.1
    %v3747 = vmul.f32 %v3731, 0.1
    %v3748 = vmul.f32 %v3732, 0.1
    %v3749 = vmul.f32 %v3733, 0.1
    %v3750 = vmul.f32 %v3734, 0.1
    %v3751 = vmul.f32 %v3735, 0.1
    %v3752 = vmul.f32 %v3736, 0.1
    %v3753 = vmul.f32 %v3737, 0.1
    %v3754 = vmul.f32 %v3738, 0.1
    %v3755 = vmul.f32 %v3739, 0.1
    %v3756 = vadd.f32 %v2929, %v3740
    %v3757 = vadd.f32 %v2930, %v3741
    %v3758 = vadd.f32 %v2931, %v3742
    %v3759 = vadd.f32 %v2932, %v3743
    %v3760 = vadd.f32 %v2933, %v3744
    %v3761 = vadd.f32 %v2934, %v3745
    %v3762 = vadd.f32 %v2935, %v3746
    %v3763 = vadd.f32 %v2936, %v3747
    %v3764 = vadd.f32 %v2937, %v3748
    %v3765 = vadd.f32 %v2938, %v3749
    %v3766 = vadd.f32 %v2939, %v3750
    %v3767 = vadd.f32 %v2940, %v3751
    %v3768 = vadd.f32 %v2941, %v3752
    %v3769 = vadd.f32 %v2942, %v3753
    %v3770 = vadd.f32 %v2943, %v3754
    %v3771 = vadd.f32 %v2944, %v3755
    %v3772 = vmul.f32 %v3756, 0.1
    %v3773 = vmul.f32 %v3757, 0.1
    %v3774 = vmul.f32 %v3758, 0.1
    %v3775 = vmul.f32 %v3759, 0.1
    %v3776 = vmul.f32 %v3760, 0.1
    %v3777 = vmul.f32 %v3761, 0.1
    %v3778 = vmul.f32 %v3762, 0.1
    %v3779 = vmul.f32 %v3763, 0.1
    %v3780 = vmul.f32 %v3764, 0.1
    %v3781 = vmul.f32 %v3765, 0.1
    %v3782 = vmul.f32 %v3766, 0.1
    %v3783 = vmul.f32 %v3767, 0.1
    %v3784 = vmul.f32 %v3768, 0.1
    %v3785 = vmul.f32 %v3769, 0.1
    %v3786 = vmul.f32 %v3770, 0.1
    %v3787 = vmul.f32 %v3771, 0.1
    %v3788 = vadd.f32 %v2961, %v3772
    %v3789 = vadd.f32 %v2962, %v3773
    %v3790 = vadd.f32 %v2963, %v3774
    %v3791 = vadd.f32 %v2964, %v3775
    %v3792 = vadd.f32 %v2965, %v3776
    %v3793 = vadd.f32 %v2966, %v3777
    %v3794 = vadd.f32 %v2967, %v3778
    %v3795 = vadd.f32 %v2968, %v3779
    %v3796 = vadd.f32 %v2969, %v3780
    %v3797 = vadd.f32 %v2970, %v3781
    %v3798 = vadd.f32 %v2971, %v3782
    %v3799 = vadd.f32 %v2972, %v3783
    %v3800 = vadd.f32 %v2973, %v3784
    %v3801 = vadd.f32 %v2974, %v3785
    %v3802 = vadd.f32 %v2975, %v3786
    %v3803 = vadd.f32 %v2976, %v3787
    %v3804 = vpack.c.bf16 %v3789, %v3788
    %v3805 = vpack.c.bf16 %v3791, %v3790
    %v3806 = vpack.c.bf16 %v3793, %v3792
    %v3807 = vpack.c.bf16 %v3795, %v3794
    %v3808 = vpack.c.bf16 %v3797, %v3796
    %v3809 = vpack.c.bf16 %v3799, %v3798
    %v3810 = vpack.c.bf16 %v3801, %v3800
    %v3811 = vpack.c.bf16 %v3803, %v3802
    %v3816 = vunpack.c.l.b16 %v157
    %v3817 = vunpack.c.l.b16 %v158
    %v3818 = vunpack.c.l.b16 %v159
    %v3819 = vunpack.c.l.b16 %v160
    %v3820 = vpack.c.b16 %v3817, %v3816
    %v3821 = vpack.c.b16 %v3819, %v3818
    %v3825 = vsel %vm219, %v3804, 0
    %v3828 = vsel %vm219, %v3805, 0
    %v3831 = vsel %vm219, %v3806, 0
    %v3834 = vsel %vm219, %v3807, 0
    %v3837 = vsel %vm219, %v3808, 0
    %v3840 = vsel %vm219, %v3809, 0
    %v3843 = vsel %vm219, %v3810, 0
    %v3846 = vsel %vm219, %v3811, 0
    %3848 = vmatprep.subr.bf16.mxu0 0
    %3849 = vmatpush1.bf16.msra.mxu0 %v3820
    %3850 = vmatprep.subr.bf16.mxu0 0
    %3851 = vmatpush1.bf16.msra.mxu0 %v3821
    %3852 = vmatprep.subr.bf16.mxu0 0
    %3853 = vmatpush1.bf16.msra.mxu0 0
    %3854 = vmatprep.subr.bf16.mxu0 0
    %3855 = vmatpush1.bf16.msra.mxu0 0
    %3856 = vmatprep.subr.bf16.mxu0 0
    %3857 = vmatpush1.bf16.msra.mxu0 0
    %3858 = vmatprep.subr.bf16.mxu0 0
    %3859 = vmatpush1.bf16.msra.mxu0 0
    %3860 = vmatprep.subr.bf16.mxu0 0
    %3861 = vmatpush1.bf16.msra.mxu0 0
    %3862 = vmatprep.subr.bf16.mxu0 0
    %3863 = vmatpush1.bf16.msra.mxu0 0
    %3864 = vmatprep.subr.bf16.mxu0 0
    %3865 = vmatpush1.bf16.msra.mxu0 0
    %3866 = vmatprep.subr.bf16.mxu0 0
    %3867 = vmatpush1.bf16.msra.mxu0 0
    %3868 = vmatprep.subr.bf16.mxu0 0
    %3869 = vmatpush1.bf16.msra.mxu0 0
    %3870 = vmatprep.subr.bf16.mxu0 0
    %3871 = vmatpush1.bf16.msra.mxu0 0
    %3872 = vmatprep.subr.bf16.mxu0 0
    %3873 = vmatpush1.bf16.msra.mxu0 0
    %3874 = vmatprep.subr.bf16.mxu0 0
    %3875 = vmatpush1.bf16.msra.mxu0 0
    %3876 = vmatprep.subr.bf16.mxu0 0
    %3877 = vmatpush1.bf16.msra.mxu0 0
    %3878 = vmatprep.subr.bf16.mxu0 0
    %3879 = vmatpush1.bf16.msra.mxu0 0
    %3880 = vmatprep.mubr.bf16.mxu0 0
    %3881 = vmatmul.mubr.bf16.gmra.mrb[0].mxu0 %v3825
    %v3882 = vpop.f32.mrb[0].mxu0
    %v3883 = vadd.f32 0.0, %v3882
    %v3884 = vpop.f32.mrb[0].mxu0
    %v3885 = vpop.f32.mrb[0].mxu0
    %v3886 = vadd.f32 0.0, %v3885
    %v3887 = vpop.f32.mrb[0].mxu0
    %3888 = vmatprep.mubr.bf16.mxu0 0
    %3889 = vmatmul.mubr.bf16.gmra.mrb[0].mxu0 %v3828
    %v3890 = vpop.f32.mrb[0].mxu0
    %v3891 = vadd.f32 0.0, %v3890
    %v3892 = vpop.f32.mrb[0].mxu0
    %v3893 = vpop.f32.mrb[0].mxu0
    %v3894 = vadd.f32 0.0, %v3893
    %v3895 = vpop.f32.mrb[0].mxu0
    %3896 = vmatprep.mubr.bf16.mxu0 0
    %3897 = vmatmul.mubr.bf16.gmra.mrb[0].mxu0 %v3831
    %v3898 = vpop.f32.mrb[0].mxu0
    %v3899 = vadd.f32 0.0, %v3898
    %v3900 = vpop.f32.mrb[0].mxu0
    %v3901 = vpop.f32.mrb[0].mxu0
    %v3902 = vadd.f32 0.0, %v3901
    %v3903 = vpop.f32.mrb[0].mxu0
    %3904 = vmatprep.mubr.bf16.mxu0 0
    %3905 = vmatmul.mubr.bf16.gmra.mrb[0].mxu0 %v3834
    %v3906 = vpop.f32.mrb[0].mxu0
    %v3907 = vadd.f32 0.0, %v3906
    %v3908 = vpop.f32.mrb[0].mxu0
    %v3909 = vpop.f32.mrb[0].mxu0
    %v3910 = vadd.f32 0.0, %v3909
    %v3911 = vpop.f32.mrb[0].mxu0
    %3912 = vmatprep.mubr.bf16.mxu0 0
    %3913 = vmatmul.mubr.bf16.gmra.mrb[0].mxu0 %v3837
    %v3914 = vpop.f32.mrb[0].mxu0
    %v3915 = vadd.f32 0.0, %v3914
    %v3916 = vpop.f32.mrb[0].mxu0
    %v3917 = vpop.f32.mrb[0].mxu0
    %v3918 = vadd.f32 0.0, %v3917
    %v3919 = vpop.f32.mrb[0].mxu0
    %3920 = vmatprep.mubr.bf16.mxu0 0
    %3921 = vmatmul.mubr.bf16.gmra.mrb[0].mxu0 %v3840
    %v3922 = vpop.f32.mrb[0].mxu0
    %v3923 = vadd.f32 0.0, %v3922
    %v3924 = vpop.f32.mrb[0].mxu0
    %v3925 = vpop.f32.mrb[0].mxu0
    %v3926 = vadd.f32 0.0, %v3925
    %v3927 = vpop.f32.mrb[0].mxu0
    %3928 = vmatprep.mubr.bf16.mxu0 0
    %3929 = vmatmul.mubr.bf16.gmra.mrb[0].mxu0 %v3843
    %v3930 = vpop.f32.mrb[0].mxu0
    %v3931 = vadd.f32 0.0, %v3930
    %v3932 = vpop.f32.mrb[0].mxu0
    %v3933 = vpop.f32.mrb[0].mxu0
    %v3934 = vadd.f32 0.0, %v3933
    %v3935 = vpop.f32.mrb[0].mxu0
    %3936 = vmatprep.mubr.bf16.mxu0 0
    %3937 = vmatmul.mubr.bf16.gmra.mrb[0].mxu0 %v3846
    %v3938 = vpop.f32.mrb[0].mxu0
    %v3939 = vadd.f32 0.0, %v3938
    %v3940 = vpop.f32.mrb[0].mxu0
    %v3941 = vpop.f32.mrb[0].mxu0
    %v3942 = vadd.f32 0.0, %v3941
    %v3943 = vpop.f32.mrb[0].mxu0
    %3944 = vdwg.mxu0
    %3945 = vst [vmem:[#allocation11] sm:$0xff] %v3883
    %3946 = vst [vmem:[#allocation11 + $0x8] sm:$0xff] %v3886
    %3947 = vst [vmem:[#allocation11 + $0x10] sm:$0xff] %v3891
    %3948 = vst [vmem:[#allocation11 + $0x18] sm:$0xff] %v3894
    %3949 = vst [vmem:[#allocation11 + $0x20] sm:$0xff] %v3899
    %3950 = vst [vmem:[#allocation11 + $0x28] sm:$0xff] %v3902
    %3951 = vst [vmem:[#allocation11 + $0x30] sm:$0xff] %v3907
    %3952 = vst [vmem:[#allocation11 + $0x38] sm:$0xff] %v3910
    %3953 = vst [vmem:[#allocation11 + $0x40] sm:$0xff] %v3915
    %3954 = vst [vmem:[#allocation11 + $0x48] sm:$0xff] %v3918
    %3955 = vst [vmem:[#allocation11 + $0x50] sm:$0xff] %v3923
    %3956 = vst [vmem:[#allocation11 + $0x58] sm:$0xff] %v3926
    %3957 = vst [vmem:[#allocation11 + $0x60] sm:$0xff] %v3931
    %3958 = vst [vmem:[#allocation11 + $0x68] sm:$0xff] %v3934
    %3959 = vst [vmem:[#allocation11 + $0x70] sm:$0xff] %v3939
    %3960 = vst [vmem:[#allocation11 + $0x78] sm:$0xff] %v3942
    // Predicated region
    $region58: #{tpu_custom_call.1} parent=1 // pred_check
      _
    $region59: #{tpu_custom_call.1} parent=1 // pred_check_branch
      %3962 = sbr.rel (0) target = $region61
    $region60: #{tpu_custom_call.1} parent=1 // pred_region
      %s3964 = ssub.s32 2048, 2048
      %3965 = vsyncadd [#allocation4], %s3964
      %s3966 = sshll.u32 [#allocation11], 4
      %s3967 = int_to_ptr.vmem [resolvable:$true] %s3966
      %3972 = dma.vmem_to_hbm [thread:$0]  %s3967, 2048, %s9, [#allocation4], 128, 128, 8
    $region61: #{tpu_custom_call.1} parent=1 // pred_fallthru
      _
    // Predicated region
    $region62: #{tpu_custom_call.1} parent=1 // pred_check
      _
    $region63: #{tpu_custom_call.1} parent=1 // pred_check_branch
      %3974 = sbr.rel (0) target = $region65
    $region64: #{tpu_custom_call.1} parent=1 // pred_region
      %3975 = dma.done [#allocation4], 2048
    $region65: #{tpu_custom_call.1} parent=1 // pred_fallthru
      _
    %3976 = vsyncpa [#allocation3], 1
    %3977 = vsyncpa [#allocation6], 1
    %3978 = vsyncpa [#allocation9], 1
    %3979 = vsyncpa [#allocation4], 1

</llo_original>
